<compile_context>
chip_gen: v7x
topology: tpu7x:2x2x1
jax: 0.10.0
libtpu: 0.0.40
codegen_flags: <defaults>
</compile_context>

<pallas_src>
import math

import jax
import jax.numpy as jnp
from jax import lax
from jax.experimental import pallas as pl
from jax.experimental.pallas import tpu as pltpu


# ----------------------------- model hyper-params -----------------------------
B       = 2     # batch
T       = 8     # target seq len
S       = 8     # source seq len
D_MODEL = 32    # model dim
N_HEADS = 4
D_HEAD  = D_MODEL // N_HEADS
D_FF    = 64
LAYERS  = 2
LN_EPS  = 1e-5
NEG_INF = -1e9


# ------------------------------- Pallas kernel --------------------------------
def decoder_stack_kernel(x_ref, enc_ref, tbias_ref, sbias_ref,
                         s_wqkv_ref, s_bqkv_ref, s_wo_ref, s_bo_ref,
                         c_wqkv_ref, c_bqkv_ref, c_wo_ref, c_bo_ref,
                         w1_ref, b1_ref, w2_ref, b2_ref,
                         lng_ref, lnb_ref,
                         out_ref,
                         h_scr):
    """One decoder layer per grid step; activations carried in VMEM scratch.

    x_ref      : (B*T, D)  f32   decoder input (flattened batch)
    enc_ref    : (B*S, D)  bf16  encoder output (flattened batch)
    tbias_ref  : (B*T, B*T) f32  additive self-attn mask (0 keep / -1e9 mask,
                                 block-diagonal over batch + causal)
    sbias_ref  : (B*T, B*S) f32  additive cross-attn mask
    s_wqkv_ref : (1, 3H, D, Dh) bf16   self-attn per-head Wq|Wk|Wv
    s_bqkv_ref : (1, 3H, 1, Dh) f32    self-attn per-head bq|bk|bv
    s_wo_ref   : (1, H, Dh, D)  bf16   self-attn per-head rows of Wo
    s_bo_ref   : (1, 1, D)      f32
    c_*        : same layout for cross-attention
    w1_ref     : (1, D, F) bf16   b1_ref : (1, 1, F) f32
    w2_ref     : (1, F, D) bf16   b2_ref : (1, 1, D) f32
    lng_ref    : (1, 3, 1, D) f32  lnb_ref : (1, 3, 1, D) f32
    out_ref    : (B*T, D) f32
    h_scr      : (B*T, D) f32 VMEM scratch (layer-to-layer activation carry)
    """
    l = pl.program_id(0)

    @pl.when(l == 0)
    def _():
        h_scr[...] = x_ref[...].astype(jnp.float32)

    x = h_scr[...]                       # (BT, D) f32
    enc_bf = enc_ref[...]                # (BS, D) bf16
    scale = 1.0 / math.sqrt(D_HEAD)

    def layer_norm(v, idx):
        g = lng_ref[0, idx]              # (1, D)
        b = lnb_ref[0, idx]              # (1, D)
        mu = jnp.mean(v, axis=-1, keepdims=True)
        var = jnp.mean((v - mu) ** 2, axis=-1, keepdims=True)
        return (v - mu) * lax.rsqrt(var + LN_EPS) * g + b

    def mha(q_in, kv_bf, wqkv_ref, bqkv_ref, wo_ref, bo_ref, bias):
        # q_in : (Nq, D) f32, kv_bf : (Nk, D) bf16, bias : (Nq, Nk) f32
        q_bf = q_in.astype(jnp.bfloat16)
        acc = jnp.zeros((q_in.shape[0], D_MODEL), jnp.float32)
        for h in range(N_HEADS):         # static unroll; major-axis indexing only
            wq = wqkv_ref[0, h]                      # (D, Dh) bf16
            wk = wqkv_ref[0, N_HEADS + h]
            wv = wqkv_ref[0, 2 * N_HEADS + h]
            bq = bqkv_ref[0, h]                      # (1, Dh) f32
            bk = bqkv_ref[0, N_HEADS + h]
            bv = bqkv_ref[0, 2 * N_HEADS + h]

            qh = jnp.dot(q_bf, wq, preferred_element_type=jnp.float32) + bq
            kh = jnp.dot(kv_bf, wk, preferred_element_type=jnp.float32) + bk
            vh = jnp.dot(kv_bf, wv, preferred_element_type=jnp.float32) + bv

            scores = jnp.einsum('qd,kd->qk',
                                qh.astype(jnp.bfloat16), kh.astype(jnp.bfloat16),
                                preferred_element_type=jnp.float32) * scale + bias
            scores = scores - jnp.max(scores, axis=-1, keepdims=True)
            p = jnp.exp(scores)
            denom = jnp.sum(p, axis=-1, keepdims=True)
            p = p * pl.reciprocal(denom, approx=True)

            ctx = jnp.dot(p.astype(jnp.bfloat16), vh.astype(jnp.bfloat16),
                          preferred_element_type=jnp.float32)          # (Nq, Dh)
            acc = acc + jnp.dot(ctx.astype(jnp.bfloat16), wo_ref[0, h],
                                preferred_element_type=jnp.float32)    # (Nq, D)
        return acc + bo_ref[0]

    # 1. masked self-attention + add & norm
    sa = mha(x, x.astype(jnp.bfloat16),
             s_wqkv_ref, s_bqkv_ref, s_wo_ref, s_bo_ref, tbias_ref[...])
    h1 = layer_norm(sa + x, 0)

    # 2. cross-attention with encoder output + add & norm
    ca = mha(h1, enc_bf,
             c_wqkv_ref, c_bqkv_ref, c_wo_ref, c_bo_ref, sbias_ref[...])
    h2 = layer_norm(ca + h1, 1)

    # 3. position-wise feed-forward + add & norm
    hid = jnp.maximum(
        jnp.dot(h2.astype(jnp.bfloat16), w1_ref[0],
                preferred_element_type=jnp.float32) + b1_ref[0], 0.0)
    ff = jnp.dot(hid.astype(jnp.bfloat16), w2_ref[0],
                 preferred_element_type=jnp.float32) + b2_ref[0]
    h3 = layer_norm(ff + h2, 2)

    h_scr[...] = h3
    out_ref[...] = h3.astype(out_ref.dtype)


# --------------------------- parameter initialization --------------------------
def init_layer_params(key):
    """Per-layer params in the original (x @ W) layout."""
    ks = jax.random.split(key, 8)
    std = 0.02
    sw  = jax.random.normal(ks[0], (4, D_MODEL, D_MODEL), jnp.float32) * std  # Wq,Wk,Wv,Wo
    sb  = jax.random.normal(ks[1], (4, D_MODEL), jnp.float32) * std
    cw  = jax.random.normal(ks[2], (4, D_MODEL, D_MODEL), jnp.float32) * std
    cb  = jax.random.normal(ks[3], (4, D_MODEL), jnp.float32) * std
    w1  = jax.random.normal(ks[4], (D_MODEL, D_FF), jnp.float32) * std
    b1  = jax.random.normal(ks[5], (D_FF,), jnp.float32) * std
    w2  = jax.random.normal(ks[6], (D_FF, D_MODEL), jnp.float32) * std
    b2  = jax.random.normal(ks[7], (D_MODEL,), jnp.float32) * std
    lng = jnp.ones((3, D_MODEL), jnp.float32)
    lnb = jnp.zeros((3, D_MODEL), jnp.float32)
    return (sw, sb, cw, cb, w1, b1, w2, b2, lng, lnb)


def pack_params(all_params):
    """Stack per-layer params over a leading layer axis, split heads on the host."""
    L = len(all_params)
    sw  = jnp.stack([p[0] for p in all_params])   # (L, 4, D, D)
    sb  = jnp.stack([p[1] for p in all_params])   # (L, 4, D)
    cw  = jnp.stack([p[2] for p in all_params])
    cb  = jnp.stack([p[3] for p in all_params])
    w1  = jnp.stack([p[4] for p in all_params])   # (L, D, F)
    b1  = jnp.stack([p[5] for p in all_params])   # (L, F)
    w2  = jnp.stack([p[6] for p in all_params])   # (L, F, D)
    b2  = jnp.stack([p[7] for p in all_params])   # (L, D)
    lng = jnp.stack([p[8] for p in all_params])   # (L, 3, D)
    lnb = jnp.stack([p[9] for p in all_params])

    def split_attn_w(w):
        # q/k/v: column-split into heads -> (L, 3H, D, Dh);  o: row-split -> (L, H, Dh, D)
        qkv = w[:, :3].reshape(L, 3, D_MODEL, N_HEADS, D_HEAD)
        qkv = qkv.transpose(0, 1, 3, 2, 4).reshape(L, 3 * N_HEADS, D_MODEL, D_HEAD)
        wo = w[:, 3].reshape(L, N_HEADS, D_HEAD, D_MODEL)
        return qkv.astype(jnp.bfloat16), wo.astype(jnp.bfloat16)

    def split_attn_b(b):
        qkv = b[:, :3].reshape(L, 3 * N_HEADS, 1, D_HEAD).astype(jnp.float32)
        bo = b[:, 3].reshape(L, 1, D_MODEL).astype(jnp.float32)
        return qkv, bo

    s_wqkv, s_wo = split_attn_w(sw)
    s_bqkv, s_bo = split_attn_b(sb)
    c_wqkv, c_wo = split_attn_w(cw)
    c_bqkv, c_bo = split_attn_b(cb)

    return dict(
        s_wqkv=s_wqkv, s_bqkv=s_bqkv, s_wo=s_wo, s_bo=s_bo,
        c_wqkv=c_wqkv, c_bqkv=c_bqkv, c_wo=c_wo, c_bo=c_bo,
        w1=w1.astype(jnp.bfloat16), b1=b1.reshape(L, 1, D_FF),
        w2=w2.astype(jnp.bfloat16), b2=b2.reshape(L, 1, D_MODEL),
        lng=lng.reshape(L, 3, 1, D_MODEL), lnb=lnb.reshape(L, 3, 1, D_MODEL),
    )


# ------------------------------- host wrapper ----------------------------------
def decoder_forward(x, enc, src_mask, tgt_mask, packed):
    """x: (B,T,D) f32, enc: (B,S,D) f32, src_mask: (B,1,1,S), tgt_mask: (B,1,T,T)."""
    Bn, Tn, Dn = x.shape
    Sn = enc.shape[1]
    BT, BS = Bn * Tn, Bn * Sn

    x2 = x.reshape(BT, Dn).astype(jnp.float32)
    enc2 = enc.reshape(BS, Dn).astype(jnp.bfloat16)

    tm = tgt_mask.reshape(Bn, Tn, Tn)     # (B, T, T)  1 = keep
    sm = src_mask.reshape(Bn, Sn)         # (B, S)     1 = keep

    # Additive block-diagonal masks: forbid cross-batch attention + apply mask.
    qg = jnp.arange(BT)
    kt = jnp.arange(BT)
    ks = jnp.arange(BS)
    same_t = (qg[:, None] // Tn) == (kt[None, :] // Tn)
    same_s = (qg[:, None] // Tn) == (ks[None, :] // Sn)
    keep_t = tm[qg[:, None] // Tn, qg[:, None] % Tn, kt[None, :] % Tn] > 0
    keep_s = sm[qg[:, None] // Tn, ks[None, :] % Sn] > 0
    tbias = jnp.where(same_t & keep_t, 0.0, NEG_INF).astype(jnp.float32)
    sbias = jnp.where(same_s & keep_s, 0.0, NEG_INF).astype(jnp.float32)

    grid_spec = pltpu.PrefetchScalarGridSpec(
        num_scalar_prefetch=0,
        grid=(LAYERS,),
        in_specs=[
            pl.BlockSpec((BT, Dn), lambda l: (0, 0)),                              # x
            pl.BlockSpec((BS, Dn), lambda l: (0, 0)),                              # enc
            pl.BlockSpec((BT, BT), lambda l: (0, 0)),                              # tbias
            pl.BlockSpec((BT, BS), lambda l: (0, 0)),                              # sbias
            pl.BlockSpec((1, 3 * N_HEADS, Dn, D_HEAD), lambda l: (l, 0, 0, 0)),    # s_wqkv
            pl.BlockSpec((1, 3 * N_HEADS, 1, D_HEAD), lambda l: (l, 0, 0, 0)),     # s_bqkv
            pl.BlockSpec((1, N_HEADS, D_HEAD, Dn), lambda l: (l, 0, 0, 0)),        # s_wo
            pl.BlockSpec((1, 1, Dn), lambda l: (l, 0, 0)),                         # s_bo
            pl.BlockSpec((1, 3 * N_HEADS, Dn, D_HEAD), lambda l: (l, 0, 0, 0)),    # c_wqkv
            pl.BlockSpec((1, 3 * N_HEADS, 1, D_HEAD), lambda l: (l, 0, 0, 0)),     # c_bqkv
            pl.BlockSpec((1, N_HEADS, D_HEAD, Dn), lambda l: (l, 0, 0, 0)),        # c_wo
            pl.BlockSpec((1, 1, Dn), lambda l: (l, 0, 0)),                         # c_bo
            pl.BlockSpec((1, Dn, D_FF), lambda l: (l, 0, 0)),                      # w1
            pl.BlockSpec((1, 1, D_FF), lambda l: (l, 0, 0)),                       # b1
            pl.BlockSpec((1, D_FF, Dn), lambda l: (l, 0, 0)),                      # w2
            pl.BlockSpec((1, 1, Dn), lambda l: (l, 0, 0)),                         # b2
            pl.BlockSpec((1, 3, 1, Dn), lambda l: (l, 0, 0, 0)),                   # ln gamma
            pl.BlockSpec((1, 3, 1, Dn), lambda l: (l, 0, 0, 0)),                   # ln beta
        ],
        out_specs=pl.BlockSpec((BT, Dn), lambda l: (0, 0)),
        scratch_shapes=[pltpu.VMEM((BT, Dn), jnp.float32)],
    )

    out2 = pl.pallas_call(
        decoder_stack_kernel,
        out_shape=jax.ShapeDtypeStruct((BT, Dn), jnp.float32),
        grid_spec=grid_spec,
        compiler_params=pltpu.CompilerParams(
            dimension_semantics=("arbitrary",)),   # sequential layer dependency
    )(x2, enc2, tbias, sbias,
      packed["s_wqkv"], packed["s_bqkv"], packed["s_wo"], packed["s_bo"],
      packed["c_wqkv"], packed["c_bqkv"], packed["c_wo"], packed["c_bo"],
      packed["w1"], packed["b1"], packed["w2"], packed["b2"],
      packed["lng"], packed["lnb"])

    return out2.reshape(Bn, Tn, Dn)


# ------------------------------------ main -------------------------------------
if __name__ == "__main__":
    key = jax.random.PRNGKey(0)
    k_x, k_enc, k_layers = jax.random.split(key, 3)

    x   = jax.random.normal(k_x,   (B, T, D_MODEL), jnp.float32)
    enc = jax.random.normal(k_enc, (B, S, D_MODEL), jnp.float32)

    # PyTorch-spec mask shapes: tgt (B,1,T,T) causal; src (B,1,1,S) all-ones.
    tgt_mask = jnp.broadcast_to(
        jnp.tril(jnp.ones((T, T), jnp.float32)), (B, 1, T, T)).astype(jnp.float32)
    src_mask = jnp.ones((B, 1, 1, S), jnp.float32)

    layer_keys = jax.random.split(k_layers, LAYERS)
    packed = pack_params([init_layer_params(k) for k in layer_keys])

    out = decoder_forward(x, enc, src_mask, tgt_mask, packed)
    out = jax.block_until_ready(out)

    assert out.shape == (B, T, D_MODEL), out.shape
    assert jnp.all(jnp.isfinite(out))
    print("KERNEL_OK")
</pallas_src>

<mosaic_0001>
module attributes {stable_mosaic.version = 11 : i64} {
  func.func @decoder_stack_kernel(%arg0: i32, %arg1: memref<16x32xf32, #tpu.memory_space<vmem>>, %arg2: memref<16x32xbf16, #tpu.memory_space<vmem>>, %arg3: memref<16x16xf32, #tpu.memory_space<vmem>>, %arg4: memref<16x16xf32, #tpu.memory_space<vmem>>, %arg5: memref<1x12x32x8xbf16, #tpu.memory_space<vmem>>, %arg6: memref<1x12x1x8xf32, #tpu.memory_space<vmem>>, %arg7: memref<1x4x8x32xbf16, #tpu.memory_space<vmem>>, %arg8: memref<1x1x32xf32, #tpu.memory_space<vmem>>, %arg9: memref<1x12x32x8xbf16, #tpu.memory_space<vmem>>, %arg10: memref<1x12x1x8xf32, #tpu.memory_space<vmem>>, %arg11: memref<1x4x8x32xbf16, #tpu.memory_space<vmem>>, %arg12: memref<1x1x32xf32, #tpu.memory_space<vmem>>, %arg13: memref<1x32x64xbf16, #tpu.memory_space<vmem>>, %arg14: memref<1x1x64xf32, #tpu.memory_space<vmem>>, %arg15: memref<1x64x32xbf16, #tpu.memory_space<vmem>>, %arg16: memref<1x1x32xf32, #tpu.memory_space<vmem>>, %arg17: memref<1x3x1x32xf32, #tpu.memory_space<vmem>>, %arg18: memref<1x3x1x32xf32, #tpu.memory_space<vmem>>, %arg19: memref<16x32xf32, #tpu.memory_space<vmem>>, %arg20: memref<16x32xf32, #tpu.memory_space<vmem>>) attributes {dimension_semantics = [#tpu.dimension_semantics<arbitrary>], iteration_bounds = array<i64: 2>, scalar_prefetch = 0 : i64, scratch_operands = 1 : i64, tpu.core_type = #tpu.core_type<tc>, window_params = [{pipeline_mode = #tpu.pipeline_mode<synchronous>, transform_indices = @transform_0, window_bounds = array<i64: 16, 32>}, {pipeline_mode = #tpu.pipeline_mode<synchronous>, transform_indices = @transform_1, window_bounds = array<i64: 16, 32>}, {pipeline_mode = #tpu.pipeline_mode<synchronous>, transform_indices = @transform_2, window_bounds = array<i64: 16, 16>}, {pipeline_mode = #tpu.pipeline_mode<synchronous>, transform_indices = @transform_3, window_bounds = array<i64: 16, 16>}, {transform_indices = @transform_4, window_bounds = array<i64: 1, 12, 32, 8>}, {transform_indices = @transform_5, window_bounds = array<i64: 1, 12, 1, 8>}, {transform_indices = @transform_6, window_bounds = array<i64: 1, 4, 8, 32>}, {transform_indices = @transform_7, window_bounds = array<i64: 1, 1, 32>}, {transform_indices = @transform_8, window_bounds = array<i64: 1, 12, 32, 8>}, {transform_indices = @transform_9, window_bounds = array<i64: 1, 12, 1, 8>}, {transform_indices = @transform_10, window_bounds = array<i64: 1, 4, 8, 32>}, {transform_indices = @transform_11, window_bounds = array<i64: 1, 1, 32>}, {transform_indices = @transform_12, window_bounds = array<i64: 1, 32, 64>}, {transform_indices = @transform_13, window_bounds = array<i64: 1, 1, 64>}, {transform_indices = @transform_14, window_bounds = array<i64: 1, 64, 32>}, {transform_indices = @transform_15, window_bounds = array<i64: 1, 1, 32>}, {transform_indices = @transform_16, window_bounds = array<i64: 1, 3, 1, 32>}, {transform_indices = @transform_17, window_bounds = array<i64: 1, 3, 1, 32>}, {pipeline_mode = #tpu.pipeline_mode<synchronous>, transform_indices = @transform_18, window_bounds = array<i64: 16, 32>}]} {
    %c0_i32 = arith.constant 0 : i32
    %0 = arith.cmpi eq, %arg0, %c0_i32 : i32
    %1 = arith.extui %0 : i1 to i32
    %c0_i32_0 = arith.constant 0 : i32
    %2 = arith.cmpi ne, %1, %c0_i32_0 : i32
    scf.if %2 {
      %c0_358 = arith.constant 0 : index
      %c0_359 = arith.constant 0 : index
      %481 = vector.load %arg1[%c0_358, %c0_359] : memref<16x32xf32, #tpu.memory_space<vmem>>, vector<16x32xf32>
      %c0_360 = arith.constant 0 : index
      %c0_361 = arith.constant 0 : index
      %482 = vector.load %arg20[%c0_360, %c0_361] : memref<16x32xf32, #tpu.memory_space<vmem>>, vector<16x32xf32>
      tpu.vector_store %arg20[%c0_360, %c0_361], %481 {strides = array<i32>} : memref<16x32xf32, #tpu.memory_space<vmem>>, vector<16x32xf32>,
    } else {
    }
    %c0 = arith.constant 0 : index
    %c0_1 = arith.constant 0 : index
    %3 = vector.load %arg20[%c0, %c0_1] : memref<16x32xf32, #tpu.memory_space<vmem>>, vector<16x32xf32>
    %c0_2 = arith.constant 0 : index
    %c0_3 = arith.constant 0 : index
    %4 = vector.load %arg2[%c0_2, %c0_3] : memref<16x32xbf16, #tpu.memory_space<vmem>>, vector<16x32xbf16>
    %5 = arith.truncf %3 : vector<16x32xf32> to vector<16x32xbf16>
    %c0_4 = arith.constant 0 : index
    %c0_5 = arith.constant 0 : index
    %6 = vector.load %arg3[%c0_4, %c0_5] : memref<16x16xf32, #tpu.memory_space<vmem>>, vector<16x16xf32>
    %7 = arith.truncf %3 : vector<16x32xf32> to vector<16x32xbf16>
    %cst = arith.constant 0.000000e+00 : f32
    %8 = vector.broadcast %cst : f32 to vector<16x32xf32>
    %c0_6 = arith.constant 0 : index
    %c0_7 = arith.constant 0 : index
    %c0_8 = arith.constant 0 : index
    %c0_9 = arith.constant 0 : index
    %9 = vector.load %arg5[%c0_6, %c0_7, %c0_8, %c0_9] : memref<1x12x32x8xbf16, #tpu.memory_space<vmem>>, vector<1x1x32x8xbf16>
    %10 = vector.shape_cast %9 : vector<1x1x32x8xbf16> to vector<32x8xbf16>
    %c0_10 = arith.constant 0 : index
    %c4 = arith.constant 4 : index
    %c0_11 = arith.constant 0 : index
    %c0_12 = arith.constant 0 : index
    %11 = vector.load %arg5[%c0_10, %c4, %c0_11, %c0_12] : memref<1x12x32x8xbf16, #tpu.memory_space<vmem>>, vector<1x1x32x8xbf16>
    %12 = vector.shape_cast %11 : vector<1x1x32x8xbf16> to vector<32x8xbf16>
    %c0_13 = arith.constant 0 : index
    %c8 = arith.constant 8 : index
    %c0_14 = arith.constant 0 : index
    %c0_15 = arith.constant 0 : index
    %13 = vector.load %arg5[%c0_13, %c8, %c0_14, %c0_15] : memref<1x12x32x8xbf16, #tpu.memory_space<vmem>>, vector<1x1x32x8xbf16>
    %14 = vector.shape_cast %13 : vector<1x1x32x8xbf16> to vector<32x8xbf16>
    %c0_16 = arith.constant 0 : index
    %c0_17 = arith.constant 0 : index
    %c0_18 = arith.constant 0 : index
    %c0_19 = arith.constant 0 : index
    %15 = vector.load %arg6[%c0_16, %c0_17, %c0_18, %c0_19] : memref<1x12x1x8xf32, #tpu.memory_space<vmem>>, vector<1x1x1x8xf32>
    %16 = vector.shape_cast %15 : vector<1x1x1x8xf32> to vector<1x8xf32>
    %c0_20 = arith.constant 0 : index
    %c4_21 = arith.constant 4 : index
    %c0_22 = arith.constant 0 : index
    %c0_23 = arith.constant 0 : index
    %17 = vector.load %arg6[%c0_20, %c4_21, %c0_22, %c0_23] : memref<1x12x1x8xf32, #tpu.memory_space<vmem>>, vector<1x1x1x8xf32>
    %18 = vector.shape_cast %17 : vector<1x1x1x8xf32> to vector<1x8xf32>
    %c0_24 = arith.constant 0 : index
    %c8_25 = arith.constant 8 : index
    %c0_26 = arith.constant 0 : index
    %c0_27 = arith.constant 0 : index
    %19 = vector.load %arg6[%c0_24, %c8_25, %c0_26, %c0_27] : memref<1x12x1x8xf32, #tpu.memory_space<vmem>>, vector<1x1x1x8xf32>
    %20 = vector.shape_cast %19 : vector<1x1x1x8xf32> to vector<1x8xf32>
    %cst_28 = arith.constant dense<0.000000e+00> : vector<16x8xf32>
    %21 = tpu.matmul %7, %10, %cst_28 {dimension_numbers = #tpu.dot_dimension_numbers<[1], [0], [0], [1], [0, 0, 1, 1], [], []>} : vector<16x32xbf16>, vector<32x8xbf16>, vector<16x8xf32> -> vector<16x8xf32>
    %22 = vector.broadcast %16 : vector<1x8xf32> to vector<16x8xf32>
    %23 = arith.addf %21, %22 : vector<16x8xf32>
    %cst_29 = arith.constant dense<0.000000e+00> : vector<16x8xf32>
    %24 = tpu.matmul %5, %12, %cst_29 {dimension_numbers = #tpu.dot_dimension_numbers<[1], [0], [0], [1], [0, 0, 1, 1], [], []>} : vector<16x32xbf16>, vector<32x8xbf16>, vector<16x8xf32> -> vector<16x8xf32>
    %25 = vector.broadcast %18 : vector<1x8xf32> to vector<16x8xf32>
    %26 = arith.addf %24, %25 : vector<16x8xf32>
    %cst_30 = arith.constant dense<0.000000e+00> : vector<16x8xf32>
    %27 = tpu.matmul %5, %14, %cst_30 {dimension_numbers = #tpu.dot_dimension_numbers<[1], [0], [0], [1], [0, 0, 1, 1], [], []>} : vector<16x32xbf16>, vector<32x8xbf16>, vector<16x8xf32> -> vector<16x8xf32>
    %28 = vector.broadcast %20 : vector<1x8xf32> to vector<16x8xf32>
    %29 = arith.addf %27, %28 : vector<16x8xf32>
    %30 = arith.truncf %23 : vector<16x8xf32> to vector<16x8xbf16>
    %31 = arith.truncf %26 : vector<16x8xf32> to vector<16x8xbf16>
    "tpu.trace_start"() <{level = 10 : i32, message = "qd,kd->qk"}> : () -> ()
    %cst_31 = arith.constant dense<0.000000e+00> : vector<16x16xf32>
    %32 = tpu.matmul %30, %31, %cst_31 {dimension_numbers = #tpu.dot_dimension_numbers<[1], [1], [0], [0], [0, 0, 1, 0], [], []>} : vector<16x8xbf16>, vector<16x8xbf16>, vector<16x16xf32> -> vector<16x16xf32>
    "tpu.trace_stop"() : () -> ()
    %cst_32 = arith.constant 0.353553385 : f32
    %33 = vector.broadcast %cst_32 : f32 to vector<16x16xf32>
    %34 = arith.mulf %32, %33 : vector<16x16xf32>
    %35 = arith.addf %34, %6 : vector<16x16xf32>
    %cst_33 = arith.constant dense<0xFF800000> : vector<16xf32>
    %36 = vector.multi_reduction <maximumf>, %35, %cst_33 [1] : vector<16x16xf32> to vector<16xf32>
    %37 = vector.shape_cast %36 : vector<16xf32> to vector<16x1xf32>
    %38 = vector.broadcast %37 : vector<16x1xf32> to vector<16x16xf32>
    %39 = arith.subf %35, %38 : vector<16x16xf32>
    %40 = math.exp %39 : vector<16x16xf32>
    %cst_34 = arith.constant dense<0.000000e+00> : vector<16xf32>
    %41 = vector.multi_reduction <add>, %40, %cst_34 [1] : vector<16x16xf32> to vector<16xf32>
    %42 = vector.shape_cast %41 : vector<16xf32> to vector<16x1xf32>
    %43 = tpu.reciprocal %42 {approx = true} : vector<16x1xf32> -> vector<16x1xf32>
    %44 = vector.broadcast %43 : vector<16x1xf32> to vector<16x16xf32>
    %45 = arith.mulf %40, %44 : vector<16x16xf32>
    %46 = arith.truncf %45 : vector<16x16xf32> to vector<16x16xbf16>
    %47 = arith.truncf %29 : vector<16x8xf32> to vector<16x8xbf16>
    %cst_35 = arith.constant dense<0.000000e+00> : vector<16x8xf32>
    %48 = tpu.matmul %46, %47, %cst_35 {dimension_numbers = #tpu.dot_dimension_numbers<[1], [0], [0], [1], [0, 0, 1, 1], [], []>} : vector<16x16xbf16>, vector<16x8xbf16>, vector<16x8xf32> -> vector<16x8xf32>
    %49 = arith.truncf %48 : vector<16x8xf32> to vector<16x8xbf16>
    %c0_36 = arith.constant 0 : index
    %c0_37 = arith.constant 0 : index
    %c0_38 = arith.constant 0 : index
    %c0_39 = arith.constant 0 : index
    %50 = vector.load %arg7[%c0_36, %c0_37, %c0_38, %c0_39] : memref<1x4x8x32xbf16, #tpu.memory_space<vmem>>, vector<1x1x8x32xbf16>
    %51 = vector.shape_cast %50 : vector<1x1x8x32xbf16> to vector<8x32xbf16>
    %cst_40 = arith.constant dense<0.000000e+00> : vector<16x32xf32>
    %52 = tpu.matmul %49, %51, %cst_40 {dimension_numbers = #tpu.dot_dimension_numbers<[1], [0], [0], [1], [0, 0, 1, 1], [], []>} : vector<16x8xbf16>, vector<8x32xbf16>, vector<16x32xf32> -> vector<16x32xf32>
    %53 = arith.addf %8, %52 : vector<16x32xf32>
    %c0_41 = arith.constant 0 : index
    %c1 = arith.constant 1 : index
    %c0_42 = arith.constant 0 : index
    %c0_43 = arith.constant 0 : index
    %54 = vector.load %arg5[%c0_41, %c1, %c0_42, %c0_43] : memref<1x12x32x8xbf16, #tpu.memory_space<vmem>>, vector<1x1x32x8xbf16>
    %55 = vector.shape_cast %54 : vector<1x1x32x8xbf16> to vector<32x8xbf16>
    %c0_44 = arith.constant 0 : index
    %c5 = arith.constant 5 : index
    %c0_45 = arith.constant 0 : index
    %c0_46 = arith.constant 0 : index
    %56 = vector.load %arg5[%c0_44, %c5, %c0_45, %c0_46] : memref<1x12x32x8xbf16, #tpu.memory_space<vmem>>, vector<1x1x32x8xbf16>
    %57 = vector.shape_cast %56 : vector<1x1x32x8xbf16> to vector<32x8xbf16>
    %c0_47 = arith.constant 0 : index
    %c9 = arith.constant 9 : index
    %c0_48 = arith.constant 0 : index
    %c0_49 = arith.constant 0 : index
    %58 = vector.load %arg5[%c0_47, %c9, %c0_48, %c0_49] : memref<1x12x32x8xbf16, #tpu.memory_space<vmem>>, vector<1x1x32x8xbf16>
    %59 = vector.shape_cast %58 : vector<1x1x32x8xbf16> to vector<32x8xbf16>
    %c0_50 = arith.constant 0 : index
    %c1_51 = arith.constant 1 : index
    %c0_52 = arith.constant 0 : index
    %c0_53 = arith.constant 0 : index
    %60 = vector.load %arg6[%c0_50, %c1_51, %c0_52, %c0_53] : memref<1x12x1x8xf32, #tpu.memory_space<vmem>>, vector<1x1x1x8xf32>
    %61 = vector.shape_cast %60 : vector<1x1x1x8xf32> to vector<1x8xf32>
    %c0_54 = arith.constant 0 : index
    %c5_55 = arith.constant 5 : index
    %c0_56 = arith.constant 0 : index
    %c0_57 = arith.constant 0 : index
    %62 = vector.load %arg6[%c0_54, %c5_55, %c0_56, %c0_57] : memref<1x12x1x8xf32, #tpu.memory_space<vmem>>, vector<1x1x1x8xf32>
    %63 = vector.shape_cast %62 : vector<1x1x1x8xf32> to vector<1x8xf32>
    %c0_58 = arith.constant 0 : index
    %c9_59 = arith.constant 9 : index
    %c0_60 = arith.constant 0 : index
    %c0_61 = arith.constant 0 : index
    %64 = vector.load %arg6[%c0_58, %c9_59, %c0_60, %c0_61] : memref<1x12x1x8xf32, #tpu.memory_space<vmem>>, vector<1x1x1x8xf32>
    %65 = vector.shape_cast %64 : vector<1x1x1x8xf32> to vector<1x8xf32>
    %cst_62 = arith.constant dense<0.000000e+00> : vector<16x8xf32>
    %66 = tpu.matmul %7, %55, %cst_62 {dimension_numbers = #tpu.dot_dimension_numbers<[1], [0], [0], [1], [0, 0, 1, 1], [], []>} : vector<16x32xbf16>, vector<32x8xbf16>, vector<16x8xf32> -> vector<16x8xf32>
    %67 = vector.broadcast %61 : vector<1x8xf32> to vector<16x8xf32>
    %68 = arith.addf %66, %67 : vector<16x8xf32>
    %cst_63 = arith.constant dense<0.000000e+00> : vector<16x8xf32>
    %69 = tpu.matmul %5, %57, %cst_63 {dimension_numbers = #tpu.dot_dimension_numbers<[1], [0], [0], [1], [0, 0, 1, 1], [], []>} : vector<16x32xbf16>, vector<32x8xbf16>, vector<16x8xf32> -> vector<16x8xf32>
    %70 = vector.broadcast %63 : vector<1x8xf32> to vector<16x8xf32>
    %71 = arith.addf %69, %70 : vector<16x8xf32>
    %cst_64 = arith.constant dense<0.000000e+00> : vector<16x8xf32>
    %72 = tpu.matmul %5, %59, %cst_64 {dimension_numbers = #tpu.dot_dimension_numbers<[1], [0], [0], [1], [0, 0, 1, 1], [], []>} : vector<16x32xbf16>, vector<32x8xbf16>, vector<16x8xf32> -> vector<16x8xf32>
    %73 = vector.broadcast %65 : vector<1x8xf32> to vector<16x8xf32>
    %74 = arith.addf %72, %73 : vector<16x8xf32>
    %75 = arith.truncf %68 : vector<16x8xf32> to vector<16x8xbf16>
    %76 = arith.truncf %71 : vector<16x8xf32> to vector<16x8xbf16>
    "tpu.trace_start"() <{level = 10 : i32, message = "qd,kd->qk"}> : () -> ()
    %cst_65 = arith.constant dense<0.000000e+00> : vector<16x16xf32>
    %77 = tpu.matmul %75, %76, %cst_65 {dimension_numbers = #tpu.dot_dimension_numbers<[1], [1], [0], [0], [0, 0, 1, 0], [], []>} : vector<16x8xbf16>, vector<16x8xbf16>, vector<16x16xf32> -> vector<16x16xf32>
    "tpu.trace_stop"() : () -> ()
    %cst_66 = arith.constant 0.353553385 : f32
    %78 = vector.broadcast %cst_66 : f32 to vector<16x16xf32>
    %79 = arith.mulf %77, %78 : vector<16x16xf32>
    %80 = arith.addf %79, %6 : vector<16x16xf32>
    %cst_67 = arith.constant dense<0xFF800000> : vector<16xf32>
    %81 = vector.multi_reduction <maximumf>, %80, %cst_67 [1] : vector<16x16xf32> to vector<16xf32>
    %82 = vector.shape_cast %81 : vector<16xf32> to vector<16x1xf32>
    %83 = vector.broadcast %82 : vector<16x1xf32> to vector<16x16xf32>
    %84 = arith.subf %80, %83 : vector<16x16xf32>
    %85 = math.exp %84 : vector<16x16xf32>
    %cst_68 = arith.constant dense<0.000000e+00> : vector<16xf32>
    %86 = vector.multi_reduction <add>, %85, %cst_68 [1] : vector<16x16xf32> to vector<16xf32>
    %87 = vector.shape_cast %86 : vector<16xf32> to vector<16x1xf32>
    %88 = tpu.reciprocal %87 {approx = true} : vector<16x1xf32> -> vector<16x1xf32>
    %89 = vector.broadcast %88 : vector<16x1xf32> to vector<16x16xf32>
    %90 = arith.mulf %85, %89 : vector<16x16xf32>
    %91 = arith.truncf %90 : vector<16x16xf32> to vector<16x16xbf16>
    %92 = arith.truncf %74 : vector<16x8xf32> to vector<16x8xbf16>
    %cst_69 = arith.constant dense<0.000000e+00> : vector<16x8xf32>
    %93 = tpu.matmul %91, %92, %cst_69 {dimension_numbers = #tpu.dot_dimension_numbers<[1], [0], [0], [1], [0, 0, 1, 1], [], []>} : vector<16x16xbf16>, vector<16x8xbf16>, vector<16x8xf32> -> vector<16x8xf32>
    %94 = arith.truncf %93 : vector<16x8xf32> to vector<16x8xbf16>
    %c0_70 = arith.constant 0 : index
    %c1_71 = arith.constant 1 : index
    %c0_72 = arith.constant 0 : index
    %c0_73 = arith.constant 0 : index
    %95 = vector.load %arg7[%c0_70, %c1_71, %c0_72, %c0_73] : memref<1x4x8x32xbf16, #tpu.memory_space<vmem>>, vector<1x1x8x32xbf16>
    %96 = vector.shape_cast %95 : vector<1x1x8x32xbf16> to vector<8x32xbf16>
    %cst_74 = arith.constant dense<0.000000e+00> : vector<16x32xf32>
    %97 = tpu.matmul %94, %96, %cst_74 {dimension_numbers = #tpu.dot_dimension_numbers<[1], [0], [0], [1], [0, 0, 1, 1], [], []>} : vector<16x8xbf16>, vector<8x32xbf16>, vector<16x32xf32> -> vector<16x32xf32>
    %98 = arith.addf %53, %97 : vector<16x32xf32>
    %c0_75 = arith.constant 0 : index
    %c2 = arith.constant 2 : index
    %c0_76 = arith.constant 0 : index
    %c0_77 = arith.constant 0 : index
    %99 = vector.load %arg5[%c0_75, %c2, %c0_76, %c0_77] : memref<1x12x32x8xbf16, #tpu.memory_space<vmem>>, vector<1x1x32x8xbf16>
    %100 = vector.shape_cast %99 : vector<1x1x32x8xbf16> to vector<32x8xbf16>
    %c0_78 = arith.constant 0 : index
    %c6 = arith.constant 6 : index
    %c0_79 = arith.constant 0 : index
    %c0_80 = arith.constant 0 : index
    %101 = vector.load %arg5[%c0_78, %c6, %c0_79, %c0_80] : memref<1x12x32x8xbf16, #tpu.memory_space<vmem>>, vector<1x1x32x8xbf16>
    %102 = vector.shape_cast %101 : vector<1x1x32x8xbf16> to vector<32x8xbf16>
    %c0_81 = arith.constant 0 : index
    %c10 = arith.constant 10 : index
    %c0_82 = arith.constant 0 : index
    %c0_83 = arith.constant 0 : index
    %103 = vector.load %arg5[%c0_81, %c10, %c0_82, %c0_83] : memref<1x12x32x8xbf16, #tpu.memory_space<vmem>>, vector<1x1x32x8xbf16>
    %104 = vector.shape_cast %103 : vector<1x1x32x8xbf16> to vector<32x8xbf16>
    %c0_84 = arith.constant 0 : index
    %c2_85 = arith.constant 2 : index
    %c0_86 = arith.constant 0 : index
    %c0_87 = arith.constant 0 : index
    %105 = vector.load %arg6[%c0_84, %c2_85, %c0_86, %c0_87] : memref<1x12x1x8xf32, #tpu.memory_space<vmem>>, vector<1x1x1x8xf32>
    %106 = vector.shape_cast %105 : vector<1x1x1x8xf32> to vector<1x8xf32>
    %c0_88 = arith.constant 0 : index
    %c6_89 = arith.constant 6 : index
    %c0_90 = arith.constant 0 : index
    %c0_91 = arith.constant 0 : index
    %107 = vector.load %arg6[%c0_88, %c6_89, %c0_90, %c0_91] : memref<1x12x1x8xf32, #tpu.memory_space<vmem>>, vector<1x1x1x8xf32>
    %108 = vector.shape_cast %107 : vector<1x1x1x8xf32> to vector<1x8xf32>
    %c0_92 = arith.constant 0 : index
    %c10_93 = arith.constant 10 : index
    %c0_94 = arith.constant 0 : index
    %c0_95 = arith.constant 0 : index
    %109 = vector.load %arg6[%c0_92, %c10_93, %c0_94, %c0_95] : memref<1x12x1x8xf32, #tpu.memory_space<vmem>>, vector<1x1x1x8xf32>
    %110 = vector.shape_cast %109 : vector<1x1x1x8xf32> to vector<1x8xf32>
    %cst_96 = arith.constant dense<0.000000e+00> : vector<16x8xf32>
    %111 = tpu.matmul %7, %100, %cst_96 {dimension_numbers = #tpu.dot_dimension_numbers<[1], [0], [0], [1], [0, 0, 1, 1], [], []>} : vector<16x32xbf16>, vector<32x8xbf16>, vector<16x8xf32> -> vector<16x8xf32>
    %112 = vector.broadcast %106 : vector<1x8xf32> to vector<16x8xf32>
    %113 = arith.addf %111, %112 : vector<16x8xf32>
    %cst_97 = arith.constant dense<0.000000e+00> : vector<16x8xf32>
    %114 = tpu.matmul %5, %102, %cst_97 {dimension_numbers = #tpu.dot_dimension_numbers<[1], [0], [0], [1], [0, 0, 1, 1], [], []>} : vector<16x32xbf16>, vector<32x8xbf16>, vector<16x8xf32> -> vector<16x8xf32>
    %115 = vector.broadcast %108 : vector<1x8xf32> to vector<16x8xf32>
    %116 = arith.addf %114, %115 : vector<16x8xf32>
    %cst_98 = arith.constant dense<0.000000e+00> : vector<16x8xf32>
    %117 = tpu.matmul %5, %104, %cst_98 {dimension_numbers = #tpu.dot_dimension_numbers<[1], [0], [0], [1], [0, 0, 1, 1], [], []>} : vector<16x32xbf16>, vector<32x8xbf16>, vector<16x8xf32> -> vector<16x8xf32>
    %118 = vector.broadcast %110 : vector<1x8xf32> to vector<16x8xf32>
    %119 = arith.addf %117, %118 : vector<16x8xf32>
    %120 = arith.truncf %113 : vector<16x8xf32> to vector<16x8xbf16>
    %121 = arith.truncf %116 : vector<16x8xf32> to vector<16x8xbf16>
    "tpu.trace_start"() <{level = 10 : i32, message = "qd,kd->qk"}> : () -> ()
    %cst_99 = arith.constant dense<0.000000e+00> : vector<16x16xf32>
    %122 = tpu.matmul %120, %121, %cst_99 {dimension_numbers = #tpu.dot_dimension_numbers<[1], [1], [0], [0], [0, 0, 1, 0], [], []>} : vector<16x8xbf16>, vector<16x8xbf16>, vector<16x16xf32> -> vector<16x16xf32>
    "tpu.trace_stop"() : () -> ()
    %cst_100 = arith.constant 0.353553385 : f32
    %123 = vector.broadcast %cst_100 : f32 to vector<16x16xf32>
    %124 = arith.mulf %122, %123 : vector<16x16xf32>
    %125 = arith.addf %124, %6 : vector<16x16xf32>
    %cst_101 = arith.constant dense<0xFF800000> : vector<16xf32>
    %126 = vector.multi_reduction <maximumf>, %125, %cst_101 [1] : vector<16x16xf32> to vector<16xf32>
    %127 = vector.shape_cast %126 : vector<16xf32> to vector<16x1xf32>
    %128 = vector.broadcast %127 : vector<16x1xf32> to vector<16x16xf32>
    %129 = arith.subf %125, %128 : vector<16x16xf32>
    %130 = math.exp %129 : vector<16x16xf32>
    %cst_102 = arith.constant dense<0.000000e+00> : vector<16xf32>
    %131 = vector.multi_reduction <add>, %130, %cst_102 [1] : vector<16x16xf32> to vector<16xf32>
    %132 = vector.shape_cast %131 : vector<16xf32> to vector<16x1xf32>
    %133 = tpu.reciprocal %132 {approx = true} : vector<16x1xf32> -> vector<16x1xf32>
    %134 = vector.broadcast %133 : vector<16x1xf32> to vector<16x16xf32>
    %135 = arith.mulf %130, %134 : vector<16x16xf32>
    %136 = arith.truncf %135 : vector<16x16xf32> to vector<16x16xbf16>
    %137 = arith.truncf %119 : vector<16x8xf32> to vector<16x8xbf16>
    %cst_103 = arith.constant dense<0.000000e+00> : vector<16x8xf32>
    %138 = tpu.matmul %136, %137, %cst_103 {dimension_numbers = #tpu.dot_dimension_numbers<[1], [0], [0], [1], [0, 0, 1, 1], [], []>} : vector<16x16xbf16>, vector<16x8xbf16>, vector<16x8xf32> -> vector<16x8xf32>
    %139 = arith.truncf %138 : vector<16x8xf32> to vector<16x8xbf16>
    %c0_104 = arith.constant 0 : index
    %c2_105 = arith.constant 2 : index
    %c0_106 = arith.constant 0 : index
    %c0_107 = arith.constant 0 : index
    %140 = vector.load %arg7[%c0_104, %c2_105, %c0_106, %c0_107] : memref<1x4x8x32xbf16, #tpu.memory_space<vmem>>, vector<1x1x8x32xbf16>
    %141 = vector.shape_cast %140 : vector<1x1x8x32xbf16> to vector<8x32xbf16>
    %cst_108 = arith.constant dense<0.000000e+00> : vector<16x32xf32>
    %142 = tpu.matmul %139, %141, %cst_108 {dimension_numbers = #tpu.dot_dimension_numbers<[1], [0], [0], [1], [0, 0, 1, 1], [], []>} : vector<16x8xbf16>, vector<8x32xbf16>, vector<16x32xf32> -> vector<16x32xf32>
    %143 = arith.addf %98, %142 : vector<16x32xf32>
    %c0_109 = arith.constant 0 : index
    %c3 = arith.constant 3 : index
    %c0_110 = arith.constant 0 : index
    %c0_111 = arith.constant 0 : index
    %144 = vector.load %arg5[%c0_109, %c3, %c0_110, %c0_111] : memref<1x12x32x8xbf16, #tpu.memory_space<vmem>>, vector<1x1x32x8xbf16>
    %145 = vector.shape_cast %144 : vector<1x1x32x8xbf16> to vector<32x8xbf16>
    %c0_112 = arith.constant 0 : index
    %c7 = arith.constant 7 : index
    %c0_113 = arith.constant 0 : index
    %c0_114 = arith.constant 0 : index
    %146 = vector.load %arg5[%c0_112, %c7, %c0_113, %c0_114] : memref<1x12x32x8xbf16, #tpu.memory_space<vmem>>, vector<1x1x32x8xbf16>
    %147 = vector.shape_cast %146 : vector<1x1x32x8xbf16> to vector<32x8xbf16>
    %c0_115 = arith.constant 0 : index
    %c11 = arith.constant 11 : index
    %c0_116 = arith.constant 0 : index
    %c0_117 = arith.constant 0 : index
    %148 = vector.load %arg5[%c0_115, %c11, %c0_116, %c0_117] : memref<1x12x32x8xbf16, #tpu.memory_space<vmem>>, vector<1x1x32x8xbf16>
    %149 = vector.shape_cast %148 : vector<1x1x32x8xbf16> to vector<32x8xbf16>
    %c0_118 = arith.constant 0 : index
    %c3_119 = arith.constant 3 : index
    %c0_120 = arith.constant 0 : index
    %c0_121 = arith.constant 0 : index
    %150 = vector.load %arg6[%c0_118, %c3_119, %c0_120, %c0_121] : memref<1x12x1x8xf32, #tpu.memory_space<vmem>>, vector<1x1x1x8xf32>
    %151 = vector.shape_cast %150 : vector<1x1x1x8xf32> to vector<1x8xf32>
    %c0_122 = arith.constant 0 : index
    %c7_123 = arith.constant 7 : index
    %c0_124 = arith.constant 0 : index
    %c0_125 = arith.constant 0 : index
    %152 = vector.load %arg6[%c0_122, %c7_123, %c0_124, %c0_125] : memref<1x12x1x8xf32, #tpu.memory_space<vmem>>, vector<1x1x1x8xf32>
    %153 = vector.shape_cast %152 : vector<1x1x1x8xf32> to vector<1x8xf32>
    %c0_126 = arith.constant 0 : index
    %c11_127 = arith.constant 11 : index
    %c0_128 = arith.constant 0 : index
    %c0_129 = arith.constant 0 : index
    %154 = vector.load %arg6[%c0_126, %c11_127, %c0_128, %c0_129] : memref<1x12x1x8xf32, #tpu.memory_space<vmem>>, vector<1x1x1x8xf32>
    %155 = vector.shape_cast %154 : vector<1x1x1x8xf32> to vector<1x8xf32>
    %cst_130 = arith.constant dense<0.000000e+00> : vector<16x8xf32>
    %156 = tpu.matmul %7, %145, %cst_130 {dimension_numbers = #tpu.dot_dimension_numbers<[1], [0], [0], [1], [0, 0, 1, 1], [], []>} : vector<16x32xbf16>, vector<32x8xbf16>, vector<16x8xf32> -> vector<16x8xf32>
    %157 = vector.broadcast %151 : vector<1x8xf32> to vector<16x8xf32>
    %158 = arith.addf %156, %157 : vector<16x8xf32>
    %cst_131 = arith.constant dense<0.000000e+00> : vector<16x8xf32>
    %159 = tpu.matmul %5, %147, %cst_131 {dimension_numbers = #tpu.dot_dimension_numbers<[1], [0], [0], [1], [0, 0, 1, 1], [], []>} : vector<16x32xbf16>, vector<32x8xbf16>, vector<16x8xf32> -> vector<16x8xf32>
    %160 = vector.broadcast %153 : vector<1x8xf32> to vector<16x8xf32>
    %161 = arith.addf %159, %160 : vector<16x8xf32>
    %cst_132 = arith.constant dense<0.000000e+00> : vector<16x8xf32>
    %162 = tpu.matmul %5, %149, %cst_132 {dimension_numbers = #tpu.dot_dimension_numbers<[1], [0], [0], [1], [0, 0, 1, 1], [], []>} : vector<16x32xbf16>, vector<32x8xbf16>, vector<16x8xf32> -> vector<16x8xf32>
    %163 = vector.broadcast %155 : vector<1x8xf32> to vector<16x8xf32>
    %164 = arith.addf %162, %163 : vector<16x8xf32>
    %165 = arith.truncf %158 : vector<16x8xf32> to vector<16x8xbf16>
    %166 = arith.truncf %161 : vector<16x8xf32> to vector<16x8xbf16>
    "tpu.trace_start"() <{level = 10 : i32, message = "qd,kd->qk"}> : () -> ()
    %cst_133 = arith.constant dense<0.000000e+00> : vector<16x16xf32>
    %167 = tpu.matmul %165, %166, %cst_133 {dimension_numbers = #tpu.dot_dimension_numbers<[1], [1], [0], [0], [0, 0, 1, 0], [], []>} : vector<16x8xbf16>, vector<16x8xbf16>, vector<16x16xf32> -> vector<16x16xf32>
    "tpu.trace_stop"() : () -> ()
    %cst_134 = arith.constant 0.353553385 : f32
    %168 = vector.broadcast %cst_134 : f32 to vector<16x16xf32>
    %169 = arith.mulf %167, %168 : vector<16x16xf32>
    %170 = arith.addf %169, %6 : vector<16x16xf32>
    %cst_135 = arith.constant dense<0xFF800000> : vector<16xf32>
    %171 = vector.multi_reduction <maximumf>, %170, %cst_135 [1] : vector<16x16xf32> to vector<16xf32>
    %172 = vector.shape_cast %171 : vector<16xf32> to vector<16x1xf32>
    %173 = vector.broadcast %172 : vector<16x1xf32> to vector<16x16xf32>
    %174 = arith.subf %170, %173 : vector<16x16xf32>
    %175 = math.exp %174 : vector<16x16xf32>
    %cst_136 = arith.constant dense<0.000000e+00> : vector<16xf32>
    %176 = vector.multi_reduction <add>, %175, %cst_136 [1] : vector<16x16xf32> to vector<16xf32>
    %177 = vector.shape_cast %176 : vector<16xf32> to vector<16x1xf32>
    %178 = tpu.reciprocal %177 {approx = true} : vector<16x1xf32> -> vector<16x1xf32>
    %179 = vector.broadcast %178 : vector<16x1xf32> to vector<16x16xf32>
    %180 = arith.mulf %175, %179 : vector<16x16xf32>
    %181 = arith.truncf %180 : vector<16x16xf32> to vector<16x16xbf16>
    %182 = arith.truncf %164 : vector<16x8xf32> to vector<16x8xbf16>
    %cst_137 = arith.constant dense<0.000000e+00> : vector<16x8xf32>
    %183 = tpu.matmul %181, %182, %cst_137 {dimension_numbers = #tpu.dot_dimension_numbers<[1], [0], [0], [1], [0, 0, 1, 1], [], []>} : vector<16x16xbf16>, vector<16x8xbf16>, vector<16x8xf32> -> vector<16x8xf32>
    %184 = arith.truncf %183 : vector<16x8xf32> to vector<16x8xbf16>
    %c0_138 = arith.constant 0 : index
    %c3_139 = arith.constant 3 : index
    %c0_140 = arith.constant 0 : index
    %c0_141 = arith.constant 0 : index
    %185 = vector.load %arg7[%c0_138, %c3_139, %c0_140, %c0_141] : memref<1x4x8x32xbf16, #tpu.memory_space<vmem>>, vector<1x1x8x32xbf16>
    %186 = vector.shape_cast %185 : vector<1x1x8x32xbf16> to vector<8x32xbf16>
    %cst_142 = arith.constant dense<0.000000e+00> : vector<16x32xf32>
    %187 = tpu.matmul %184, %186, %cst_142 {dimension_numbers = #tpu.dot_dimension_numbers<[1], [0], [0], [1], [0, 0, 1, 1], [], []>} : vector<16x8xbf16>, vector<8x32xbf16>, vector<16x32xf32> -> vector<16x32xf32>
    %188 = arith.addf %143, %187 : vector<16x32xf32>
    %c0_143 = arith.constant 0 : index
    %c0_144 = arith.constant 0 : index
    %c0_145 = arith.constant 0 : index
    %189 = vector.load %arg8[%c0_143, %c0_144, %c0_145] : memref<1x1x32xf32, #tpu.memory_space<vmem>>, vector<1x1x32xf32>
    %190 = vector.shape_cast %189 : vector<1x1x32xf32> to vector<1x32xf32>
    %191 = vector.broadcast %190 : vector<1x32xf32> to vector<16x32xf32>
    %192 = arith.addf %188, %191 : vector<16x32xf32>
    %193 = arith.addf %192, %3 : vector<16x32xf32>
    %c0_146 = arith.constant 0 : index
    %c0_147 = arith.constant 0 : index
    %c0_148 = arith.constant 0 : index
    %c0_149 = arith.constant 0 : index
    %194 = vector.load %arg17[%c0_146, %c0_147, %c0_148, %c0_149] : memref<1x3x1x32xf32, #tpu.memory_space<vmem>>, vector<1x1x1x32xf32>
    %195 = vector.shape_cast %194 : vector<1x1x1x32xf32> to vector<1x32xf32>
    %c0_150 = arith.constant 0 : index
    %c0_151 = arith.constant 0 : index
    %c0_152 = arith.constant 0 : index
    %c0_153 = arith.constant 0 : index
    %196 = vector.load %arg18[%c0_150, %c0_151, %c0_152, %c0_153] : memref<1x3x1x32xf32, #tpu.memory_space<vmem>>, vector<1x1x1x32xf32>
    %197 = vector.shape_cast %196 : vector<1x1x1x32xf32> to vector<1x32xf32>
    %cst_154 = arith.constant dense<0.000000e+00> : vector<16xf32>
    %198 = vector.multi_reduction <add>, %193, %cst_154 [1] : vector<16x32xf32> to vector<16xf32>
    %199 = vector.shape_cast %198 : vector<16xf32> to vector<16x1xf32>
    %cst_155 = arith.constant 3.200000e+01 : f32
    %200 = vector.broadcast %cst_155 : f32 to vector<16x1xf32>
    %201 = arith.divf %199, %200 : vector<16x1xf32>
    %202 = vector.broadcast %201 : vector<16x1xf32> to vector<16x32xf32>
    %203 = arith.subf %193, %202 : vector<16x32xf32>
    %204 = arith.mulf %203, %203 : vector<16x32xf32>
    %cst_156 = arith.constant dense<0.000000e+00> : vector<16xf32>
    %205 = vector.multi_reduction <add>, %204, %cst_156 [1] : vector<16x32xf32> to vector<16xf32>
    %206 = vector.shape_cast %205 : vector<16xf32> to vector<16x1xf32>
    %cst_157 = arith.constant 3.200000e+01 : f32
    %207 = vector.broadcast %cst_157 : f32 to vector<16x1xf32>
    %208 = arith.divf %206, %207 : vector<16x1xf32>
    %209 = vector.broadcast %201 : vector<16x1xf32> to vector<16x32xf32>
    %210 = arith.subf %193, %209 : vector<16x32xf32>
    %cst_158 = arith.constant 9.99999974E-6 : f32
    %211 = vector.broadcast %cst_158 : f32 to vector<16x1xf32>
    %212 = arith.addf %208, %211 : vector<16x1xf32>
    %213 = math.rsqrt %212 : vector<16x1xf32>
    %214 = vector.broadcast %213 : vector<16x1xf32> to vector<16x32xf32>
    %215 = arith.mulf %210, %214 : vector<16x32xf32>
    %216 = vector.broadcast %195 : vector<1x32xf32> to vector<16x32xf32>
    %217 = arith.mulf %215, %216 : vector<16x32xf32>
    %218 = vector.broadcast %197 : vector<1x32xf32> to vector<16x32xf32>
    %219 = arith.addf %217, %218 : vector<16x32xf32>
    %c0_159 = arith.constant 0 : index
    %c0_160 = arith.constant 0 : index
    %220 = vector.load %arg4[%c0_159, %c0_160] : memref<16x16xf32, #tpu.memory_space<vmem>>, vector<16x16xf32>
    %221 = arith.truncf %219 : vector<16x32xf32> to vector<16x32xbf16>
    %cst_161 = arith.constant 0.000000e+00 : f32
    %222 = vector.broadcast %cst_161 : f32 to vector<16x32xf32>
    %c0_162 = arith.constant 0 : index
    %c0_163 = arith.constant 0 : index
    %c0_164 = arith.constant 0 : index
    %c0_165 = arith.constant 0 : index
    %223 = vector.load %arg9[%c0_162, %c0_163, %c0_164, %c0_165] : memref<1x12x32x8xbf16, #tpu.memory_space<vmem>>, vector<1x1x32x8xbf16>
    %224 = vector.shape_cast %223 : vector<1x1x32x8xbf16> to vector<32x8xbf16>
    %c0_166 = arith.constant 0 : index
    %c4_167 = arith.constant 4 : index
    %c0_168 = arith.constant 0 : index
    %c0_169 = arith.constant 0 : index
    %225 = vector.load %arg9[%c0_166, %c4_167, %c0_168, %c0_169] : memref<1x12x32x8xbf16, #tpu.memory_space<vmem>>, vector<1x1x32x8xbf16>
    %226 = vector.shape_cast %225 : vector<1x1x32x8xbf16> to vector<32x8xbf16>
    %c0_170 = arith.constant 0 : index
    %c8_171 = arith.constant 8 : index
    %c0_172 = arith.constant 0 : index
    %c0_173 = arith.constant 0 : index
    %227 = vector.load %arg9[%c0_170, %c8_171, %c0_172, %c0_173] : memref<1x12x32x8xbf16, #tpu.memory_space<vmem>>, vector<1x1x32x8xbf16>
    %228 = vector.shape_cast %227 : vector<1x1x32x8xbf16> to vector<32x8xbf16>
    %c0_174 = arith.constant 0 : index
    %c0_175 = arith.constant 0 : index
    %c0_176 = arith.constant 0 : index
    %c0_177 = arith.constant 0 : index
    %229 = vector.load %arg10[%c0_174, %c0_175, %c0_176, %c0_177] : memref<1x12x1x8xf32, #tpu.memory_space<vmem>>, vector<1x1x1x8xf32>
    %230 = vector.shape_cast %229 : vector<1x1x1x8xf32> to vector<1x8xf32>
    %c0_178 = arith.constant 0 : index
    %c4_179 = arith.constant 4 : index
    %c0_180 = arith.constant 0 : index
    %c0_181 = arith.constant 0 : index
    %231 = vector.load %arg10[%c0_178, %c4_179, %c0_180, %c0_181] : memref<1x12x1x8xf32, #tpu.memory_space<vmem>>, vector<1x1x1x8xf32>
    %232 = vector.shape_cast %231 : vector<1x1x1x8xf32> to vector<1x8xf32>
    %c0_182 = arith.constant 0 : index
    %c8_183 = arith.constant 8 : index
    %c0_184 = arith.constant 0 : index
    %c0_185 = arith.constant 0 : index
    %233 = vector.load %arg10[%c0_182, %c8_183, %c0_184, %c0_185] : memref<1x12x1x8xf32, #tpu.memory_space<vmem>>, vector<1x1x1x8xf32>
    %234 = vector.shape_cast %233 : vector<1x1x1x8xf32> to vector<1x8xf32>
    %cst_186 = arith.constant dense<0.000000e+00> : vector<16x8xf32>
    %235 = tpu.matmul %221, %224, %cst_186 {dimension_numbers = #tpu.dot_dimension_numbers<[1], [0], [0], [1], [0, 0, 1, 1], [], []>} : vector<16x32xbf16>, vector<32x8xbf16>, vector<16x8xf32> -> vector<16x8xf32>
    %236 = vector.broadcast %230 : vector<1x8xf32> to vector<16x8xf32>
    %237 = arith.addf %235, %236 : vector<16x8xf32>
    %cst_187 = arith.constant dense<0.000000e+00> : vector<16x8xf32>
    %238 = tpu.matmul %4, %226, %cst_187 {dimension_numbers = #tpu.dot_dimension_numbers<[1], [0], [0], [1], [0, 0, 1, 1], [], []>} : vector<16x32xbf16>, vector<32x8xbf16>, vector<16x8xf32> -> vector<16x8xf32>
    %239 = vector.broadcast %232 : vector<1x8xf32> to vector<16x8xf32>
    %240 = arith.addf %238, %239 : vector<16x8xf32>
    %cst_188 = arith.constant dense<0.000000e+00> : vector<16x8xf32>
    %241 = tpu.matmul %4, %228, %cst_188 {dimension_numbers = #tpu.dot_dimension_numbers<[1], [0], [0], [1], [0, 0, 1, 1], [], []>} : vector<16x32xbf16>, vector<32x8xbf16>, vector<16x8xf32> -> vector<16x8xf32>
    %242 = vector.broadcast %234 : vector<1x8xf32> to vector<16x8xf32>
    %243 = arith.addf %241, %242 : vector<16x8xf32>
    %244 = arith.truncf %237 : vector<16x8xf32> to vector<16x8xbf16>
    %245 = arith.truncf %240 : vector<16x8xf32> to vector<16x8xbf16>
    "tpu.trace_start"() <{level = 10 : i32, message = "qd,kd->qk"}> : () -> ()
    %cst_189 = arith.constant dense<0.000000e+00> : vector<16x16xf32>
    %246 = tpu.matmul %244, %245, %cst_189 {dimension_numbers = #tpu.dot_dimension_numbers<[1], [1], [0], [0], [0, 0, 1, 0], [], []>} : vector<16x8xbf16>, vector<16x8xbf16>, vector<16x16xf32> -> vector<16x16xf32>
    "tpu.trace_stop"() : () -> ()
    %cst_190 = arith.constant 0.353553385 : f32
    %247 = vector.broadcast %cst_190 : f32 to vector<16x16xf32>
    %248 = arith.mulf %246, %247 : vector<16x16xf32>
    %249 = arith.addf %248, %220 : vector<16x16xf32>
    %cst_191 = arith.constant dense<0xFF800000> : vector<16xf32>
    %250 = vector.multi_reduction <maximumf>, %249, %cst_191 [1] : vector<16x16xf32> to vector<16xf32>
    %251 = vector.shape_cast %250 : vector<16xf32> to vector<16x1xf32>
    %252 = vector.broadcast %251 : vector<16x1xf32> to vector<16x16xf32>
    %253 = arith.subf %249, %252 : vector<16x16xf32>
    %254 = math.exp %253 : vector<16x16xf32>
    %cst_192 = arith.constant dense<0.000000e+00> : vector<16xf32>
    %255 = vector.multi_reduction <add>, %254, %cst_192 [1] : vector<16x16xf32> to vector<16xf32>
    %256 = vector.shape_cast %255 : vector<16xf32> to vector<16x1xf32>
    %257 = tpu.reciprocal %256 {approx = true} : vector<16x1xf32> -> vector<16x1xf32>
    %258 = vector.broadcast %257 : vector<16x1xf32> to vector<16x16xf32>
    %259 = arith.mulf %254, %258 : vector<16x16xf32>
    %260 = arith.truncf %259 : vector<16x16xf32> to vector<16x16xbf16>
    %261 = arith.truncf %243 : vector<16x8xf32> to vector<16x8xbf16>
    %cst_193 = arith.constant dense<0.000000e+00> : vector<16x8xf32>
    %262 = tpu.matmul %260, %261, %cst_193 {dimension_numbers = #tpu.dot_dimension_numbers<[1], [0], [0], [1], [0, 0, 1, 1], [], []>} : vector<16x16xbf16>, vector<16x8xbf16>, vector<16x8xf32> -> vector<16x8xf32>
    %263 = arith.truncf %262 : vector<16x8xf32> to vector<16x8xbf16>
    %c0_194 = arith.constant 0 : index
    %c0_195 = arith.constant 0 : index
    %c0_196 = arith.constant 0 : index
    %c0_197 = arith.constant 0 : index
    %264 = vector.load %arg11[%c0_194, %c0_195, %c0_196, %c0_197] : memref<1x4x8x32xbf16, #tpu.memory_space<vmem>>, vector<1x1x8x32xbf16>
    %265 = vector.shape_cast %264 : vector<1x1x8x32xbf16> to vector<8x32xbf16>
    %cst_198 = arith.constant dense<0.000000e+00> : vector<16x32xf32>
    %266 = tpu.matmul %263, %265, %cst_198 {dimension_numbers = #tpu.dot_dimension_numbers<[1], [0], [0], [1], [0, 0, 1, 1], [], []>} : vector<16x8xbf16>, vector<8x32xbf16>, vector<16x32xf32> -> vector<16x32xf32>
    %267 = arith.addf %222, %266 : vector<16x32xf32>
    %c0_199 = arith.constant 0 : index
    %c1_200 = arith.constant 1 : index
    %c0_201 = arith.constant 0 : index
    %c0_202 = arith.constant 0 : index
    %268 = vector.load %arg9[%c0_199, %c1_200, %c0_201, %c0_202] : memref<1x12x32x8xbf16, #tpu.memory_space<vmem>>, vector<1x1x32x8xbf16>
    %269 = vector.shape_cast %268 : vector<1x1x32x8xbf16> to vector<32x8xbf16>
    %c0_203 = arith.constant 0 : index
    %c5_204 = arith.constant 5 : index
    %c0_205 = arith.constant 0 : index
    %c0_206 = arith.constant 0 : index
    %270 = vector.load %arg9[%c0_203, %c5_204, %c0_205, %c0_206] : memref<1x12x32x8xbf16, #tpu.memory_space<vmem>>, vector<1x1x32x8xbf16>
    %271 = vector.shape_cast %270 : vector<1x1x32x8xbf16> to vector<32x8xbf16>
    %c0_207 = arith.constant 0 : index
    %c9_208 = arith.constant 9 : index
    %c0_209 = arith.constant 0 : index
    %c0_210 = arith.constant 0 : index
    %272 = vector.load %arg9[%c0_207, %c9_208, %c0_209, %c0_210] : memref<1x12x32x8xbf16, #tpu.memory_space<vmem>>, vector<1x1x32x8xbf16>
    %273 = vector.shape_cast %272 : vector<1x1x32x8xbf16> to vector<32x8xbf16>
    %c0_211 = arith.constant 0 : index
    %c1_212 = arith.constant 1 : index
    %c0_213 = arith.constant 0 : index
    %c0_214 = arith.constant 0 : index
    %274 = vector.load %arg10[%c0_211, %c1_212, %c0_213, %c0_214] : memref<1x12x1x8xf32, #tpu.memory_space<vmem>>, vector<1x1x1x8xf32>
    %275 = vector.shape_cast %274 : vector<1x1x1x8xf32> to vector<1x8xf32>
    %c0_215 = arith.constant 0 : index
    %c5_216 = arith.constant 5 : index
    %c0_217 = arith.constant 0 : index
    %c0_218 = arith.constant 0 : index
    %276 = vector.load %arg10[%c0_215, %c5_216, %c0_217, %c0_218] : memref<1x12x1x8xf32, #tpu.memory_space<vmem>>, vector<1x1x1x8xf32>
    %277 = vector.shape_cast %276 : vector<1x1x1x8xf32> to vector<1x8xf32>
    %c0_219 = arith.constant 0 : index
    %c9_220 = arith.constant 9 : index
    %c0_221 = arith.constant 0 : index
    %c0_222 = arith.constant 0 : index
    %278 = vector.load %arg10[%c0_219, %c9_220, %c0_221, %c0_222] : memref<1x12x1x8xf32, #tpu.memory_space<vmem>>, vector<1x1x1x8xf32>
    %279 = vector.shape_cast %278 : vector<1x1x1x8xf32> to vector<1x8xf32>
    %cst_223 = arith.constant dense<0.000000e+00> : vector<16x8xf32>
    %280 = tpu.matmul %221, %269, %cst_223 {dimension_numbers = #tpu.dot_dimension_numbers<[1], [0], [0], [1], [0, 0, 1, 1], [], []>} : vector<16x32xbf16>, vector<32x8xbf16>, vector<16x8xf32> -> vector<16x8xf32>
    %281 = vector.broadcast %275 : vector<1x8xf32> to vector<16x8xf32>
    %282 = arith.addf %280, %281 : vector<16x8xf32>
    %cst_224 = arith.constant dense<0.000000e+00> : vector<16x8xf32>
    %283 = tpu.matmul %4, %271, %cst_224 {dimension_numbers = #tpu.dot_dimension_numbers<[1], [0], [0], [1], [0, 0, 1, 1], [], []>} : vector<16x32xbf16>, vector<32x8xbf16>, vector<16x8xf32> -> vector<16x8xf32>
    %284 = vector.broadcast %277 : vector<1x8xf32> to vector<16x8xf32>
    %285 = arith.addf %283, %284 : vector<16x8xf32>
    %cst_225 = arith.constant dense<0.000000e+00> : vector<16x8xf32>
    %286 = tpu.matmul %4, %273, %cst_225 {dimension_numbers = #tpu.dot_dimension_numbers<[1], [0], [0], [1], [0, 0, 1, 1], [], []>} : vector<16x32xbf16>, vector<32x8xbf16>, vector<16x8xf32> -> vector<16x8xf32>
    %287 = vector.broadcast %279 : vector<1x8xf32> to vector<16x8xf32>
    %288 = arith.addf %286, %287 : vector<16x8xf32>
    %289 = arith.truncf %282 : vector<16x8xf32> to vector<16x8xbf16>
    %290 = arith.truncf %285 : vector<16x8xf32> to vector<16x8xbf16>
    "tpu.trace_start"() <{level = 10 : i32, message = "qd,kd->qk"}> : () -> ()
    %cst_226 = arith.constant dense<0.000000e+00> : vector<16x16xf32>
    %291 = tpu.matmul %289, %290, %cst_226 {dimension_numbers = #tpu.dot_dimension_numbers<[1], [1], [0], [0], [0, 0, 1, 0], [], []>} : vector<16x8xbf16>, vector<16x8xbf16>, vector<16x16xf32> -> vector<16x16xf32>
    "tpu.trace_stop"() : () -> ()
    %cst_227 = arith.constant 0.353553385 : f32
    %292 = vector.broadcast %cst_227 : f32 to vector<16x16xf32>
    %293 = arith.mulf %291, %292 : vector<16x16xf32>
    %294 = arith.addf %293, %220 : vector<16x16xf32>
    %cst_228 = arith.constant dense<0xFF800000> : vector<16xf32>
    %295 = vector.multi_reduction <maximumf>, %294, %cst_228 [1] : vector<16x16xf32> to vector<16xf32>
    %296 = vector.shape_cast %295 : vector<16xf32> to vector<16x1xf32>
    %297 = vector.broadcast %296 : vector<16x1xf32> to vector<16x16xf32>
    %298 = arith.subf %294, %297 : vector<16x16xf32>
    %299 = math.exp %298 : vector<16x16xf32>
    %cst_229 = arith.constant dense<0.000000e+00> : vector<16xf32>
    %300 = vector.multi_reduction <add>, %299, %cst_229 [1] : vector<16x16xf32> to vector<16xf32>
    %301 = vector.shape_cast %300 : vector<16xf32> to vector<16x1xf32>
    %302 = tpu.reciprocal %301 {approx = true} : vector<16x1xf32> -> vector<16x1xf32>
    %303 = vector.broadcast %302 : vector<16x1xf32> to vector<16x16xf32>
    %304 = arith.mulf %299, %303 : vector<16x16xf32>
    %305 = arith.truncf %304 : vector<16x16xf32> to vector<16x16xbf16>
    %306 = arith.truncf %288 : vector<16x8xf32> to vector<16x8xbf16>
    %cst_230 = arith.constant dense<0.000000e+00> : vector<16x8xf32>
    %307 = tpu.matmul %305, %306, %cst_230 {dimension_numbers = #tpu.dot_dimension_numbers<[1], [0], [0], [1], [0, 0, 1, 1], [], []>} : vector<16x16xbf16>, vector<16x8xbf16>, vector<16x8xf32> -> vector<16x8xf32>
    %308 = arith.truncf %307 : vector<16x8xf32> to vector<16x8xbf16>
    %c0_231 = arith.constant 0 : index
    %c1_232 = arith.constant 1 : index
    %c0_233 = arith.constant 0 : index
    %c0_234 = arith.constant 0 : index
    %309 = vector.load %arg11[%c0_231, %c1_232, %c0_233, %c0_234] : memref<1x4x8x32xbf16, #tpu.memory_space<vmem>>, vector<1x1x8x32xbf16>
    %310 = vector.shape_cast %309 : vector<1x1x8x32xbf16> to vector<8x32xbf16>
    %cst_235 = arith.constant dense<0.000000e+00> : vector<16x32xf32>
    %311 = tpu.matmul %308, %310, %cst_235 {dimension_numbers = #tpu.dot_dimension_numbers<[1], [0], [0], [1], [0, 0, 1, 1], [], []>} : vector<16x8xbf16>, vector<8x32xbf16>, vector<16x32xf32> -> vector<16x32xf32>
    %312 = arith.addf %267, %311 : vector<16x32xf32>
    %c0_236 = arith.constant 0 : index
    %c2_237 = arith.constant 2 : index
    %c0_238 = arith.constant 0 : index
    %c0_239 = arith.constant 0 : index
    %313 = vector.load %arg9[%c0_236, %c2_237, %c0_238, %c0_239] : memref<1x12x32x8xbf16, #tpu.memory_space<vmem>>, vector<1x1x32x8xbf16>
    %314 = vector.shape_cast %313 : vector<1x1x32x8xbf16> to vector<32x8xbf16>
    %c0_240 = arith.constant 0 : index
    %c6_241 = arith.constant 6 : index
    %c0_242 = arith.constant 0 : index
    %c0_243 = arith.constant 0 : index
    %315 = vector.load %arg9[%c0_240, %c6_241, %c0_242, %c0_243] : memref<1x12x32x8xbf16, #tpu.memory_space<vmem>>, vector<1x1x32x8xbf16>
    %316 = vector.shape_cast %315 : vector<1x1x32x8xbf16> to vector<32x8xbf16>
    %c0_244 = arith.constant 0 : index
    %c10_245 = arith.constant 10 : index
    %c0_246 = arith.constant 0 : index
    %c0_247 = arith.constant 0 : index
    %317 = vector.load %arg9[%c0_244, %c10_245, %c0_246, %c0_247] : memref<1x12x32x8xbf16, #tpu.memory_space<vmem>>, vector<1x1x32x8xbf16>
    %318 = vector.shape_cast %317 : vector<1x1x32x8xbf16> to vector<32x8xbf16>
    %c0_248 = arith.constant 0 : index
    %c2_249 = arith.constant 2 : index
    %c0_250 = arith.constant 0 : index
    %c0_251 = arith.constant 0 : index
    %319 = vector.load %arg10[%c0_248, %c2_249, %c0_250, %c0_251] : memref<1x12x1x8xf32, #tpu.memory_space<vmem>>, vector<1x1x1x8xf32>
    %320 = vector.shape_cast %319 : vector<1x1x1x8xf32> to vector<1x8xf32>
    %c0_252 = arith.constant 0 : index
    %c6_253 = arith.constant 6 : index
    %c0_254 = arith.constant 0 : index
    %c0_255 = arith.constant 0 : index
    %321 = vector.load %arg10[%c0_252, %c6_253, %c0_254, %c0_255] : memref<1x12x1x8xf32, #tpu.memory_space<vmem>>, vector<1x1x1x8xf32>
    %322 = vector.shape_cast %321 : vector<1x1x1x8xf32> to vector<1x8xf32>
    %c0_256 = arith.constant 0 : index
    %c10_257 = arith.constant 10 : index
    %c0_258 = arith.constant 0 : index
    %c0_259 = arith.constant 0 : index
    %323 = vector.load %arg10[%c0_256, %c10_257, %c0_258, %c0_259] : memref<1x12x1x8xf32, #tpu.memory_space<vmem>>, vector<1x1x1x8xf32>
    %324 = vector.shape_cast %323 : vector<1x1x1x8xf32> to vector<1x8xf32>
    %cst_260 = arith.constant dense<0.000000e+00> : vector<16x8xf32>
    %325 = tpu.matmul %221, %314, %cst_260 {dimension_numbers = #tpu.dot_dimension_numbers<[1], [0], [0], [1], [0, 0, 1, 1], [], []>} : vector<16x32xbf16>, vector<32x8xbf16>, vector<16x8xf32> -> vector<16x8xf32>
    %326 = vector.broadcast %320 : vector<1x8xf32> to vector<16x8xf32>
    %327 = arith.addf %325, %326 : vector<16x8xf32>
    %cst_261 = arith.constant dense<0.000000e+00> : vector<16x8xf32>
    %328 = tpu.matmul %4, %316, %cst_261 {dimension_numbers = #tpu.dot_dimension_numbers<[1], [0], [0], [1], [0, 0, 1, 1], [], []>} : vector<16x32xbf16>, vector<32x8xbf16>, vector<16x8xf32> -> vector<16x8xf32>
    %329 = vector.broadcast %322 : vector<1x8xf32> to vector<16x8xf32>
    %330 = arith.addf %328, %329 : vector<16x8xf32>
    %cst_262 = arith.constant dense<0.000000e+00> : vector<16x8xf32>
    %331 = tpu.matmul %4, %318, %cst_262 {dimension_numbers = #tpu.dot_dimension_numbers<[1], [0], [0], [1], [0, 0, 1, 1], [], []>} : vector<16x32xbf16>, vector<32x8xbf16>, vector<16x8xf32> -> vector<16x8xf32>
    %332 = vector.broadcast %324 : vector<1x8xf32> to vector<16x8xf32>
    %333 = arith.addf %331, %332 : vector<16x8xf32>
    %334 = arith.truncf %327 : vector<16x8xf32> to vector<16x8xbf16>
    %335 = arith.truncf %330 : vector<16x8xf32> to vector<16x8xbf16>
    "tpu.trace_start"() <{level = 10 : i32, message = "qd,kd->qk"}> : () -> ()
    %cst_263 = arith.constant dense<0.000000e+00> : vector<16x16xf32>
    %336 = tpu.matmul %334, %335, %cst_263 {dimension_numbers = #tpu.dot_dimension_numbers<[1], [1], [0], [0], [0, 0, 1, 0], [], []>} : vector<16x8xbf16>, vector<16x8xbf16>, vector<16x16xf32> -> vector<16x16xf32>
    "tpu.trace_stop"() : () -> ()
    %cst_264 = arith.constant 0.353553385 : f32
    %337 = vector.broadcast %cst_264 : f32 to vector<16x16xf32>
    %338 = arith.mulf %336, %337 : vector<16x16xf32>
    %339 = arith.addf %338, %220 : vector<16x16xf32>
    %cst_265 = arith.constant dense<0xFF800000> : vector<16xf32>
    %340 = vector.multi_reduction <maximumf>, %339, %cst_265 [1] : vector<16x16xf32> to vector<16xf32>
    %341 = vector.shape_cast %340 : vector<16xf32> to vector<16x1xf32>
    %342 = vector.broadcast %341 : vector<16x1xf32> to vector<16x16xf32>
    %343 = arith.subf %339, %342 : vector<16x16xf32>
    %344 = math.exp %343 : vector<16x16xf32>
    %cst_266 = arith.constant dense<0.000000e+00> : vector<16xf32>
    %345 = vector.multi_reduction <add>, %344, %cst_266 [1] : vector<16x16xf32> to vector<16xf32>
    %346 = vector.shape_cast %345 : vector<16xf32> to vector<16x1xf32>
    %347 = tpu.reciprocal %346 {approx = true} : vector<16x1xf32> -> vector<16x1xf32>
    %348 = vector.broadcast %347 : vector<16x1xf32> to vector<16x16xf32>
    %349 = arith.mulf %344, %348 : vector<16x16xf32>
    %350 = arith.truncf %349 : vector<16x16xf32> to vector<16x16xbf16>
    %351 = arith.truncf %333 : vector<16x8xf32> to vector<16x8xbf16>
    %cst_267 = arith.constant dense<0.000000e+00> : vector<16x8xf32>
    %352 = tpu.matmul %350, %351, %cst_267 {dimension_numbers = #tpu.dot_dimension_numbers<[1], [0], [0], [1], [0, 0, 1, 1], [], []>} : vector<16x16xbf16>, vector<16x8xbf16>, vector<16x8xf32> -> vector<16x8xf32>
    %353 = arith.truncf %352 : vector<16x8xf32> to vector<16x8xbf16>
    %c0_268 = arith.constant 0 : index
    %c2_269 = arith.constant 2 : index
    %c0_270 = arith.constant 0 : index
    %c0_271 = arith.constant 0 : index
    %354 = vector.load %arg11[%c0_268, %c2_269, %c0_270, %c0_271] : memref<1x4x8x32xbf16, #tpu.memory_space<vmem>>, vector<1x1x8x32xbf16>
    %355 = vector.shape_cast %354 : vector<1x1x8x32xbf16> to vector<8x32xbf16>
    %cst_272 = arith.constant dense<0.000000e+00> : vector<16x32xf32>
    %356 = tpu.matmul %353, %355, %cst_272 {dimension_numbers = #tpu.dot_dimension_numbers<[1], [0], [0], [1], [0, 0, 1, 1], [], []>} : vector<16x8xbf16>, vector<8x32xbf16>, vector<16x32xf32> -> vector<16x32xf32>
    %357 = arith.addf %312, %356 : vector<16x32xf32>
    %c0_273 = arith.constant 0 : index
    %c3_274 = arith.constant 3 : index
    %c0_275 = arith.constant 0 : index
    %c0_276 = arith.constant 0 : index
    %358 = vector.load %arg9[%c0_273, %c3_274, %c0_275, %c0_276] : memref<1x12x32x8xbf16, #tpu.memory_space<vmem>>, vector<1x1x32x8xbf16>
    %359 = vector.shape_cast %358 : vector<1x1x32x8xbf16> to vector<32x8xbf16>
    %c0_277 = arith.constant 0 : index
    %c7_278 = arith.constant 7 : index
    %c0_279 = arith.constant 0 : index
    %c0_280 = arith.constant 0 : index
    %360 = vector.load %arg9[%c0_277, %c7_278, %c0_279, %c0_280] : memref<1x12x32x8xbf16, #tpu.memory_space<vmem>>, vector<1x1x32x8xbf16>
    %361 = vector.shape_cast %360 : vector<1x1x32x8xbf16> to vector<32x8xbf16>
    %c0_281 = arith.constant 0 : index
    %c11_282 = arith.constant 11 : index
    %c0_283 = arith.constant 0 : index
    %c0_284 = arith.constant 0 : index
    %362 = vector.load %arg9[%c0_281, %c11_282, %c0_283, %c0_284] : memref<1x12x32x8xbf16, #tpu.memory_space<vmem>>, vector<1x1x32x8xbf16>
    %363 = vector.shape_cast %362 : vector<1x1x32x8xbf16> to vector<32x8xbf16>
    %c0_285 = arith.constant 0 : index
    %c3_286 = arith.constant 3 : index
    %c0_287 = arith.constant 0 : index
    %c0_288 = arith.constant 0 : index
    %364 = vector.load %arg10[%c0_285, %c3_286, %c0_287, %c0_288] : memref<1x12x1x8xf32, #tpu.memory_space<vmem>>, vector<1x1x1x8xf32>
    %365 = vector.shape_cast %364 : vector<1x1x1x8xf32> to vector<1x8xf32>
    %c0_289 = arith.constant 0 : index
    %c7_290 = arith.constant 7 : index
    %c0_291 = arith.constant 0 : index
    %c0_292 = arith.constant 0 : index
    %366 = vector.load %arg10[%c0_289, %c7_290, %c0_291, %c0_292] : memref<1x12x1x8xf32, #tpu.memory_space<vmem>>, vector<1x1x1x8xf32>
    %367 = vector.shape_cast %366 : vector<1x1x1x8xf32> to vector<1x8xf32>
    %c0_293 = arith.constant 0 : index
    %c11_294 = arith.constant 11 : index
    %c0_295 = arith.constant 0 : index
    %c0_296 = arith.constant 0 : index
    %368 = vector.load %arg10[%c0_293, %c11_294, %c0_295, %c0_296] : memref<1x12x1x8xf32, #tpu.memory_space<vmem>>, vector<1x1x1x8xf32>
    %369 = vector.shape_cast %368 : vector<1x1x1x8xf32> to vector<1x8xf32>
    %cst_297 = arith.constant dense<0.000000e+00> : vector<16x8xf32>
    %370 = tpu.matmul %221, %359, %cst_297 {dimension_numbers = #tpu.dot_dimension_numbers<[1], [0], [0], [1], [0, 0, 1, 1], [], []>} : vector<16x32xbf16>, vector<32x8xbf16>, vector<16x8xf32> -> vector<16x8xf32>
    %371 = vector.broadcast %365 : vector<1x8xf32> to vector<16x8xf32>
    %372 = arith.addf %370, %371 : vector<16x8xf32>
    %cst_298 = arith.constant dense<0.000000e+00> : vector<16x8xf32>
    %373 = tpu.matmul %4, %361, %cst_298 {dimension_numbers = #tpu.dot_dimension_numbers<[1], [0], [0], [1], [0, 0, 1, 1], [], []>} : vector<16x32xbf16>, vector<32x8xbf16>, vector<16x8xf32> -> vector<16x8xf32>
    %374 = vector.broadcast %367 : vector<1x8xf32> to vector<16x8xf32>
    %375 = arith.addf %373, %374 : vector<16x8xf32>
    %cst_299 = arith.constant dense<0.000000e+00> : vector<16x8xf32>
    %376 = tpu.matmul %4, %363, %cst_299 {dimension_numbers = #tpu.dot_dimension_numbers<[1], [0], [0], [1], [0, 0, 1, 1], [], []>} : vector<16x32xbf16>, vector<32x8xbf16>, vector<16x8xf32> -> vector<16x8xf32>
    %377 = vector.broadcast %369 : vector<1x8xf32> to vector<16x8xf32>
    %378 = arith.addf %376, %377 : vector<16x8xf32>
    %379 = arith.truncf %372 : vector<16x8xf32> to vector<16x8xbf16>
    %380 = arith.truncf %375 : vector<16x8xf32> to vector<16x8xbf16>
    "tpu.trace_start"() <{level = 10 : i32, message = "qd,kd->qk"}> : () -> ()
    %cst_300 = arith.constant dense<0.000000e+00> : vector<16x16xf32>
    %381 = tpu.matmul %379, %380, %cst_300 {dimension_numbers = #tpu.dot_dimension_numbers<[1], [1], [0], [0], [0, 0, 1, 0], [], []>} : vector<16x8xbf16>, vector<16x8xbf16>, vector<16x16xf32> -> vector<16x16xf32>
    "tpu.trace_stop"() : () -> ()
    %cst_301 = arith.constant 0.353553385 : f32
    %382 = vector.broadcast %cst_301 : f32 to vector<16x16xf32>
    %383 = arith.mulf %381, %382 : vector<16x16xf32>
    %384 = arith.addf %383, %220 : vector<16x16xf32>
    %cst_302 = arith.constant dense<0xFF800000> : vector<16xf32>
    %385 = vector.multi_reduction <maximumf>, %384, %cst_302 [1] : vector<16x16xf32> to vector<16xf32>
    %386 = vector.shape_cast %385 : vector<16xf32> to vector<16x1xf32>
    %387 = vector.broadcast %386 : vector<16x1xf32> to vector<16x16xf32>
    %388 = arith.subf %384, %387 : vector<16x16xf32>
    %389 = math.exp %388 : vector<16x16xf32>
    %cst_303 = arith.constant dense<0.000000e+00> : vector<16xf32>
    %390 = vector.multi_reduction <add>, %389, %cst_303 [1] : vector<16x16xf32> to vector<16xf32>
    %391 = vector.shape_cast %390 : vector<16xf32> to vector<16x1xf32>
    %392 = tpu.reciprocal %391 {approx = true} : vector<16x1xf32> -> vector<16x1xf32>
    %393 = vector.broadcast %392 : vector<16x1xf32> to vector<16x16xf32>
    %394 = arith.mulf %389, %393 : vector<16x16xf32>
    %395 = arith.truncf %394 : vector<16x16xf32> to vector<16x16xbf16>
    %396 = arith.truncf %378 : vector<16x8xf32> to vector<16x8xbf16>
    %cst_304 = arith.constant dense<0.000000e+00> : vector<16x8xf32>
    %397 = tpu.matmul %395, %396, %cst_304 {dimension_numbers = #tpu.dot_dimension_numbers<[1], [0], [0], [1], [0, 0, 1, 1], [], []>} : vector<16x16xbf16>, vector<16x8xbf16>, vector<16x8xf32> -> vector<16x8xf32>
    %398 = arith.truncf %397 : vector<16x8xf32> to vector<16x8xbf16>
    %c0_305 = arith.constant 0 : index
    %c3_306 = arith.constant 3 : index
    %c0_307 = arith.constant 0 : index
    %c0_308 = arith.constant 0 : index
    %399 = vector.load %arg11[%c0_305, %c3_306, %c0_307, %c0_308] : memref<1x4x8x32xbf16, #tpu.memory_space<vmem>>, vector<1x1x8x32xbf16>
    %400 = vector.shape_cast %399 : vector<1x1x8x32xbf16> to vector<8x32xbf16>
    %cst_309 = arith.constant dense<0.000000e+00> : vector<16x32xf32>
    %401 = tpu.matmul %398, %400, %cst_309 {dimension_numbers = #tpu.dot_dimension_numbers<[1], [0], [0], [1], [0, 0, 1, 1], [], []>} : vector<16x8xbf16>, vector<8x32xbf16>, vector<16x32xf32> -> vector<16x32xf32>
    %402 = arith.addf %357, %401 : vector<16x32xf32>
    %c0_310 = arith.constant 0 : index
    %c0_311 = arith.constant 0 : index
    %c0_312 = arith.constant 0 : index
    %403 = vector.load %arg12[%c0_310, %c0_311, %c0_312] : memref<1x1x32xf32, #tpu.memory_space<vmem>>, vector<1x1x32xf32>
    %404 = vector.shape_cast %403 : vector<1x1x32xf32> to vector<1x32xf32>
    %405 = vector.broadcast %404 : vector<1x32xf32> to vector<16x32xf32>
    %406 = arith.addf %402, %405 : vector<16x32xf32>
    %407 = arith.addf %406, %219 : vector<16x32xf32>
    %c0_313 = arith.constant 0 : index
    %c1_314 = arith.constant 1 : index
    %c0_315 = arith.constant 0 : index
    %c0_316 = arith.constant 0 : index
    %408 = vector.load %arg17[%c0_313, %c1_314, %c0_315, %c0_316] : memref<1x3x1x32xf32, #tpu.memory_space<vmem>>, vector<1x1x1x32xf32>
    %409 = vector.shape_cast %408 : vector<1x1x1x32xf32> to vector<1x32xf32>
    %c0_317 = arith.constant 0 : index
    %c1_318 = arith.constant 1 : index
    %c0_319 = arith.constant 0 : index
    %c0_320 = arith.constant 0 : index
    %410 = vector.load %arg18[%c0_317, %c1_318, %c0_319, %c0_320] : memref<1x3x1x32xf32, #tpu.memory_space<vmem>>, vector<1x1x1x32xf32>
    %411 = vector.shape_cast %410 : vector<1x1x1x32xf32> to vector<1x32xf32>
    %cst_321 = arith.constant dense<0.000000e+00> : vector<16xf32>
    %412 = vector.multi_reduction <add>, %407, %cst_321 [1] : vector<16x32xf32> to vector<16xf32>
    %413 = vector.shape_cast %412 : vector<16xf32> to vector<16x1xf32>
    %cst_322 = arith.constant 3.200000e+01 : f32
    %414 = vector.broadcast %cst_322 : f32 to vector<16x1xf32>
    %415 = arith.divf %413, %414 : vector<16x1xf32>
    %416 = vector.broadcast %415 : vector<16x1xf32> to vector<16x32xf32>
    %417 = arith.subf %407, %416 : vector<16x32xf32>
    %418 = arith.mulf %417, %417 : vector<16x32xf32>
    %cst_323 = arith.constant dense<0.000000e+00> : vector<16xf32>
    %419 = vector.multi_reduction <add>, %418, %cst_323 [1] : vector<16x32xf32> to vector<16xf32>
    %420 = vector.shape_cast %419 : vector<16xf32> to vector<16x1xf32>
    %cst_324 = arith.constant 3.200000e+01 : f32
    %421 = vector.broadcast %cst_324 : f32 to vector<16x1xf32>
    %422 = arith.divf %420, %421 : vector<16x1xf32>
    %423 = vector.broadcast %415 : vector<16x1xf32> to vector<16x32xf32>
    %424 = arith.subf %407, %423 : vector<16x32xf32>
    %cst_325 = arith.constant 9.99999974E-6 : f32
    %425 = vector.broadcast %cst_325 : f32 to vector<16x1xf32>
    %426 = arith.addf %422, %425 : vector<16x1xf32>
    %427 = math.rsqrt %426 : vector<16x1xf32>
    %428 = vector.broadcast %427 : vector<16x1xf32> to vector<16x32xf32>
    %429 = arith.mulf %424, %428 : vector<16x32xf32>
    %430 = vector.broadcast %409 : vector<1x32xf32> to vector<16x32xf32>
    %431 = arith.mulf %429, %430 : vector<16x32xf32>
    %432 = vector.broadcast %411 : vector<1x32xf32> to vector<16x32xf32>
    %433 = arith.addf %431, %432 : vector<16x32xf32>
    %434 = arith.truncf %433 : vector<16x32xf32> to vector<16x32xbf16>
    %c0_326 = arith.constant 0 : index
    %c0_327 = arith.constant 0 : index
    %c0_328 = arith.constant 0 : index
    %435 = vector.load %arg13[%c0_326, %c0_327, %c0_328] : memref<1x32x64xbf16, #tpu.memory_space<vmem>>, vector<1x32x64xbf16>
    %436 = vector.shape_cast %435 : vector<1x32x64xbf16> to vector<32x64xbf16>
    %cst_329 = arith.constant dense<0.000000e+00> : vector<16x64xf32>
    %437 = tpu.matmul %434, %436, %cst_329 {dimension_numbers = #tpu.dot_dimension_numbers<[1], [0], [0], [1], [0, 0, 1, 1], [], []>} : vector<16x32xbf16>, vector<32x64xbf16>, vector<16x64xf32> -> vector<16x64xf32>
    %c0_330 = arith.constant 0 : index
    %c0_331 = arith.constant 0 : index
    %c0_332 = arith.constant 0 : index
    %438 = vector.load %arg14[%c0_330, %c0_331, %c0_332] : memref<1x1x64xf32, #tpu.memory_space<vmem>>, vector<1x1x64xf32>
    %439 = vector.shape_cast %438 : vector<1x1x64xf32> to vector<1x64xf32>
    %440 = vector.broadcast %439 : vector<1x64xf32> to vector<16x64xf32>
    %441 = arith.addf %437, %440 : vector<16x64xf32>
    %cst_333 = arith.constant 0.000000e+00 : f32
    %442 = vector.broadcast %cst_333 : f32 to vector<16x64xf32>
    %443 = arith.maximumf %441, %442 : vector<16x64xf32>
    %444 = arith.truncf %443 : vector<16x64xf32> to vector<16x64xbf16>
    %c0_334 = arith.constant 0 : index
    %c0_335 = arith.constant 0 : index
    %c0_336 = arith.constant 0 : index
    %445 = vector.load %arg15[%c0_334, %c0_335, %c0_336] : memref<1x64x32xbf16, #tpu.memory_space<vmem>>, vector<1x64x32xbf16>
    %446 = vector.shape_cast %445 : vector<1x64x32xbf16> to vector<64x32xbf16>
    %cst_337 = arith.constant dense<0.000000e+00> : vector<16x32xf32>
    %447 = tpu.matmul %444, %446, %cst_337 {dimension_numbers = #tpu.dot_dimension_numbers<[1], [0], [0], [1], [0, 0, 1, 1], [], []>} : vector<16x64xbf16>, vector<64x32xbf16>, vector<16x32xf32> -> vector<16x32xf32>
    %c0_338 = arith.constant 0 : index
    %c0_339 = arith.constant 0 : index
    %c0_340 = arith.constant 0 : index
    %448 = vector.load %arg16[%c0_338, %c0_339, %c0_340] : memref<1x1x32xf32, #tpu.memory_space<vmem>>, vector<1x1x32xf32>
    %449 = vector.shape_cast %448 : vector<1x1x32xf32> to vector<1x32xf32>
    %450 = vector.broadcast %449 : vector<1x32xf32> to vector<16x32xf32>
    %451 = arith.addf %447, %450 : vector<16x32xf32>
    %452 = arith.addf %451, %433 : vector<16x32xf32>
    %c0_341 = arith.constant 0 : index
    %c2_342 = arith.constant 2 : index
    %c0_343 = arith.constant 0 : index
    %c0_344 = arith.constant 0 : index
    %453 = vector.load %arg17[%c0_341, %c2_342, %c0_343, %c0_344] : memref<1x3x1x32xf32, #tpu.memory_space<vmem>>, vector<1x1x1x32xf32>
    %454 = vector.shape_cast %453 : vector<1x1x1x32xf32> to vector<1x32xf32>
    %c0_345 = arith.constant 0 : index
    %c2_346 = arith.constant 2 : index
    %c0_347 = arith.constant 0 : index
    %c0_348 = arith.constant 0 : index
    %455 = vector.load %arg18[%c0_345, %c2_346, %c0_347, %c0_348] : memref<1x3x1x32xf32, #tpu.memory_space<vmem>>, vector<1x1x1x32xf32>
    %456 = vector.shape_cast %455 : vector<1x1x1x32xf32> to vector<1x32xf32>
    %cst_349 = arith.constant dense<0.000000e+00> : vector<16xf32>
    %457 = vector.multi_reduction <add>, %452, %cst_349 [1] : vector<16x32xf32> to vector<16xf32>
    %458 = vector.shape_cast %457 : vector<16xf32> to vector<16x1xf32>
    %cst_350 = arith.constant 3.200000e+01 : f32
    %459 = vector.broadcast %cst_350 : f32 to vector<16x1xf32>
    %460 = arith.divf %458, %459 : vector<16x1xf32>
    %461 = vector.broadcast %460 : vector<16x1xf32> to vector<16x32xf32>
    %462 = arith.subf %452, %461 : vector<16x32xf32>
    %463 = arith.mulf %462, %462 : vector<16x32xf32>
    %cst_351 = arith.constant dense<0.000000e+00> : vector<16xf32>
    %464 = vector.multi_reduction <add>, %463, %cst_351 [1] : vector<16x32xf32> to vector<16xf32>
    %465 = vector.shape_cast %464 : vector<16xf32> to vector<16x1xf32>
    %cst_352 = arith.constant 3.200000e+01 : f32
    %466 = vector.broadcast %cst_352 : f32 to vector<16x1xf32>
    %467 = arith.divf %465, %466 : vector<16x1xf32>
    %468 = vector.broadcast %460 : vector<16x1xf32> to vector<16x32xf32>
    %469 = arith.subf %452, %468 : vector<16x32xf32>
    %cst_353 = arith.constant 9.99999974E-6 : f32
    %470 = vector.broadcast %cst_353 : f32 to vector<16x1xf32>
    %471 = arith.addf %467, %470 : vector<16x1xf32>
    %472 = math.rsqrt %471 : vector<16x1xf32>
    %473 = vector.broadcast %472 : vector<16x1xf32> to vector<16x32xf32>
    %474 = arith.mulf %469, %473 : vector<16x32xf32>
    %475 = vector.broadcast %454 : vector<1x32xf32> to vector<16x32xf32>
    %476 = arith.mulf %474, %475 : vector<16x32xf32>
    %477 = vector.broadcast %456 : vector<1x32xf32> to vector<16x32xf32>
    %478 = arith.addf %476, %477 : vector<16x32xf32>
    %c0_354 = arith.constant 0 : index
    %c0_355 = arith.constant 0 : index
    %479 = vector.load %arg20[%c0_354, %c0_355] : memref<16x32xf32, #tpu.memory_space<vmem>>, vector<16x32xf32>
    tpu.vector_store %arg20[%c0_354, %c0_355], %478 {strides = array<i32>} : memref<16x32xf32, #tpu.memory_space<vmem>>, vector<16x32xf32>,
    %c0_356 = arith.constant 0 : index
    %c0_357 = arith.constant 0 : index
    %480 = vector.load %arg19[%c0_356, %c0_357] : memref<16x32xf32, #tpu.memory_space<vmem>>, vector<16x32xf32>
    tpu.vector_store %arg19[%c0_356, %c0_357], %478 {strides = array<i32>} : memref<16x32xf32, #tpu.memory_space<vmem>>, vector<16x32xf32>,
    return
  }
  func.func @transform_0(%arg0: i32) -> (i32, i32) {
    %c0_i32 = arith.constant 0 : i32
    %c0_i32_0 = arith.constant 0 : i32
    %c0_i32_1 = arith.constant 0 : i32
    return %c0_i32, %c0_i32_0 : i32, i32
  }
  func.func @transform_1(%arg0: i32) -> (i32, i32) {
    %c0_i32 = arith.constant 0 : i32
    %c0_i32_0 = arith.constant 0 : i32
    %c0_i32_1 = arith.constant 0 : i32
    return %c0_i32, %c0_i32_0 : i32, i32
  }
  func.func @transform_2(%arg0: i32) -> (i32, i32) {
    %c0_i32 = arith.constant 0 : i32
    %c0_i32_0 = arith.constant 0 : i32
    %c0_i32_1 = arith.constant 0 : i32
    return %c0_i32, %c0_i32_0 : i32, i32
  }
  func.func @transform_3(%arg0: i32) -> (i32, i32) {
    %c0_i32 = arith.constant 0 : i32
    %c0_i32_0 = arith.constant 0 : i32
    %c0_i32_1 = arith.constant 0 : i32
    return %c0_i32, %c0_i32_0 : i32, i32
  }
  func.func @transform_4(%arg0: i32) -> (i32, i32, i32, i32) {
    %c0_i32 = arith.constant 0 : i32
    %c0_i32_0 = arith.constant 0 : i32
    %c0_i32_1 = arith.constant 0 : i32
    %c0_i32_2 = arith.constant 0 : i32
    return %arg0, %c0_i32, %c0_i32_0, %c0_i32_1 : i32, i32, i32, i32
  }
  func.func @transform_5(%arg0: i32) -> (i32, i32, i32, i32) {
    %c0_i32 = arith.constant 0 : i32
    %c0_i32_0 = arith.constant 0 : i32
    %c0_i32_1 = arith.constant 0 : i32
    %c0_i32_2 = arith.constant 0 : i32
    return %arg0, %c0_i32, %c0_i32_0, %c0_i32_1 : i32, i32, i32, i32
  }
  func.func @transform_6(%arg0: i32) -> (i32, i32, i32, i32) {
    %c0_i32 = arith.constant 0 : i32
    %c0_i32_0 = arith.constant 0 : i32
    %c0_i32_1 = arith.constant 0 : i32
    %c0_i32_2 = arith.constant 0 : i32
    return %arg0, %c0_i32, %c0_i32_0, %c0_i32_1 : i32, i32, i32, i32
  }
  func.func @transform_7(%arg0: i32) -> (i32, i32, i32) {
    %c0_i32 = arith.constant 0 : i32
    %c0_i32_0 = arith.constant 0 : i32
    %c0_i32_1 = arith.constant 0 : i32
    return %arg0, %c0_i32, %c0_i32_0 : i32, i32, i32
  }
  func.func @transform_8(%arg0: i32) -> (i32, i32, i32, i32) {
    %c0_i32 = arith.constant 0 : i32
    %c0_i32_0 = arith.constant 0 : i32
    %c0_i32_1 = arith.constant 0 : i32
    %c0_i32_2 = arith.constant 0 : i32
    return %arg0, %c0_i32, %c0_i32_0, %c0_i32_1 : i32, i32, i32, i32
  }
  func.func @transform_9(%arg0: i32) -> (i32, i32, i32, i32) {
    %c0_i32 = arith.constant 0 : i32
    %c0_i32_0 = arith.constant 0 : i32
    %c0_i32_1 = arith.constant 0 : i32
    %c0_i32_2 = arith.constant 0 : i32
    return %arg0, %c0_i32, %c0_i32_0, %c0_i32_1 : i32, i32, i32, i32
  }
  func.func @transform_10(%arg0: i32) -> (i32, i32, i32, i32) {
    %c0_i32 = arith.constant 0 : i32
    %c0_i32_0 = arith.constant 0 : i32
    %c0_i32_1 = arith.constant 0 : i32
    %c0_i32_2 = arith.constant 0 : i32
    return %arg0, %c0_i32, %c0_i32_0, %c0_i32_1 : i32, i32, i32, i32
  }
  func.func @transform_11(%arg0: i32) -> (i32, i32, i32) {
    %c0_i32 = arith.constant 0 : i32
    %c0_i32_0 = arith.constant 0 : i32
    %c0_i32_1 = arith.constant 0 : i32
    return %arg0, %c0_i32, %c0_i32_0 : i32, i32, i32
  }
  func.func @transform_12(%arg0: i32) -> (i32, i32, i32) {
    %c0_i32 = arith.constant 0 : i32
    %c0_i32_0 = arith.constant 0 : i32
    %c0_i32_1 = arith.constant 0 : i32
    return %arg0, %c0_i32, %c0_i32_0 : i32, i32, i32
  }
  func.func @transform_13(%arg0: i32) -> (i32, i32, i32) {
    %c0_i32 = arith.constant 0 : i32
    %c0_i32_0 = arith.constant 0 : i32
    %c0_i32_1 = arith.constant 0 : i32
    return %arg0, %c0_i32, %c0_i32_0 : i32, i32, i32
  }
  func.func @transform_14(%arg0: i32) -> (i32, i32, i32) {
    %c0_i32 = arith.constant 0 : i32
    %c0_i32_0 = arith.constant 0 : i32
    %c0_i32_1 = arith.constant 0 : i32
    return %arg0, %c0_i32, %c0_i32_0 : i32, i32, i32
  }
  func.func @transform_15(%arg0: i32) -> (i32, i32, i32) {
    %c0_i32 = arith.constant 0 : i32
    %c0_i32_0 = arith.constant 0 : i32
    %c0_i32_1 = arith.constant 0 : i32
    return %arg0, %c0_i32, %c0_i32_0 : i32, i32, i32
  }
  func.func @transform_16(%arg0: i32) -> (i32, i32, i32, i32) {
    %c0_i32 = arith.constant 0 : i32
    %c0_i32_0 = arith.constant 0 : i32
    %c0_i32_1 = arith.constant 0 : i32
    %c0_i32_2 = arith.constant 0 : i32
    return %arg0, %c0_i32, %c0_i32_0, %c0_i32_1 : i32, i32, i32, i32
  }
  func.func @transform_17(%arg0: i32) -> (i32, i32, i32, i32) {
    %c0_i32 = arith.constant 0 : i32
    %c0_i32_0 = arith.constant 0 : i32
    %c0_i32_1 = arith.constant 0 : i32
    %c0_i32_2 = arith.constant 0 : i32
    return %arg0, %c0_i32, %c0_i32_0, %c0_i32_1 : i32, i32, i32, i32
  }
  func.func @transform_18(%arg0: i32) -> (i32, i32) {
    %c0_i32 = arith.constant 0 : i32
    %c0_i32_0 = arith.constant 0 : i32
    %c0_i32_1 = arith.constant 0 : i32
    return %c0_i32, %c0_i32_0 : i32, i32
  }
}

</mosaic_0001>

<llo_original>
// kernel: tpu_custom_call.1
$region0: #{tpu_custom_call.1}
  #allocation0 [shape = 'u32[]', space=smem, size = 0x4, offset = 0x4, fixed_abs, tag = 'smem constant byte address 0x4 - core index']
  #allocation1 [shape = 'u32[144,128]{1,0:T(1,128)}', space=vmem, size = 0x12000, scoped, tag = 'internal scratch']
  #allocation2 [shape = 'f32[16,32]{1,0:T(8,128)}', space=vmem, size = 0x2000, scoped, tag = 'scratch operand']
  %s0 = inlined_call_operand.vmem [shape: f32[16,32], index: 0, kind: input, shape index: {}]
  %s1 = inlined_call_operand.vmem [shape: bf16[16,32], index: 1, kind: input, shape index: {}]
  %s2 = inlined_call_operand.vmem [shape: f32[16,16], index: 2, kind: input, shape index: {}]
  %s3 = inlined_call_operand.vmem [shape: f32[16,16], index: 3, kind: input, shape index: {}]
  %s4 = inlined_call_operand.vmem [shape: bf16[2,12,32,8], index: 4, kind: input, shape index: {}]
  %s5 = inlined_call_operand.vmem [shape: f32[2,12,1,8], index: 5, kind: input, shape index: {}]
  %s6 = inlined_call_operand.vmem [shape: bf16[2,4,8,32], index: 6, kind: input, shape index: {}]
  %s7 = inlined_call_operand.vmem [shape: f32[2,1,32], index: 7, kind: input, shape index: {}]
  %s8 = inlined_call_operand.vmem [shape: bf16[2,12,32,8], index: 8, kind: input, shape index: {}]
  %s9 = inlined_call_operand.vmem [shape: f32[2,12,1,8], index: 9, kind: input, shape index: {}]
  %s10 = inlined_call_operand.vmem [shape: bf16[2,4,8,32], index: 10, kind: input, shape index: {}]
  %s11 = inlined_call_operand.vmem [shape: f32[2,1,32], index: 11, kind: input, shape index: {}]
  %s12 = inlined_call_operand.vmem [shape: bf16[2,32,64], index: 12, kind: input, shape index: {}]
  %s13 = inlined_call_operand.vmem [shape: f32[2,1,64], index: 13, kind: input, shape index: {}]
  %s14 = inlined_call_operand.vmem [shape: bf16[2,64,32], index: 14, kind: input, shape index: {}]
  %s15 = inlined_call_operand.vmem [shape: f32[2,1,32], index: 15, kind: input, shape index: {}]
  %s16 = inlined_call_operand.vmem [shape: f32[2,3,1,32], index: 16, kind: input, shape index: {}]
  %s17 = inlined_call_operand.vmem [shape: f32[2,3,1,32], index: 17, kind: input, shape index: {}]
  %s18 = inlined_call_operand.hbm [shape: f32[16,32], index: 18, kind: output, shape index: {}]
  %s19 = sld [smem:[#allocation0]]
  $region109: #{tpu_custom_call.1} parent=0
    _
  %s21 = ssub.s32 1, %s19
  %s22 = scalar_select 0, %s21, %s19
  $region1: #{tpu_custom_call.1} parent=0
    #allocation3 [shape = 'u8[8192]{0}', space=vmem, size = 0x2000, scoped, tag = 'output window, operand 0, single buffered']
    #allocation4 [shape = 's32[2]{0}', space=sflag, size = 0x8, scoped, tag = 'scoped memory for tpu_custom_call.1']
    %23 = vsyncpa [#allocation4], 0
    loop: start=0, step=1, limit=4
    $region2: #{tpu_custom_call.1} parent=1 // loop_pre_header
      _
    $region3: #{tpu_custom_call.1} parent=1 // loop_header
      %s25 = sphi 0, %s29
      %p26 = scmp.ge.s32.totalorder %s25, 4
      %s33 = sphi 0, %s33
      %s35 = sphi 0, %s33
      %s36 = sphi 0, %s35
      %s50 = sphi 0, %s36
      %s54 = sphi 0, %s54
      %s56 = sphi 0, %s54
      %s57 = sphi 0, %s56
      %s71 = sphi 0, %s57
      %s75 = sphi 0, %s75
      %s77 = sphi 0, %s75
      %s78 = sphi 0, %s77
      %s92 = sphi 0, %s78
      %s96 = sphi 0, %s96
      %s98 = sphi 0, %s96
      %s99 = sphi 0, %s98
      %s113 = sphi 0, %s99
      %s119 = sphi 0, %s121
      %s122 = sphi 0, %s119
      %s123 = sphi 0, %s122
      %s139 = sphi 0, %s123
      %s145 = sphi 0, %s147
      %s148 = sphi 0, %s145
      %s149 = sphi 0, %s148
      %s165 = sphi 0, %s149
      %s171 = sphi 0, %s173
      %s174 = sphi 0, %s171
      %s175 = sphi 0, %s174
      %s191 = sphi 0, %s175
      %s197 = sphi 0, %s199
      %s200 = sphi 0, %s197
      %s201 = sphi 0, %s200
      %s217 = sphi 0, %s201
      %s223 = sphi 0, %s225
      %s226 = sphi 0, %s223
      %s227 = sphi 0, %s226
      %s243 = sphi 0, %s227
      %s249 = sphi 0, %s251
      %s252 = sphi 0, %s249
      %s253 = sphi 0, %s252
      %s269 = sphi 0, %s253
      %s275 = sphi 0, %s277
      %s278 = sphi 0, %s275
      %s279 = sphi 0, %s278
      %s295 = sphi 0, %s279
      %s301 = sphi 0, %s303
      %s304 = sphi 0, %s301
      %s305 = sphi 0, %s304
      %s321 = sphi 0, %s305
      %s327 = sphi 0, %s329
      %s330 = sphi 0, %s327
      %s331 = sphi 0, %s330
      %s347 = sphi 0, %s331
      %s353 = sphi 0, %s355
      %s356 = sphi 0, %s353
      %s357 = sphi 0, %s356
      %s373 = sphi 0, %s357
      %s379 = sphi 0, %s381
      %s382 = sphi 0, %s379
      %s383 = sphi 0, %s382
      %s399 = sphi 0, %s383
      %s405 = sphi 0, %s407
      %s408 = sphi 0, %s405
      %s409 = sphi 0, %s408
      %s425 = sphi 0, %s409
      %s431 = sphi 0, %s433
      %s434 = sphi 0, %s431
      %s435 = sphi 0, %s434
      %s451 = sphi 0, %s435
      %s457 = sphi 0, %s459
      %s460 = sphi 0, %s457
      %s461 = sphi 0, %s460
      %s477 = sphi 0, %s461
      %s481 = sphi 0, %s481
      %s483 = sphi 0, %s481
      %s484 = sphi 0, %s483
      %s498 = sphi 0, %s484
    $region4: #{tpu_custom_call.1} parent=1 // loop_header_branch
      %28 = sbr.rel (%p26) target = $region8
    $region5: #{tpu_custom_call.1} parent=1 // loop_body
      %s30 = ssub.s32 %s25, 1
      %s31 = ssub.s32 %s25, 2
      %s32 = sadd.s32 %s25, 1
      %s34 = sadd.s32 %s33, 1
      %p37 = scmp.eq.s32.totalorder %s25, 1
      %p38 = scmp.ne.s32.totalorder %s33, %s35
      %p39 = scmp.eq.s32.totalorder %s25, 0
      %p40 = por %p38, %p39
      %p41 = scmp.ne.s32.totalorder %s33, %s35
      %p42 = scmp.eq.s32.totalorder %s30, 1
      %p43 = por %p41, %p42
      %p44 = scmp.ne.s32.totalorder %s35, %s36
      %p45 = scmp.eq.s32.totalorder %s30, 0
      %p46 = por %p44, %p45
      %p47 = scmp.ne.s32.totalorder %s35, %s36
      %p48 = scmp.eq.s32.totalorder %s31, 1
      %p49 = por %p47, %p48
      %p51 = scmp.ne.s32.totalorder %s36, %s50
      %p52 = scmp.eq.s32.totalorder %s31, 0
      %p53 = por %p51, %p52
      %s55 = sadd.s32 %s54, 1
      %p58 = scmp.eq.s32.totalorder %s25, 1
      %p59 = scmp.ne.s32.totalorder %s54, %s56
      %p60 = scmp.eq.s32.totalorder %s25, 0
      %p61 = por %p59, %p60
      %p62 = scmp.ne.s32.totalorder %s54, %s56
      %p63 = scmp.eq.s32.totalorder %s30, 1
      %p64 = por %p62, %p63
      %p65 = scmp.ne.s32.totalorder %s56, %s57
      %p66 = scmp.eq.s32.totalorder %s30, 0
      %p67 = por %p65, %p66
      %p68 = scmp.ne.s32.totalorder %s56, %s57
      %p69 = scmp.eq.s32.totalorder %s31, 1
      %p70 = por %p68, %p69
      %p72 = scmp.ne.s32.totalorder %s57, %s71
      %p73 = scmp.eq.s32.totalorder %s31, 0
      %p74 = por %p72, %p73
      %s76 = sadd.s32 %s75, 1
      %p79 = scmp.eq.s32.totalorder %s25, 1
      %p80 = scmp.ne.s32.totalorder %s75, %s77
      %p81 = scmp.eq.s32.totalorder %s25, 0
      %p82 = por %p80, %p81
      %p83 = scmp.ne.s32.totalorder %s75, %s77
      %p84 = scmp.eq.s32.totalorder %s30, 1
      %p85 = por %p83, %p84
      %p86 = scmp.ne.s32.totalorder %s77, %s78
      %p87 = scmp.eq.s32.totalorder %s30, 0
      %p88 = por %p86, %p87
      %p89 = scmp.ne.s32.totalorder %s77, %s78
      %p90 = scmp.eq.s32.totalorder %s31, 1
      %p91 = por %p89, %p90
      %p93 = scmp.ne.s32.totalorder %s78, %s92
      %p94 = scmp.eq.s32.totalorder %s31, 0
      %p95 = por %p93, %p94
      %s97 = sadd.s32 %s96, 1
      %p100 = scmp.eq.s32.totalorder %s25, 1
      %p101 = scmp.ne.s32.totalorder %s96, %s98
      %p102 = scmp.eq.s32.totalorder %s25, 0
      %p103 = por %p101, %p102
      %p104 = scmp.ne.s32.totalorder %s96, %s98
      %p105 = scmp.eq.s32.totalorder %s30, 1
      %p106 = por %p104, %p105
      %p107 = scmp.ne.s32.totalorder %s98, %s99
      %p108 = scmp.eq.s32.totalorder %s30, 0
      %p109 = por %p107, %p108
      %p110 = scmp.ne.s32.totalorder %s98, %s99
      %p111 = scmp.eq.s32.totalorder %s31, 1
      %p112 = por %p110, %p111
      %p114 = scmp.ne.s32.totalorder %s99, %s113
      %p115 = scmp.eq.s32.totalorder %s31, 0
      %p116 = por %p114, %p115
      %s117 = ssub.s32 %s25, %s32
      %p118 = scmp.eq.s32.totalorder %s117, 0
      %s120 = sadd.s32 %s119, 1
      %s121 = scalar_select %p118, %s119, %s120
      %p124 = pneg %p118
      %p125 = scmp.eq.s32.totalorder %s25, 1
      %p126 = por %p124, %p125
      %p127 = scmp.ne.s32.totalorder %s119, %s122
      %p128 = scmp.eq.s32.totalorder %s25, 0
      %p129 = por %p127, %p128
      %p130 = scmp.ne.s32.totalorder %s119, %s122
      %p131 = scmp.eq.s32.totalorder %s30, 1
      %p132 = por %p130, %p131
      %p133 = scmp.ne.s32.totalorder %s122, %s123
      %p134 = scmp.eq.s32.totalorder %s30, 0
      %p135 = por %p133, %p134
      %p136 = scmp.ne.s32.totalorder %s122, %s123
      %p137 = scmp.eq.s32.totalorder %s31, 1
      %p138 = por %p136, %p137
      %p140 = scmp.ne.s32.totalorder %s123, %s139
      %p141 = scmp.eq.s32.totalorder %s31, 0
      %p142 = por %p140, %p141
      %s143 = ssub.s32 %s25, %s32
      %p144 = scmp.eq.s32.totalorder %s143, 0
      %s146 = sadd.s32 %s145, 1
      %s147 = scalar_select %p144, %s145, %s146
      %p150 = pneg %p144
      %p151 = scmp.eq.s32.totalorder %s25, 1
      %p152 = por %p150, %p151
      %p153 = scmp.ne.s32.totalorder %s145, %s148
      %p154 = scmp.eq.s32.totalorder %s25, 0
      %p155 = por %p153, %p154
      %p156 = scmp.ne.s32.totalorder %s145, %s148
      %p157 = scmp.eq.s32.totalorder %s30, 1
      %p158 = por %p156, %p157
      %p159 = scmp.ne.s32.totalorder %s148, %s149
      %p160 = scmp.eq.s32.totalorder %s30, 0
      %p161 = por %p159, %p160
      %p162 = scmp.ne.s32.totalorder %s148, %s149
      %p163 = scmp.eq.s32.totalorder %s31, 1
      %p164 = por %p162, %p163
      %p166 = scmp.ne.s32.totalorder %s149, %s165
      %p167 = scmp.eq.s32.totalorder %s31, 0
      %p168 = por %p166, %p167
      %s169 = ssub.s32 %s25, %s32
      %p170 = scmp.eq.s32.totalorder %s169, 0
      %s172 = sadd.s32 %s171, 1
      %s173 = scalar_select %p170, %s171, %s172
      %p176 = pneg %p170
      %p177 = scmp.eq.s32.totalorder %s25, 1
      %p178 = por %p176, %p177
      %p179 = scmp.ne.s32.totalorder %s171, %s174
      %p180 = scmp.eq.s32.totalorder %s25, 0
      %p181 = por %p179, %p180
      %p182 = scmp.ne.s32.totalorder %s171, %s174
      %p183 = scmp.eq.s32.totalorder %s30, 1
      %p184 = por %p182, %p183
      %p185 = scmp.ne.s32.totalorder %s174, %s175
      %p186 = scmp.eq.s32.totalorder %s30, 0
      %p187 = por %p185, %p186
      %p188 = scmp.ne.s32.totalorder %s174, %s175
      %p189 = scmp.eq.s32.totalorder %s31, 1
      %p190 = por %p188, %p189
      %p192 = scmp.ne.s32.totalorder %s175, %s191
      %p193 = scmp.eq.s32.totalorder %s31, 0
      %p194 = por %p192, %p193
      %s195 = ssub.s32 %s25, %s32
      %p196 = scmp.eq.s32.totalorder %s195, 0
      %s198 = sadd.s32 %s197, 1
      %s199 = scalar_select %p196, %s197, %s198
      %p202 = pneg %p196
      %p203 = scmp.eq.s32.totalorder %s25, 1
      %p204 = por %p202, %p203
      %p205 = scmp.ne.s32.totalorder %s197, %s200
      %p206 = scmp.eq.s32.totalorder %s25, 0
      %p207 = por %p205, %p206
      %p208 = scmp.ne.s32.totalorder %s197, %s200
      %p209 = scmp.eq.s32.totalorder %s30, 1
      %p210 = por %p208, %p209
      %p211 = scmp.ne.s32.totalorder %s200, %s201
      %p212 = scmp.eq.s32.totalorder %s30, 0
      %p213 = por %p211, %p212
      %p214 = scmp.ne.s32.totalorder %s200, %s201
      %p215 = scmp.eq.s32.totalorder %s31, 1
      %p216 = por %p214, %p215
      %p218 = scmp.ne.s32.totalorder %s201, %s217
      %p219 = scmp.eq.s32.totalorder %s31, 0
      %p220 = por %p218, %p219
      %s221 = ssub.s32 %s25, %s32
      %p222 = scmp.eq.s32.totalorder %s221, 0
      %s224 = sadd.s32 %s223, 1
      %s225 = scalar_select %p222, %s223, %s224
      %p228 = pneg %p222
      %p229 = scmp.eq.s32.totalorder %s25, 1
      %p230 = por %p228, %p229
      %p231 = scmp.ne.s32.totalorder %s223, %s226
      %p232 = scmp.eq.s32.totalorder %s25, 0
      %p233 = por %p231, %p232
      %p234 = scmp.ne.s32.totalorder %s223, %s226
      %p235 = scmp.eq.s32.totalorder %s30, 1
      %p236 = por %p234, %p235
      %p237 = scmp.ne.s32.totalorder %s226, %s227
      %p238 = scmp.eq.s32.totalorder %s30, 0
      %p239 = por %p237, %p238
      %p240 = scmp.ne.s32.totalorder %s226, %s227
      %p241 = scmp.eq.s32.totalorder %s31, 1
      %p242 = por %p240, %p241
      %p244 = scmp.ne.s32.totalorder %s227, %s243
      %p245 = scmp.eq.s32.totalorder %s31, 0
      %p246 = por %p244, %p245
      %s247 = ssub.s32 %s25, %s32
      %p248 = scmp.eq.s32.totalorder %s247, 0
      %s250 = sadd.s32 %s249, 1
      %s251 = scalar_select %p248, %s249, %s250
      %p254 = pneg %p248
      %p255 = scmp.eq.s32.totalorder %s25, 1
      %p256 = por %p254, %p255
      %p257 = scmp.ne.s32.totalorder %s249, %s252
      %p258 = scmp.eq.s32.totalorder %s25, 0
      %p259 = por %p257, %p258
      %p260 = scmp.ne.s32.totalorder %s249, %s252
      %p261 = scmp.eq.s32.totalorder %s30, 1
      %p262 = por %p260, %p261
      %p263 = scmp.ne.s32.totalorder %s252, %s253
      %p264 = scmp.eq.s32.totalorder %s30, 0
      %p265 = por %p263, %p264
      %p266 = scmp.ne.s32.totalorder %s252, %s253
      %p267 = scmp.eq.s32.totalorder %s31, 1
      %p268 = por %p266, %p267
      %p270 = scmp.ne.s32.totalorder %s253, %s269
      %p271 = scmp.eq.s32.totalorder %s31, 0
      %p272 = por %p270, %p271
      %s273 = ssub.s32 %s25, %s32
      %p274 = scmp.eq.s32.totalorder %s273, 0
      %s276 = sadd.s32 %s275, 1
      %s277 = scalar_select %p274, %s275, %s276
      %p280 = pneg %p274
      %p281 = scmp.eq.s32.totalorder %s25, 1
      %p282 = por %p280, %p281
      %p283 = scmp.ne.s32.totalorder %s275, %s278
      %p284 = scmp.eq.s32.totalorder %s25, 0
      %p285 = por %p283, %p284
      %p286 = scmp.ne.s32.totalorder %s275, %s278
      %p287 = scmp.eq.s32.totalorder %s30, 1
      %p288 = por %p286, %p287
      %p289 = scmp.ne.s32.totalorder %s278, %s279
      %p290 = scmp.eq.s32.totalorder %s30, 0
      %p291 = por %p289, %p290
      %p292 = scmp.ne.s32.totalorder %s278, %s279
      %p293 = scmp.eq.s32.totalorder %s31, 1
      %p294 = por %p292, %p293
      %p296 = scmp.ne.s32.totalorder %s279, %s295
      %p297 = scmp.eq.s32.totalorder %s31, 0
      %p298 = por %p296, %p297
      %s299 = ssub.s32 %s25, %s32
      %p300 = scmp.eq.s32.totalorder %s299, 0
      %s302 = sadd.s32 %s301, 1
      %s303 = scalar_select %p300, %s301, %s302
      %p306 = pneg %p300
      %p307 = scmp.eq.s32.totalorder %s25, 1
      %p308 = por %p306, %p307
      %p309 = scmp.ne.s32.totalorder %s301, %s304
      %p310 = scmp.eq.s32.totalorder %s25, 0
      %p311 = por %p309, %p310
      %p312 = scmp.ne.s32.totalorder %s301, %s304
      %p313 = scmp.eq.s32.totalorder %s30, 1
      %p314 = por %p312, %p313
      %p315 = scmp.ne.s32.totalorder %s304, %s305
      %p316 = scmp.eq.s32.totalorder %s30, 0
      %p317 = por %p315, %p316
      %p318 = scmp.ne.s32.totalorder %s304, %s305
      %p319 = scmp.eq.s32.totalorder %s31, 1
      %p320 = por %p318, %p319
      %p322 = scmp.ne.s32.totalorder %s305, %s321
      %p323 = scmp.eq.s32.totalorder %s31, 0
      %p324 = por %p322, %p323
      %s325 = ssub.s32 %s25, %s32
      %p326 = scmp.eq.s32.totalorder %s325, 0
      %s328 = sadd.s32 %s327, 1
      %s329 = scalar_select %p326, %s327, %s328
      %p332 = pneg %p326
      %p333 = scmp.eq.s32.totalorder %s25, 1
      %p334 = por %p332, %p333
      %p335 = scmp.ne.s32.totalorder %s327, %s330
      %p336 = scmp.eq.s32.totalorder %s25, 0
      %p337 = por %p335, %p336
      %p338 = scmp.ne.s32.totalorder %s327, %s330
      %p339 = scmp.eq.s32.totalorder %s30, 1
      %p340 = por %p338, %p339
      %p341 = scmp.ne.s32.totalorder %s330, %s331
      %p342 = scmp.eq.s32.totalorder %s30, 0
      %p343 = por %p341, %p342
      %p344 = scmp.ne.s32.totalorder %s330, %s331
      %p345 = scmp.eq.s32.totalorder %s31, 1
      %p346 = por %p344, %p345
      %p348 = scmp.ne.s32.totalorder %s331, %s347
      %p349 = scmp.eq.s32.totalorder %s31, 0
      %p350 = por %p348, %p349
      %s351 = ssub.s32 %s25, %s32
      %p352 = scmp.eq.s32.totalorder %s351, 0
      %s354 = sadd.s32 %s353, 1
      %s355 = scalar_select %p352, %s353, %s354
      %p358 = pneg %p352
      %p359 = scmp.eq.s32.totalorder %s25, 1
      %p360 = por %p358, %p359
      %p361 = scmp.ne.s32.totalorder %s353, %s356
      %p362 = scmp.eq.s32.totalorder %s25, 0
      %p363 = por %p361, %p362
      %p364 = scmp.ne.s32.totalorder %s353, %s356
      %p365 = scmp.eq.s32.totalorder %s30, 1
      %p366 = por %p364, %p365
      %p367 = scmp.ne.s32.totalorder %s356, %s357
      %p368 = scmp.eq.s32.totalorder %s30, 0
      %p369 = por %p367, %p368
      %p370 = scmp.ne.s32.totalorder %s356, %s357
      %p371 = scmp.eq.s32.totalorder %s31, 1
      %p372 = por %p370, %p371
      %p374 = scmp.ne.s32.totalorder %s357, %s373
      %p375 = scmp.eq.s32.totalorder %s31, 0
      %p376 = por %p374, %p375
      %s377 = ssub.s32 %s25, %s32
      %p378 = scmp.eq.s32.totalorder %s377, 0
      %s380 = sadd.s32 %s379, 1
      %s381 = scalar_select %p378, %s379, %s380
      %p384 = pneg %p378
      %p385 = scmp.eq.s32.totalorder %s25, 1
      %p386 = por %p384, %p385
      %p387 = scmp.ne.s32.totalorder %s379, %s382
      %p388 = scmp.eq.s32.totalorder %s25, 0
      %p389 = por %p387, %p388
      %p390 = scmp.ne.s32.totalorder %s379, %s382
      %p391 = scmp.eq.s32.totalorder %s30, 1
      %p392 = por %p390, %p391
      %p393 = scmp.ne.s32.totalorder %s382, %s383
      %p394 = scmp.eq.s32.totalorder %s30, 0
      %p395 = por %p393, %p394
      %p396 = scmp.ne.s32.totalorder %s382, %s383
      %p397 = scmp.eq.s32.totalorder %s31, 1
      %p398 = por %p396, %p397
      %p400 = scmp.ne.s32.totalorder %s383, %s399
      %p401 = scmp.eq.s32.totalorder %s31, 0
      %p402 = por %p400, %p401
      %s403 = ssub.s32 %s25, %s32
      %p404 = scmp.eq.s32.totalorder %s403, 0
      %s406 = sadd.s32 %s405, 1
      %s407 = scalar_select %p404, %s405, %s406
      %p410 = pneg %p404
      %p411 = scmp.eq.s32.totalorder %s25, 1
      %p412 = por %p410, %p411
      %p413 = scmp.ne.s32.totalorder %s405, %s408
      %p414 = scmp.eq.s32.totalorder %s25, 0
      %p415 = por %p413, %p414
      %p416 = scmp.ne.s32.totalorder %s405, %s408
      %p417 = scmp.eq.s32.totalorder %s30, 1
      %p418 = por %p416, %p417
      %p419 = scmp.ne.s32.totalorder %s408, %s409
      %p420 = scmp.eq.s32.totalorder %s30, 0
      %p421 = por %p419, %p420
      %p422 = scmp.ne.s32.totalorder %s408, %s409
      %p423 = scmp.eq.s32.totalorder %s31, 1
      %p424 = por %p422, %p423
      %p426 = scmp.ne.s32.totalorder %s409, %s425
      %p427 = scmp.eq.s32.totalorder %s31, 0
      %p428 = por %p426, %p427
      %s429 = ssub.s32 %s25, %s32
      %p430 = scmp.eq.s32.totalorder %s429, 0
      %s432 = sadd.s32 %s431, 1
      %s433 = scalar_select %p430, %s431, %s432
      %p436 = pneg %p430
      %p437 = scmp.eq.s32.totalorder %s25, 1
      %p438 = por %p436, %p437
      %p439 = scmp.ne.s32.totalorder %s431, %s434
      %p440 = scmp.eq.s32.totalorder %s25, 0
      %p441 = por %p439, %p440
      %p442 = scmp.ne.s32.totalorder %s431, %s434
      %p443 = scmp.eq.s32.totalorder %s30, 1
      %p444 = por %p442, %p443
      %p445 = scmp.ne.s32.totalorder %s434, %s435
      %p446 = scmp.eq.s32.totalorder %s30, 0
      %p447 = por %p445, %p446
      %p448 = scmp.ne.s32.totalorder %s434, %s435
      %p449 = scmp.eq.s32.totalorder %s31, 1
      %p450 = por %p448, %p449
      %p452 = scmp.ne.s32.totalorder %s435, %s451
      %p453 = scmp.eq.s32.totalorder %s31, 0
      %p454 = por %p452, %p453
      %s455 = ssub.s32 %s25, %s32
      %p456 = scmp.eq.s32.totalorder %s455, 0
      %s458 = sadd.s32 %s457, 1
      %s459 = scalar_select %p456, %s457, %s458
      %p462 = pneg %p456
      %p463 = scmp.eq.s32.totalorder %s25, 1
      %p464 = por %p462, %p463
      %p465 = scmp.ne.s32.totalorder %s457, %s460
      %p466 = scmp.eq.s32.totalorder %s25, 0
      %p467 = por %p465, %p466
      %p468 = scmp.ne.s32.totalorder %s457, %s460
      %p469 = scmp.eq.s32.totalorder %s30, 1
      %p470 = por %p468, %p469
      %p471 = scmp.ne.s32.totalorder %s460, %s461
      %p472 = scmp.eq.s32.totalorder %s30, 0
      %p473 = por %p471, %p472
      %p474 = scmp.ne.s32.totalorder %s460, %s461
      %p475 = scmp.eq.s32.totalorder %s31, 1
      %p476 = por %p474, %p475
      %p478 = scmp.ne.s32.totalorder %s461, %s477
      %p479 = scmp.eq.s32.totalorder %s31, 0
      %p480 = por %p478, %p479
      %s482 = sadd.s32 %s481, 1
      %p485 = scmp.eq.s32.totalorder %s25, 1
      %p486 = scmp.ne.s32.totalorder %s481, %s483
      %p487 = scmp.eq.s32.totalorder %s25, 0
      %p488 = por %p486, %p487
      %p489 = scmp.ne.s32.totalorder %s481, %s483
      %p490 = scmp.eq.s32.totalorder %s30, 1
      %p491 = por %p489, %p490
      %p492 = scmp.ne.s32.totalorder %s483, %s484
      %p493 = scmp.eq.s32.totalorder %s30, 0
      %p494 = por %p492, %p493
      %p495 = scmp.ne.s32.totalorder %s483, %s484
      %p496 = scmp.eq.s32.totalorder %s31, 1
      %p497 = por %p495, %p496
      %p499 = scmp.ne.s32.totalorder %s484, %s498
      %p500 = scmp.eq.s32.totalorder %s31, 0
      %p501 = por %p499, %p500
      %p502 = scmp.le.s32.totalorder 1, %s25
      %p503 = scmp.lt.s32.totalorder %s25, 3
      %p504 = pnand %p502, %p503
      %p505 = pneg %p504
      // Predicated region
      $region9: #{tpu_custom_call.1} parent=5 // pred_check
        _
      $region10: #{tpu_custom_call.1} parent=5 // pred_check_branch
        %507 = sbr.rel (%p504) target = $region12
      $region11: #{tpu_custom_call.1} parent=5 // pred_region
        %s508 = ssub.s32 %s25, 1
        // Predicated region
        $region13: #{tpu_custom_call.1} parent=11 // pred_check
          %p509 = pneg %p46
        $region14: #{tpu_custom_call.1} parent=11 // pred_check_branch
          %511 = sbr.rel (%p509) target = $region16
        $region15: #{tpu_custom_call.1} parent=11 // pred_region
          _
        $region16: #{tpu_custom_call.1} parent=11 // pred_fallthru
          _
        // Predicated region
        $region17: #{tpu_custom_call.1} parent=11 // pred_check
          %p512 = pneg %p67
        $region18: #{tpu_custom_call.1} parent=11 // pred_check_branch
          %514 = sbr.rel (%p512) target = $region20
        $region19: #{tpu_custom_call.1} parent=11 // pred_region
          _
        $region20: #{tpu_custom_call.1} parent=11 // pred_fallthru
          _
        // Predicated region
        $region21: #{tpu_custom_call.1} parent=11 // pred_check
          %p515 = pneg %p88
        $region22: #{tpu_custom_call.1} parent=11 // pred_check_branch
          %517 = sbr.rel (%p515) target = $region24
        $region23: #{tpu_custom_call.1} parent=11 // pred_region
          _
        $region24: #{tpu_custom_call.1} parent=11 // pred_fallthru
          _
        // Predicated region
        $region25: #{tpu_custom_call.1} parent=11 // pred_check
          %p518 = pneg %p109
        $region26: #{tpu_custom_call.1} parent=11 // pred_check_branch
          %520 = sbr.rel (%p518) target = $region28
        $region27: #{tpu_custom_call.1} parent=11 // pred_region
          _
        $region28: #{tpu_custom_call.1} parent=11 // pred_fallthru
          _
      $region12: #{tpu_custom_call.1} parent=5 // pred_fallthru
        _
      %p521 = scmp.lt.s32.totalorder %s25, 2
      // Predicated region
      $region29: #{tpu_custom_call.1} parent=5 // pred_check
        %p522 = pneg %p521
      $region30: #{tpu_custom_call.1} parent=5 // pred_check_branch
        %524 = sbr.rel (%p522) target = $region32
      $region31: #{tpu_custom_call.1} parent=5 // pred_region
        // Predicated region
        $region33: #{tpu_custom_call.1} parent=31 // pred_check
          %p525 = pneg %p129
        $region34: #{tpu_custom_call.1} parent=31 // pred_check_branch
          %527 = sbr.rel (%p525) target = $region36
        $region35: #{tpu_custom_call.1} parent=31 // pred_region
          %p528 = scmp.lt.s32.totalorder %s25, 1
          %s529 = scalar_select %p528, %s25, 1
          %s530 = smul.addr %s529, 48
          %s531 = smul.addr %s530, 4
          %s532 = scalar_lea.vmem %s4, %s531
        $region36: #{tpu_custom_call.1} parent=31 // pred_fallthru
          _
        // Predicated region
        $region37: #{tpu_custom_call.1} parent=31 // pred_check
          %p533 = pneg %p155
        $region38: #{tpu_custom_call.1} parent=31 // pred_check_branch
          %535 = sbr.rel (%p533) target = $region40
        $region39: #{tpu_custom_call.1} parent=31 // pred_region
          %p536 = scmp.lt.s32.totalorder %s25, 1
          %s537 = scalar_select %p536, %s25, 1
          %s538 = smul.addr %s537, 12
          %s539 = scalar_lea.vmem %s5, %s538
        $region40: #{tpu_custom_call.1} parent=31 // pred_fallthru
          _
        // Predicated region
        $region41: #{tpu_custom_call.1} parent=31 // pred_check
          %p540 = pneg %p181
        $region42: #{tpu_custom_call.1} parent=31 // pred_check_branch
          %542 = sbr.rel (%p540) target = $region44
        $region43: #{tpu_custom_call.1} parent=31 // pred_region
          %p543 = scmp.lt.s32.totalorder %s25, 1
          %s544 = scalar_select %p543, %s25, 1
          %s545 = smul.addr %s544, 4
          %s546 = smul.addr %s545, 4
          %s547 = scalar_lea.vmem %s6, %s546
        $region44: #{tpu_custom_call.1} parent=31 // pred_fallthru
          _
        // Predicated region
        $region45: #{tpu_custom_call.1} parent=31 // pred_check
          %p548 = pneg %p207
        $region46: #{tpu_custom_call.1} parent=31 // pred_check_branch
          %550 = sbr.rel (%p548) target = $region48
        $region47: #{tpu_custom_call.1} parent=31 // pred_region
          %p551 = scmp.lt.s32.totalorder %s25, 1
          %s552 = scalar_select %p551, %s25, 1
          %s553 = scalar_lea.vmem %s7, %s552
        $region48: #{tpu_custom_call.1} parent=31 // pred_fallthru
          _
        // Predicated region
        $region49: #{tpu_custom_call.1} parent=31 // pred_check
          %p554 = pneg %p233
        $region50: #{tpu_custom_call.1} parent=31 // pred_check_branch
          %556 = sbr.rel (%p554) target = $region52
        $region51: #{tpu_custom_call.1} parent=31 // pred_region
          %p557 = scmp.lt.s32.totalorder %s25, 1
          %s558 = scalar_select %p557, %s25, 1
          %s559 = smul.addr %s558, 48
          %s560 = smul.addr %s559, 4
          %s561 = scalar_lea.vmem %s8, %s560
        $region52: #{tpu_custom_call.1} parent=31 // pred_fallthru
          _
        // Predicated region
        $region53: #{tpu_custom_call.1} parent=31 // pred_check
          %p562 = pneg %p259
        $region54: #{tpu_custom_call.1} parent=31 // pred_check_branch
          %564 = sbr.rel (%p562) target = $region56
        $region55: #{tpu_custom_call.1} parent=31 // pred_region
          %p565 = scmp.lt.s32.totalorder %s25, 1
          %s566 = scalar_select %p565, %s25, 1
          %s567 = smul.addr %s566, 12
          %s568 = scalar_lea.vmem %s9, %s567
        $region56: #{tpu_custom_call.1} parent=31 // pred_fallthru
          _
        // Predicated region
        $region57: #{tpu_custom_call.1} parent=31 // pred_check
          %p569 = pneg %p285
        $region58: #{tpu_custom_call.1} parent=31 // pred_check_branch
          %571 = sbr.rel (%p569) target = $region60
        $region59: #{tpu_custom_call.1} parent=31 // pred_region
          %p572 = scmp.lt.s32.totalorder %s25, 1
          %s573 = scalar_select %p572, %s25, 1
          %s574 = smul.addr %s573, 4
          %s575 = smul.addr %s574, 4
          %s576 = scalar_lea.vmem %s10, %s575
        $region60: #{tpu_custom_call.1} parent=31 // pred_fallthru
          _
        // Predicated region
        $region61: #{tpu_custom_call.1} parent=31 // pred_check
          %p577 = pneg %p311
        $region62: #{tpu_custom_call.1} parent=31 // pred_check_branch
          %579 = sbr.rel (%p577) target = $region64
        $region63: #{tpu_custom_call.1} parent=31 // pred_region
          %p580 = scmp.lt.s32.totalorder %s25, 1
          %s581 = scalar_select %p580, %s25, 1
          %s582 = scalar_lea.vmem %s11, %s581
        $region64: #{tpu_custom_call.1} parent=31 // pred_fallthru
          _
        // Predicated region
        $region65: #{tpu_custom_call.1} parent=31 // pred_check
          %p583 = pneg %p337
        $region66: #{tpu_custom_call.1} parent=31 // pred_check_branch
          %585 = sbr.rel (%p583) target = $region68
        $region67: #{tpu_custom_call.1} parent=31 // pred_region
          %p586 = scmp.lt.s32.totalorder %s25, 1
          %s587 = scalar_select %p586, %s25, 1
          %s588 = smul.addr %s587, 4
          %s589 = smul.addr %s588, 4
          %s590 = scalar_lea.vmem %s12, %s589
        $region68: #{tpu_custom_call.1} parent=31 // pred_fallthru
          _
        // Predicated region
        $region69: #{tpu_custom_call.1} parent=31 // pred_check
          %p591 = pneg %p363
        $region70: #{tpu_custom_call.1} parent=31 // pred_check_branch
          %593 = sbr.rel (%p591) target = $region72
        $region71: #{tpu_custom_call.1} parent=31 // pred_region
          %p594 = scmp.lt.s32.totalorder %s25, 1
          %s595 = scalar_select %p594, %s25, 1
          %s596 = scalar_lea.vmem %s13, %s595
        $region72: #{tpu_custom_call.1} parent=31 // pred_fallthru
          _
        // Predicated region
        $region73: #{tpu_custom_call.1} parent=31 // pred_check
          %p597 = pneg %p389
        $region74: #{tpu_custom_call.1} parent=31 // pred_check_branch
          %599 = sbr.rel (%p597) target = $region76
        $region75: #{tpu_custom_call.1} parent=31 // pred_region
          %p600 = scmp.lt.s32.totalorder %s25, 1
          %s601 = scalar_select %p600, %s25, 1
          %s602 = smul.addr %s601, 8
          %s603 = smul.addr %s602, 4
          %s604 = scalar_lea.vmem %s14, %s603
        $region76: #{tpu_custom_call.1} parent=31 // pred_fallthru
          _
        // Predicated region
        $region77: #{tpu_custom_call.1} parent=31 // pred_check
          %p605 = pneg %p415
        $region78: #{tpu_custom_call.1} parent=31 // pred_check_branch
          %607 = sbr.rel (%p605) target = $region80
        $region79: #{tpu_custom_call.1} parent=31 // pred_region
          %p608 = scmp.lt.s32.totalorder %s25, 1
          %s609 = scalar_select %p608, %s25, 1
          %s610 = scalar_lea.vmem %s15, %s609
        $region80: #{tpu_custom_call.1} parent=31 // pred_fallthru
          _
        // Predicated region
        $region81: #{tpu_custom_call.1} parent=31 // pred_check
          %p611 = pneg %p441
        $region82: #{tpu_custom_call.1} parent=31 // pred_check_branch
          %613 = sbr.rel (%p611) target = $region84
        $region83: #{tpu_custom_call.1} parent=31 // pred_region
          %p614 = scmp.lt.s32.totalorder %s25, 1
          %s615 = scalar_select %p614, %s25, 1
          %s616 = smul.addr %s615, 3
          %s617 = scalar_lea.vmem %s16, %s616
        $region84: #{tpu_custom_call.1} parent=31 // pred_fallthru
          _
        // Predicated region
        $region85: #{tpu_custom_call.1} parent=31 // pred_check
          %p618 = pneg %p467
        $region86: #{tpu_custom_call.1} parent=31 // pred_check_branch
          %620 = sbr.rel (%p618) target = $region88
        $region87: #{tpu_custom_call.1} parent=31 // pred_region
          %p621 = scmp.lt.s32.totalorder %s25, 1
          %s622 = scalar_select %p621, %s25, 1
          %s623 = smul.addr %s622, 3
          %s624 = scalar_lea.vmem %s17, %s623
        $region88: #{tpu_custom_call.1} parent=31 // pred_fallthru
          _
      $region32: #{tpu_custom_call.1} parent=5 // pred_fallthru
        _
      %p625 = scmp.le.s32.totalorder 1, %s25
      %p626 = scmp.lt.s32.totalorder %s25, 3
      %p627 = pnand %p625, %p626
      %p628 = pneg %p627
      // Predicated region
      $region89: #{tpu_custom_call.1} parent=5 // pred_check
        _
      $region90: #{tpu_custom_call.1} parent=5 // pred_check_branch
        %630 = sbr.rel (%p627) target = $region92
      $region91: #{tpu_custom_call.1} parent=5 // pred_region
        %s631 = ssub.s32 %s25, 1
        %p632 = pneg %p46
        %p633 = pneg %p43
        %p634 = pneg %p67
        %p635 = pneg %p64
        %p636 = pneg %p88
        %p637 = pneg %p85
        %p638 = pneg %p109
        %p639 = pneg %p106
        %p640 = scmp.lt.s32.totalorder %s30, 1
        %s641 = scalar_select %p640, %s30, 1
        %s642 = smul.addr %s641, 48
        %s643 = smul.addr %s642, 4
        %s644 = scalar_lea.vmem %s4, %s643
        %p645 = pneg %p135
        %p646 = pneg %p132
        %p647 = scmp.lt.s32.totalorder %s30, 1
        %s648 = scalar_select %p647, %s30, 1
        %s649 = smul.addr %s648, 12
        %s650 = scalar_lea.vmem %s5, %s649
        %p651 = pneg %p161
        %p652 = pneg %p158
        %p653 = scmp.lt.s32.totalorder %s30, 1
        %s654 = scalar_select %p653, %s30, 1
        %s655 = smul.addr %s654, 4
        %s656 = smul.addr %s655, 4
        %s657 = scalar_lea.vmem %s6, %s656
        %p658 = pneg %p187
        %p659 = pneg %p184
        %p660 = scmp.lt.s32.totalorder %s30, 1
        %s661 = scalar_select %p660, %s30, 1
        %s662 = scalar_lea.vmem %s7, %s661
        %p663 = pneg %p213
        %p664 = pneg %p210
        %p665 = scmp.lt.s32.totalorder %s30, 1
        %s666 = scalar_select %p665, %s30, 1
        %s667 = smul.addr %s666, 48
        %s668 = smul.addr %s667, 4
        %s669 = scalar_lea.vmem %s8, %s668
        %p670 = pneg %p239
        %p671 = pneg %p236
        %p672 = scmp.lt.s32.totalorder %s30, 1
        %s673 = scalar_select %p672, %s30, 1
        %s674 = smul.addr %s673, 12
        %s675 = scalar_lea.vmem %s9, %s674
        %p676 = pneg %p265
        %p677 = pneg %p262
        %p678 = scmp.lt.s32.totalorder %s30, 1
        %s679 = scalar_select %p678, %s30, 1
        %s680 = smul.addr %s679, 4
        %s681 = smul.addr %s680, 4
        %s682 = scalar_lea.vmem %s10, %s681
        %p683 = pneg %p291
        %p684 = pneg %p288
        %p685 = scmp.lt.s32.totalorder %s30, 1
        %s686 = scalar_select %p685, %s30, 1
        %s687 = scalar_lea.vmem %s11, %s686
        %p688 = pneg %p317
        %p689 = pneg %p314
        %p690 = scmp.lt.s32.totalorder %s30, 1
        %s691 = scalar_select %p690, %s30, 1
        %s692 = smul.addr %s691, 4
        %s693 = smul.addr %s692, 4
        %s694 = scalar_lea.vmem %s12, %s693
        %p695 = pneg %p343
        %p696 = pneg %p340
        %p697 = scmp.lt.s32.totalorder %s30, 1
        %s698 = scalar_select %p697, %s30, 1
        %s699 = scalar_lea.vmem %s13, %s698
        %p700 = pneg %p369
        %p701 = pneg %p366
        %p702 = scmp.lt.s32.totalorder %s30, 1
        %s703 = scalar_select %p702, %s30, 1
        %s704 = smul.addr %s703, 8
        %s705 = smul.addr %s704, 4
        %s706 = scalar_lea.vmem %s14, %s705
        %p707 = pneg %p395
        %p708 = pneg %p392
        %p709 = scmp.lt.s32.totalorder %s30, 1
        %s710 = scalar_select %p709, %s30, 1
        %s711 = scalar_lea.vmem %s15, %s710
        %p712 = pneg %p421
        %p713 = pneg %p418
        %p714 = scmp.lt.s32.totalorder %s30, 1
        %s715 = scalar_select %p714, %s30, 1
        %s716 = smul.addr %s715, 3
        %s717 = scalar_lea.vmem %s16, %s716
        %p718 = pneg %p447
        %p719 = pneg %p444
        %p720 = scmp.lt.s32.totalorder %s30, 1
        %s721 = scalar_select %p720, %s30, 1
        %s722 = smul.addr %s721, 3
        %s723 = scalar_lea.vmem %s17, %s722
        %p724 = pneg %p473
        %p725 = pneg %p470
        %p726 = pneg %p494
        %p727 = pneg %p491
        %p728 = scmp.lt.s32.totalorder %s30, 1
        %s729 = scalar_select %p728, %s30, 1
        %s730 = smul.addr %s729, 48
        %s731 = smul.addr %s730, 4
        %s732 = scalar_lea.vmem %s4, %s731
        %p733 = scmp.lt.s32.totalorder %s30, 1
        %s734 = scalar_select %p733, %s30, 1
        %s735 = smul.addr %s734, 12
        %s736 = scalar_lea.vmem %s5, %s735
        %p737 = scmp.lt.s32.totalorder %s30, 1
        %s738 = scalar_select %p737, %s30, 1
        %s739 = smul.addr %s738, 4
        %s740 = smul.addr %s739, 4
        %s741 = scalar_lea.vmem %s6, %s740
        %p742 = scmp.lt.s32.totalorder %s30, 1
        %s743 = scalar_select %p742, %s30, 1
        %s744 = scalar_lea.vmem %s7, %s743
        %p745 = scmp.lt.s32.totalorder %s30, 1
        %s746 = scalar_select %p745, %s30, 1
        %s747 = smul.addr %s746, 48
        %s748 = smul.addr %s747, 4
        %s749 = scalar_lea.vmem %s8, %s748
        %p750 = scmp.lt.s32.totalorder %s30, 1
        %s751 = scalar_select %p750, %s30, 1
        %s752 = smul.addr %s751, 12
        %s753 = scalar_lea.vmem %s9, %s752
        %p754 = scmp.lt.s32.totalorder %s30, 1
        %s755 = scalar_select %p754, %s30, 1
        %s756 = smul.addr %s755, 4
        %s757 = smul.addr %s756, 4
        %s758 = scalar_lea.vmem %s10, %s757
        %p759 = scmp.lt.s32.totalorder %s30, 1
        %s760 = scalar_select %p759, %s30, 1
        %s761 = scalar_lea.vmem %s11, %s760
        %p762 = scmp.lt.s32.totalorder %s30, 1
        %s763 = scalar_select %p762, %s30, 1
        %s764 = smul.addr %s763, 4
        %s765 = smul.addr %s764, 4
        %s766 = scalar_lea.vmem %s12, %s765
        %p767 = scmp.lt.s32.totalorder %s30, 1
        %s768 = scalar_select %p767, %s30, 1
        %s769 = scalar_lea.vmem %s13, %s768
        %p770 = scmp.lt.s32.totalorder %s30, 1
        %s771 = scalar_select %p770, %s30, 1
        %s772 = smul.addr %s771, 8
        %s773 = smul.addr %s772, 4
        %s774 = scalar_lea.vmem %s14, %s773
        %p775 = scmp.lt.s32.totalorder %s30, 1
        %s776 = scalar_select %p775, %s30, 1
        %s777 = scalar_lea.vmem %s15, %s776
        %p778 = scmp.lt.s32.totalorder %s30, 1
        %s779 = scalar_select %p778, %s30, 1
        %s780 = smul.addr %s779, 3
        %s781 = scalar_lea.vmem %s16, %s780
        %p782 = scmp.lt.s32.totalorder %s30, 1
        %s783 = scalar_select %p782, %s30, 1
        %s784 = smul.addr %s783, 3
        %s785 = scalar_lea.vmem %s17, %s784
        %p787 = scmp.eq.s32.totalorder %s30, 0
        // Predicated region
        $region93: #{tpu_custom_call.1} parent=91 // pred_check
          %p788 = pneg %p787
        $region94: #{tpu_custom_call.1} parent=91 // pred_check_branch
          %790 = sbr.rel (%p788) target = $region96
        $region95: #{tpu_custom_call.1} parent=91 // pred_region
          %v791 = vld [vmem:[%s0] sm:$0xff]
          %v792 = vld [vmem:[%s0 + $0x8] sm:$0xff]
          %vm793 = vcmask 261120
          %794 = vst.msk [vmem:[#allocation2] sm:$0xff] %vm793, %v791
          %795 = vst.msk [vmem:[#allocation2 + $0x8] sm:$0xff] %vm793, %v792
        $region96: #{tpu_custom_call.1} parent=91 // pred_fallthru
          _
        %v796 = vld [vmem:[#allocation2] sm:$0xff]
        %v797 = vld [vmem:[#allocation2 + $0x8] sm:$0xff]
        %v798 = vld [vmem:[%s1] sm:$0xf]
        %v799 = vld [vmem:[%s1 + $0x4] sm:$0xf]
        %v800 = vpack.c.bf16 %v797, %v796
        %v801 = vld [vmem:[%s2] sm:$0xff]
        %v802 = vld [vmem:[%s2 + $0x8] sm:$0xff]
        %v803 = vld [vmem:[%s732] sm:$0xf]
        %v804 = vld [vmem:[%s732 + $0x4] sm:$0xf]
        %v805 = vld [vmem:[%s732 + $0x8] sm:$0xf]
        %v806 = vld [vmem:[%s732 + $0xc] sm:$0xf]
        %s807 = scalar_lea.vmem %s732, 64
        %v808 = vld [vmem:[%s807] sm:$0xf]
        %v809 = vld [vmem:[%s807 + $0x4] sm:$0xf]
        %v810 = vld [vmem:[%s807 + $0x8] sm:$0xf]
        %v811 = vld [vmem:[%s807 + $0xc] sm:$0xf]
        %s812 = scalar_lea.vmem %s732, 128
        %v813 = vld [vmem:[%s812] sm:$0xf]
        %v814 = vld [vmem:[%s812 + $0x4] sm:$0xf]
        %v815 = vld [vmem:[%s812 + $0x8] sm:$0xf]
        %v816 = vld [vmem:[%s812 + $0xc] sm:$0xf]
        %v817 = vld [vmem:[%s736] sm:$0x1]
        %s818 = scalar_lea.vmem %s736, 4
        %v819 = vld [vmem:[%s818] sm:$0x1]
        %s820 = scalar_lea.vmem %s736, 8
        %v821 = vld [vmem:[%s820] sm:$0x1]
        %v823 = vlaneseq
        %v824 = vshrl.u32 %v823, 7
        %v825 = vsub.s32 0, %v824
        %v826 = vrot.slane %v817, %v825
        %v832 = vunpack.c.l.b16 %v803
        %v833 = vunpack.c.l.b16 %v804
        %v834 = vunpack.c.l.b16 %v805
        %v835 = vunpack.c.l.b16 %v806
        %v836 = vpack.c.b16 %v833, %v832
        %v837 = vpack.c.b16 %v835, %v834
        %vm840 = vcmask 261120
        %v842 = vsel %vm840, %v800, 0
        %844 = vmatprep.subr.bf16.mxu0 0
        %845 = vmatpush1.bf16.msra.mxu0 %v836
        %846 = vmatprep.subr.bf16.mxu0 0
        %847 = vmatpush1.bf16.msra.mxu0 %v837
        %848 = vmatprep.subr.bf16.mxu0 0
        %849 = vmatpush1.bf16.msra.mxu0 0
        %850 = vmatprep.subr.bf16.mxu0 0
        %851 = vmatpush1.bf16.msra.mxu0 0
        %852 = vmatprep.subr.bf16.mxu0 0
        %853 = vmatpush1.bf16.msra.mxu0 0
        %854 = vmatprep.subr.bf16.mxu0 0
        %855 = vmatpush1.bf16.msra.mxu0 0
        %856 = vmatprep.subr.bf16.mxu0 0
        %857 = vmatpush1.bf16.msra.mxu0 0
        %858 = vmatprep.subr.bf16.mxu0 0
        %859 = vmatpush1.bf16.msra.mxu0 0
        %860 = vmatprep.subr.bf16.mxu0 0
        %861 = vmatpush1.bf16.msra.mxu0 0
        %862 = vmatprep.subr.bf16.mxu0 0
        %863 = vmatpush1.bf16.msra.mxu0 0
        %864 = vmatprep.subr.bf16.mxu0 0
        %865 = vmatpush1.bf16.msra.mxu0 0
        %866 = vmatprep.subr.bf16.mxu0 0
        %867 = vmatpush1.bf16.msra.mxu0 0
        %868 = vmatprep.subr.bf16.mxu0 0
        %869 = vmatpush1.bf16.msra.mxu0 0
        %870 = vmatprep.subr.bf16.mxu0 0
        %871 = vmatpush1.bf16.msra.mxu0 0
        %872 = vmatprep.subr.bf16.mxu0 0
        %873 = vmatpush1.bf16.msra.mxu0 0
        %874 = vmatprep.subr.bf16.mxu0 0
        %875 = vmatpush1.bf16.msra.mxu0 0
        %876 = vmatprep.mubr.bf16.mxu0 0
        %877 = vmatmul.mubr.bf16.gmra.mrb[0].mxu0 %v842
        %v878 = vpop.f32.mrb[0].mxu0
        %v879 = vadd.f32 %v826, %v878
        %v880 = vpop.f32.mrb[0].mxu0
        %v881 = vpop.f32.mrb[0].mxu0
        %v882 = vadd.f32 %v826, %v881
        %v883 = vpop.f32.mrb[0].mxu0
        %884 = vdwg.mxu0
        %v886 = vlaneseq
        %v887 = vshrl.u32 %v886, 7
        %v888 = vsub.s32 0, %v887
        %v889 = vrot.slane %v819, %v888
        %v895 = vunpack.c.l.b16 %v808
        %v896 = vunpack.c.l.b16 %v809
        %v897 = vunpack.c.l.b16 %v810
        %v898 = vunpack.c.l.b16 %v811
        %v899 = vpack.c.b16 %v896, %v895
        %v900 = vpack.c.b16 %v898, %v897
        %903 = vmatprep.subr.bf16.mxu0 0
        %904 = vmatpush1.bf16.msra.mxu0 %v899
        %905 = vmatprep.subr.bf16.mxu0 0
        %906 = vmatpush1.bf16.msra.mxu0 %v900
        %907 = vmatprep.subr.bf16.mxu0 0
        %908 = vmatpush1.bf16.msra.mxu0 0
        %909 = vmatprep.subr.bf16.mxu0 0
        %910 = vmatpush1.bf16.msra.mxu0 0
        %911 = vmatprep.subr.bf16.mxu0 0
        %912 = vmatpush1.bf16.msra.mxu0 0
        %913 = vmatprep.subr.bf16.mxu0 0
        %914 = vmatpush1.bf16.msra.mxu0 0
        %915 = vmatprep.subr.bf16.mxu0 0
        %916 = vmatpush1.bf16.msra.mxu0 0
        %917 = vmatprep.subr.bf16.mxu0 0
        %918 = vmatpush1.bf16.msra.mxu0 0
        %919 = vmatprep.subr.bf16.mxu0 0
        %920 = vmatpush1.bf16.msra.mxu0 0
        %921 = vmatprep.subr.bf16.mxu0 0
        %922 = vmatpush1.bf16.msra.mxu0 0
        %923 = vmatprep.subr.bf16.mxu0 0
        %924 = vmatpush1.bf16.msra.mxu0 0
        %925 = vmatprep.subr.bf16.mxu0 0
        %926 = vmatpush1.bf16.msra.mxu0 0
        %927 = vmatprep.subr.bf16.mxu0 0
        %928 = vmatpush1.bf16.msra.mxu0 0
        %929 = vmatprep.subr.bf16.mxu0 0
        %930 = vmatpush1.bf16.msra.mxu0 0
        %931 = vmatprep.subr.bf16.mxu0 0
        %932 = vmatpush1.bf16.msra.mxu0 0
        %933 = vmatprep.subr.bf16.mxu0 0
        %934 = vmatpush1.bf16.msra.mxu0 0
        %935 = vmatprep.mubr.bf16.mxu0 0
        %936 = vmatmul.mubr.bf16.gmra.mrb[0].mxu0 %v842
        %v937 = vpop.f32.mrb[0].mxu0
        %v938 = vadd.f32 %v889, %v937
        %v939 = vpop.f32.mrb[0].mxu0
        %v940 = vpop.f32.mrb[0].mxu0
        %v941 = vadd.f32 %v889, %v940
        %v942 = vpop.f32.mrb[0].mxu0
        %943 = vdwg.mxu0
        %v945 = vlaneseq
        %v946 = vshrl.u32 %v945, 7
        %v947 = vsub.s32 0, %v946
        %v948 = vrot.slane %v821, %v947
        %v954 = vunpack.c.l.b16 %v813
        %v955 = vunpack.c.l.b16 %v814
        %v956 = vunpack.c.l.b16 %v815
        %v957 = vunpack.c.l.b16 %v816
        %v958 = vpack.c.b16 %v955, %v954
        %v959 = vpack.c.b16 %v957, %v956
        %962 = vmatprep.subr.bf16.mxu0 0
        %963 = vmatpush1.bf16.msra.mxu0 %v958
        %964 = vmatprep.subr.bf16.mxu0 0
        %965 = vmatpush1.bf16.msra.mxu0 %v959
        %966 = vmatprep.subr.bf16.mxu0 0
        %967 = vmatpush1.bf16.msra.mxu0 0
        %968 = vmatprep.subr.bf16.mxu0 0
        %969 = vmatpush1.bf16.msra.mxu0 0
        %970 = vmatprep.subr.bf16.mxu0 0
        %971 = vmatpush1.bf16.msra.mxu0 0
        %972 = vmatprep.subr.bf16.mxu0 0
        %973 = vmatpush1.bf16.msra.mxu0 0
        %974 = vmatprep.subr.bf16.mxu0 0
        %975 = vmatpush1.bf16.msra.mxu0 0
        %976 = vmatprep.subr.bf16.mxu0 0
        %977 = vmatpush1.bf16.msra.mxu0 0
        %978 = vmatprep.subr.bf16.mxu0 0
        %979 = vmatpush1.bf16.msra.mxu0 0
        %980 = vmatprep.subr.bf16.mxu0 0
        %981 = vmatpush1.bf16.msra.mxu0 0
        %982 = vmatprep.subr.bf16.mxu0 0
        %983 = vmatpush1.bf16.msra.mxu0 0
        %984 = vmatprep.subr.bf16.mxu0 0
        %985 = vmatpush1.bf16.msra.mxu0 0
        %986 = vmatprep.subr.bf16.mxu0 0
        %987 = vmatpush1.bf16.msra.mxu0 0
        %988 = vmatprep.subr.bf16.mxu0 0
        %989 = vmatpush1.bf16.msra.mxu0 0
        %990 = vmatprep.subr.bf16.mxu0 0
        %991 = vmatpush1.bf16.msra.mxu0 0
        %992 = vmatprep.subr.bf16.mxu0 0
        %993 = vmatpush1.bf16.msra.mxu0 0
        %994 = vmatprep.mubr.bf16.mxu0 0
        %995 = vmatmul.mubr.bf16.gmra.mrb[0].mxu0 %v842
        %v996 = vpop.f32.mrb[0].mxu0
        %v997 = vadd.f32 %v948, %v996
        %v998 = vpop.f32.mrb[0].mxu0
        %v999 = vpop.f32.mrb[0].mxu0
        %v1000 = vadd.f32 %v948, %v999
        %v1001 = vpop.f32.mrb[0].mxu0
        %1002 = vdwg.mxu0
        %v1003 = vpack.c.bf16 %v882, %v879
        %v1004 = vpack.c.bf16 %v941, %v938
        %vm1005 = vcmask 64512
        %v1007 = vsel %vm1005, %v1003, 0
        %v1010 = vsel %vm1005, %v1004, 0
        %1012 = vmatprep.subr.bf16.mxu0 0
        %1013 = vmatpush1.bf16.xpose.msra.mxu0 %v1010
        %1014 = vmatprep.subr.bf16.mxu0 0
        %1015 = vmatpush1.bf16.xpose.msra.mxu0 0
        %1016 = vmatprep.subr.bf16.mxu0 0
        %1017 = vmatpush1.bf16.xpose.msra.mxu0 0
        %1018 = vmatprep.subr.bf16.mxu0 0
        %1019 = vmatpush1.bf16.xpose.msra.mxu0 0
        %1020 = vmatprep.subr.bf16.mxu0 0
        %1021 = vmatpush1.bf16.xpose.msra.mxu0 0
        %1022 = vmatprep.subr.bf16.mxu0 0
        %1023 = vmatpush1.bf16.xpose.msra.mxu0 0
        %1024 = vmatprep.subr.bf16.mxu0 0
        %1025 = vmatpush1.bf16.xpose.msra.mxu0 0
        %1026 = vmatprep.subr.bf16.mxu0 0
        %1027 = vmatpush1.bf16.xpose.msra.mxu0 0
        %1028 = vmatprep.subr.bf16.mxu0 0
        %1029 = vmatpush1.bf16.xpose.msra.mxu0 0
        %1030 = vmatprep.subr.bf16.mxu0 0
        %1031 = vmatpush1.bf16.xpose.msra.mxu0 0
        %1032 = vmatprep.subr.bf16.mxu0 0
        %1033 = vmatpush1.bf16.xpose.msra.mxu0 0
        %1034 = vmatprep.subr.bf16.mxu0 0
        %1035 = vmatpush1.bf16.xpose.msra.mxu0 0
        %1036 = vmatprep.subr.bf16.mxu0 0
        %1037 = vmatpush1.bf16.xpose.msra.mxu0 0
        %1038 = vmatprep.subr.bf16.mxu0 0
        %1039 = vmatpush1.bf16.xpose.msra.mxu0 0
        %1040 = vmatprep.subr.bf16.mxu0 0
        %1041 = vmatpush1.bf16.xpose.msra.mxu0 0
        %1042 = vmatprep.subr.bf16.mxu0 0
        %1043 = vmatpush1.bf16.xpose.msra.mxu0 0
        %1044 = vmatprep.mubr.bf16.mxu0 0
        %1045 = vmatmul.mubr.bf16.gmra.mrb[0].mxu0 %v1007
        %v1046 = vpop.f32.mrb[0].mxu0
        %v1047 = vadd.f32 0.0, %v1046
        %v1048 = vpop.f32.mrb[0].mxu0
        %v1049 = vpop.f32.mrb[0].mxu0
        %v1050 = vadd.f32 0.0, %v1049
        %v1051 = vpop.f32.mrb[0].mxu0
        %1052 = vdwg.mxu0
        %v1053 = vmul.f32 %v1047, 0.35355338
        %v1054 = vmul.f32 %v1050, 0.35355338
        %v1055 = vadd.f32 %v1053, %v801
        %v1056 = vadd.f32 %v1054, %v802
        %vm1057 = vcmask 130048
        %v1058 = vsel %vm1057, %v1055, -inf
        %1059 = vmax.xlane.f32.xlu0 %v1058
        %v1060 = vpop.xlane.xlu0 %1059
        %v1061 = vsel %vm1057, %v1056, -inf
        %1062 = vmax.xlane.f32.xlu0 %v1061
        %v1063 = vpop.xlane.xlu0 %1062
        %v1064 = vsub.f32 %v1055, %v1060
        %v1065 = vsub.f32 %v1056, %v1063
        %v1066 = vmul.f32 %v1064, 1.442695
        %v1067 = vpow.pop %v1066
        %v1068 = vmul.f32 %v1065, 1.442695
        %v1069 = vpow.pop %v1068
        %v1070 = vsel %vm1057, %v1067, 0.0
        %1071 = vadd.xlane.f32.xlu0 %v1070
        %v1072 = vpop.xlane.xlu0 %1071
        %v1073 = vsel %vm1057, %v1069, 0.0
        %1074 = vadd.xlane.f32.xlu0 %v1073
        %v1075 = vpop.xlane.xlu0 %1074
        %v1076 = vrcp.pop %v1072
        %v1077 = vrcp.pop %v1075
        %v1078 = vmul.f32 %v1067, %v1076
        %v1079 = vmul.f32 %v1069, %v1077
        %v1080 = vpack.c.bf16 %v1079, %v1078
        %v1081 = vpack.c.bf16 %v1000, %v997
        %v1083 = vsel %vm1057, %v1080, 0
        %1085 = vmatprep.subr.bf16.mxu0 0
        %1086 = vmatpush1.bf16.msra.mxu0 %v1081
        %1087 = vmatprep.subr.bf16.mxu0 0
        %1088 = vmatpush1.bf16.msra.mxu0 0
        %1089 = vmatprep.subr.bf16.mxu0 0
        %1090 = vmatpush1.bf16.msra.mxu0 0
        %1091 = vmatprep.subr.bf16.mxu0 0
        %1092 = vmatpush1.bf16.msra.mxu0 0
        %1093 = vmatprep.subr.bf16.mxu0 0
        %1094 = vmatpush1.bf16.msra.mxu0 0
        %1095 = vmatprep.subr.bf16.mxu0 0
        %1096 = vmatpush1.bf16.msra.mxu0 0
        %1097 = vmatprep.subr.bf16.mxu0 0
        %1098 = vmatpush1.bf16.msra.mxu0 0
        %1099 = vmatprep.subr.bf16.mxu0 0
        %1100 = vmatpush1.bf16.msra.mxu0 0
        %1101 = vmatprep.subr.bf16.mxu0 0
        %1102 = vmatpush1.bf16.msra.mxu0 0
        %1103 = vmatprep.subr.bf16.mxu0 0
        %1104 = vmatpush1.bf16.msra.mxu0 0
        %1105 = vmatprep.subr.bf16.mxu0 0
        %1106 = vmatpush1.bf16.msra.mxu0 0
        %1107 = vmatprep.subr.bf16.mxu0 0
        %1108 = vmatpush1.bf16.msra.mxu0 0
        %1109 = vmatprep.subr.bf16.mxu0 0
        %1110 = vmatpush1.bf16.msra.mxu0 0
        %1111 = vmatprep.subr.bf16.mxu0 0
        %1112 = vmatpush1.bf16.msra.mxu0 0
        %1113 = vmatprep.subr.bf16.mxu0 0
        %1114 = vmatpush1.bf16.msra.mxu0 0
        %1115 = vmatprep.subr.bf16.mxu0 0
        %1116 = vmatpush1.bf16.msra.mxu0 0
        %1117 = vmatprep.mubr.bf16.mxu0 0
        %1118 = vmatmul.mubr.bf16.gmra.mrb[0].mxu0 %v1083
        %v1119 = vpop.f32.mrb[0].mxu0
        %v1120 = vadd.f32 0.0, %v1119
        %v1121 = vpop.f32.mrb[0].mxu0
        %v1122 = vpop.f32.mrb[0].mxu0
        %v1123 = vadd.f32 0.0, %v1122
        %v1124 = vpop.f32.mrb[0].mxu0
        %1125 = vdwg.mxu0
        %v1126 = vpack.c.bf16 %v1123, %v1120
        %v1127 = vld [vmem:[%s741] sm:$0xf]
        %s1128 = scalar_lea.vmem %s732, 16
        %v1129 = vld [vmem:[%s1128] sm:$0xf]
        %v1130 = vld [vmem:[%s1128 + $0x4] sm:$0xf]
        %v1131 = vld [vmem:[%s1128 + $0x8] sm:$0xf]
        %v1132 = vld [vmem:[%s1128 + $0xc] sm:$0xf]
        %s1133 = scalar_lea.vmem %s732, 80
        %v1134 = vld [vmem:[%s1133] sm:$0xf]
        %v1135 = vld [vmem:[%s1133 + $0x4] sm:$0xf]
        %v1136 = vld [vmem:[%s1133 + $0x8] sm:$0xf]
        %v1137 = vld [vmem:[%s1133 + $0xc] sm:$0xf]
        %s1138 = scalar_lea.vmem %s732, 144
        %v1139 = vld [vmem:[%s1138] sm:$0xf]
        %v1140 = vld [vmem:[%s1138 + $0x4] sm:$0xf]
        %v1141 = vld [vmem:[%s1138 + $0x8] sm:$0xf]
        %v1142 = vld [vmem:[%s1138 + $0xc] sm:$0xf]
        %s1143 = scalar_lea.vmem %s736, 1
        %v1144 = vld [vmem:[%s1143] sm:$0x1]
        %s1145 = scalar_lea.vmem %s736, 5
        %v1146 = vld [vmem:[%s1145] sm:$0x1]
        %s1147 = scalar_lea.vmem %s736, 9
        %v1148 = vld [vmem:[%s1147] sm:$0x1]
        %v1150 = vlaneseq
        %v1151 = vshrl.u32 %v1150, 7
        %v1152 = vsub.s32 0, %v1151
        %v1153 = vrot.slane %v1144, %v1152
        %v1159 = vunpack.c.l.b16 %v1129
        %v1160 = vunpack.c.l.b16 %v1130
        %v1161 = vunpack.c.l.b16 %v1131
        %v1162 = vunpack.c.l.b16 %v1132
        %v1163 = vpack.c.b16 %v1160, %v1159
        %v1164 = vpack.c.b16 %v1162, %v1161
        %1167 = vmatprep.subr.bf16.mxu0 0
        %1168 = vmatpush1.bf16.msra.mxu0 %v1163
        %1169 = vmatprep.subr.bf16.mxu0 0
        %1170 = vmatpush1.bf16.msra.mxu0 %v1164
        %1171 = vmatprep.subr.bf16.mxu0 0
        %1172 = vmatpush1.bf16.msra.mxu0 0
        %1173 = vmatprep.subr.bf16.mxu0 0
        %1174 = vmatpush1.bf16.msra.mxu0 0
        %1175 = vmatprep.subr.bf16.mxu0 0
        %1176 = vmatpush1.bf16.msra.mxu0 0
        %1177 = vmatprep.subr.bf16.mxu0 0
        %1178 = vmatpush1.bf16.msra.mxu0 0
        %1179 = vmatprep.subr.bf16.mxu0 0
        %1180 = vmatpush1.bf16.msra.mxu0 0
        %1181 = vmatprep.subr.bf16.mxu0 0
        %1182 = vmatpush1.bf16.msra.mxu0 0
        %1183 = vmatprep.subr.bf16.mxu0 0
        %1184 = vmatpush1.bf16.msra.mxu0 0
        %1185 = vmatprep.subr.bf16.mxu0 0
        %1186 = vmatpush1.bf16.msra.mxu0 0
        %1187 = vmatprep.subr.bf16.mxu0 0
        %1188 = vmatpush1.bf16.msra.mxu0 0
        %1189 = vmatprep.subr.bf16.mxu0 0
        %1190 = vmatpush1.bf16.msra.mxu0 0
        %1191 = vmatprep.subr.bf16.mxu0 0
        %1192 = vmatpush1.bf16.msra.mxu0 0
        %1193 = vmatprep.subr.bf16.mxu0 0
        %1194 = vmatpush1.bf16.msra.mxu0 0
        %1195 = vmatprep.subr.bf16.mxu0 0
        %1196 = vmatpush1.bf16.msra.mxu0 0
        %1197 = vmatprep.subr.bf16.mxu0 0
        %1198 = vmatpush1.bf16.msra.mxu0 0
        %1199 = vmatprep.mubr.bf16.mxu0 0
        %1200 = vmatmul.mubr.bf16.gmra.mrb[0].mxu0 %v842
        %v1201 = vpop.f32.mrb[0].mxu0
        %v1202 = vadd.f32 %v1153, %v1201
        %v1203 = vpop.f32.mrb[0].mxu0
        %v1204 = vpop.f32.mrb[0].mxu0
        %v1205 = vadd.f32 %v1153, %v1204
        %v1206 = vpop.f32.mrb[0].mxu0
        %1207 = vdwg.mxu0
        %v1209 = vlaneseq
        %v1210 = vshrl.u32 %v1209, 7
        %v1211 = vsub.s32 0, %v1210
        %v1212 = vrot.slane %v1146, %v1211
        %v1218 = vunpack.c.l.b16 %v1134
        %v1219 = vunpack.c.l.b16 %v1135
        %v1220 = vunpack.c.l.b16 %v1136
        %v1221 = vunpack.c.l.b16 %v1137
        %v1222 = vpack.c.b16 %v1219, %v1218
        %v1223 = vpack.c.b16 %v1221, %v1220
        %1226 = vmatprep.subr.bf16.mxu0 0
        %1227 = vmatpush1.bf16.msra.mxu0 %v1222
        %1228 = vmatprep.subr.bf16.mxu0 0
        %1229 = vmatpush1.bf16.msra.mxu0 %v1223
        %1230 = vmatprep.subr.bf16.mxu0 0
        %1231 = vmatpush1.bf16.msra.mxu0 0
        %1232 = vmatprep.subr.bf16.mxu0 0
        %1233 = vmatpush1.bf16.msra.mxu0 0
        %1234 = vmatprep.subr.bf16.mxu0 0
        %1235 = vmatpush1.bf16.msra.mxu0 0
        %1236 = vmatprep.subr.bf16.mxu0 0
        %1237 = vmatpush1.bf16.msra.mxu0 0
        %1238 = vmatprep.subr.bf16.mxu0 0
        %1239 = vmatpush1.bf16.msra.mxu0 0
        %1240 = vmatprep.subr.bf16.mxu0 0
        %1241 = vmatpush1.bf16.msra.mxu0 0
        %1242 = vmatprep.subr.bf16.mxu0 0
        %1243 = vmatpush1.bf16.msra.mxu0 0
        %1244 = vmatprep.subr.bf16.mxu0 0
        %1245 = vmatpush1.bf16.msra.mxu0 0
        %1246 = vmatprep.subr.bf16.mxu0 0
        %1247 = vmatpush1.bf16.msra.mxu0 0
        %1248 = vmatprep.subr.bf16.mxu0 0
        %1249 = vmatpush1.bf16.msra.mxu0 0
        %1250 = vmatprep.subr.bf16.mxu0 0
        %1251 = vmatpush1.bf16.msra.mxu0 0
        %1252 = vmatprep.subr.bf16.mxu0 0
        %1253 = vmatpush1.bf16.msra.mxu0 0
        %1254 = vmatprep.subr.bf16.mxu0 0
        %1255 = vmatpush1.bf16.msra.mxu0 0
        %1256 = vmatprep.subr.bf16.mxu0 0
        %1257 = vmatpush1.bf16.msra.mxu0 0
        %1258 = vmatprep.mubr.bf16.mxu0 0
        %1259 = vmatmul.mubr.bf16.gmra.mrb[0].mxu0 %v842
        %v1260 = vpop.f32.mrb[0].mxu0
        %v1261 = vadd.f32 %v1212, %v1260
        %v1262 = vpop.f32.mrb[0].mxu0
        %v1263 = vpop.f32.mrb[0].mxu0
        %v1264 = vadd.f32 %v1212, %v1263
        %v1265 = vpop.f32.mrb[0].mxu0
        %1266 = vdwg.mxu0
        %v1268 = vlaneseq
        %v1269 = vshrl.u32 %v1268, 7
        %v1270 = vsub.s32 0, %v1269
        %v1271 = vrot.slane %v1148, %v1270
        %v1277 = vunpack.c.l.b16 %v1139
        %v1278 = vunpack.c.l.b16 %v1140
        %v1279 = vunpack.c.l.b16 %v1141
        %v1280 = vunpack.c.l.b16 %v1142
        %v1281 = vpack.c.b16 %v1278, %v1277
        %v1282 = vpack.c.b16 %v1280, %v1279
        %1285 = vmatprep.subr.bf16.mxu0 0
        %1286 = vmatpush1.bf16.msra.mxu0 %v1281
        %1287 = vmatprep.subr.bf16.mxu0 0
        %1288 = vmatpush1.bf16.msra.mxu0 %v1282
        %1289 = vmatprep.subr.bf16.mxu0 0
        %1290 = vmatpush1.bf16.msra.mxu0 0
        %1291 = vmatprep.subr.bf16.mxu0 0
        %1292 = vmatpush1.bf16.msra.mxu0 0
        %1293 = vmatprep.subr.bf16.mxu0 0
        %1294 = vmatpush1.bf16.msra.mxu0 0
        %1295 = vmatprep.subr.bf16.mxu0 0
        %1296 = vmatpush1.bf16.msra.mxu0 0
        %1297 = vmatprep.subr.bf16.mxu0 0
        %1298 = vmatpush1.bf16.msra.mxu0 0
        %1299 = vmatprep.subr.bf16.mxu0 0
        %1300 = vmatpush1.bf16.msra.mxu0 0
        %1301 = vmatprep.subr.bf16.mxu0 0
        %1302 = vmatpush1.bf16.msra.mxu0 0
        %1303 = vmatprep.subr.bf16.mxu0 0
        %1304 = vmatpush1.bf16.msra.mxu0 0
        %1305 = vmatprep.subr.bf16.mxu0 0
        %1306 = vmatpush1.bf16.msra.mxu0 0
        %1307 = vmatprep.subr.bf16.mxu0 0
        %1308 = vmatpush1.bf16.msra.mxu0 0
        %1309 = vmatprep.subr.bf16.mxu0 0
        %1310 = vmatpush1.bf16.msra.mxu0 0
        %1311 = vmatprep.subr.bf16.mxu0 0
        %1312 = vmatpush1.bf16.msra.mxu0 0
        %1313 = vmatprep.subr.bf16.mxu0 0
        %1314 = vmatpush1.bf16.msra.mxu0 0
        %1315 = vmatprep.subr.bf16.mxu0 0
        %1316 = vmatpush1.bf16.msra.mxu0 0
        %1317 = vmatprep.mubr.bf16.mxu0 0
        %1318 = vmatmul.mubr.bf16.gmra.mrb[0].mxu0 %v842
        %v1319 = vpop.f32.mrb[0].mxu0
        %v1320 = vadd.f32 %v1271, %v1319
        %v1321 = vpop.f32.mrb[0].mxu0
        %v1322 = vpop.f32.mrb[0].mxu0
        %v1323 = vadd.f32 %v1271, %v1322
        %v1324 = vpop.f32.mrb[0].mxu0
        %1325 = vdwg.mxu0
        %v1326 = vpack.c.bf16 %v1205, %v1202
        %v1327 = vpack.c.bf16 %v1264, %v1261
        %v1329 = vsel %vm1005, %v1326, 0
        %v1332 = vsel %vm1005, %v1327, 0
        %1334 = vmatprep.subr.bf16.mxu0 0
        %1335 = vmatpush1.bf16.xpose.msra.mxu0 %v1332
        %1336 = vmatprep.subr.bf16.mxu0 0
        %1337 = vmatpush1.bf16.xpose.msra.mxu0 0
        %1338 = vmatprep.subr.bf16.mxu0 0
        %1339 = vmatpush1.bf16.xpose.msra.mxu0 0
        %1340 = vmatprep.subr.bf16.mxu0 0
        %1341 = vmatpush1.bf16.xpose.msra.mxu0 0
        %1342 = vmatprep.subr.bf16.mxu0 0
        %1343 = vmatpush1.bf16.xpose.msra.mxu0 0
        %1344 = vmatprep.subr.bf16.mxu0 0
        %1345 = vmatpush1.bf16.xpose.msra.mxu0 0
        %1346 = vmatprep.subr.bf16.mxu0 0
        %1347 = vmatpush1.bf16.xpose.msra.mxu0 0
        %1348 = vmatprep.subr.bf16.mxu0 0
        %1349 = vmatpush1.bf16.xpose.msra.mxu0 0
        %1350 = vmatprep.subr.bf16.mxu0 0
        %1351 = vmatpush1.bf16.xpose.msra.mxu0 0
        %1352 = vmatprep.subr.bf16.mxu0 0
        %1353 = vmatpush1.bf16.xpose.msra.mxu0 0
        %1354 = vmatprep.subr.bf16.mxu0 0
        %1355 = vmatpush1.bf16.xpose.msra.mxu0 0
        %1356 = vmatprep.subr.bf16.mxu0 0
        %1357 = vmatpush1.bf16.xpose.msra.mxu0 0
        %1358 = vmatprep.subr.bf16.mxu0 0
        %1359 = vmatpush1.bf16.xpose.msra.mxu0 0
        %1360 = vmatprep.subr.bf16.mxu0 0
        %1361 = vmatpush1.bf16.xpose.msra.mxu0 0
        %1362 = vmatprep.subr.bf16.mxu0 0
        %1363 = vmatpush1.bf16.xpose.msra.mxu0 0
        %1364 = vmatprep.subr.bf16.mxu0 0
        %1365 = vmatpush1.bf16.xpose.msra.mxu0 0
        %1366 = vmatprep.mubr.bf16.mxu0 0
        %1367 = vmatmul.mubr.bf16.gmra.mrb[0].mxu0 %v1329
        %v1368 = vpop.f32.mrb[0].mxu0
        %v1369 = vadd.f32 0.0, %v1368
        %v1370 = vpop.f32.mrb[0].mxu0
        %v1371 = vpop.f32.mrb[0].mxu0
        %v1372 = vadd.f32 0.0, %v1371
        %v1373 = vpop.f32.mrb[0].mxu0
        %1374 = vdwg.mxu0
        %v1375 = vmul.f32 %v1369, 0.35355338
        %v1376 = vmul.f32 %v1372, 0.35355338
        %v1377 = vadd.f32 %v1375, %v801
        %v1378 = vadd.f32 %v1376, %v802
        %v1379 = vsel %vm1057, %v1377, -inf
        %1380 = vmax.xlane.f32.xlu0 %v1379
        %v1381 = vpop.xlane.xlu0 %1380
        %v1382 = vsel %vm1057, %v1378, -inf
        %1383 = vmax.xlane.f32.xlu0 %v1382
        %v1384 = vpop.xlane.xlu0 %1383
        %v1385 = vsub.f32 %v1377, %v1381
        %v1386 = vsub.f32 %v1378, %v1384
        %v1387 = vmul.f32 %v1385, 1.442695
        %v1388 = vpow.pop %v1387
        %v1389 = vmul.f32 %v1386, 1.442695
        %v1390 = vpow.pop %v1389
        %v1391 = vsel %vm1057, %v1388, 0.0
        %1392 = vadd.xlane.f32.xlu0 %v1391
        %v1393 = vpop.xlane.xlu0 %1392
        %v1394 = vsel %vm1057, %v1390, 0.0
        %1395 = vadd.xlane.f32.xlu0 %v1394
        %v1396 = vpop.xlane.xlu0 %1395
        %v1397 = vrcp.pop %v1393
        %v1398 = vrcp.pop %v1396
        %v1399 = vmul.f32 %v1388, %v1397
        %v1400 = vmul.f32 %v1390, %v1398
        %v1401 = vpack.c.bf16 %v1400, %v1399
        %v1402 = vpack.c.bf16 %v1323, %v1320
        %v1404 = vsel %vm1057, %v1401, 0
        %1406 = vmatprep.subr.bf16.mxu0 0
        %1407 = vmatpush1.bf16.msra.mxu0 %v1402
        %1408 = vmatprep.subr.bf16.mxu0 0
        %1409 = vmatpush1.bf16.msra.mxu0 0
        %1410 = vmatprep.subr.bf16.mxu0 0
        %1411 = vmatpush1.bf16.msra.mxu0 0
        %1412 = vmatprep.subr.bf16.mxu0 0
        %1413 = vmatpush1.bf16.msra.mxu0 0
        %1414 = vmatprep.subr.bf16.mxu0 0
        %1415 = vmatpush1.bf16.msra.mxu0 0
        %1416 = vmatprep.subr.bf16.mxu0 0
        %1417 = vmatpush1.bf16.msra.mxu0 0
        %1418 = vmatprep.subr.bf16.mxu0 0
        %1419 = vmatpush1.bf16.msra.mxu0 0
        %1420 = vmatprep.subr.bf16.mxu0 0
        %1421 = vmatpush1.bf16.msra.mxu0 0
        %1422 = vmatprep.subr.bf16.mxu0 0
        %1423 = vmatpush1.bf16.msra.mxu0 0
        %1424 = vmatprep.subr.bf16.mxu0 0
        %1425 = vmatpush1.bf16.msra.mxu0 0
        %1426 = vmatprep.subr.bf16.mxu0 0
        %1427 = vmatpush1.bf16.msra.mxu0 0
        %1428 = vmatprep.subr.bf16.mxu0 0
        %1429 = vmatpush1.bf16.msra.mxu0 0
        %1430 = vmatprep.subr.bf16.mxu0 0
        %1431 = vmatpush1.bf16.msra.mxu0 0
        %1432 = vmatprep.subr.bf16.mxu0 0
        %1433 = vmatpush1.bf16.msra.mxu0 0
        %1434 = vmatprep.subr.bf16.mxu0 0
        %1435 = vmatpush1.bf16.msra.mxu0 0
        %1436 = vmatprep.subr.bf16.mxu0 0
        %1437 = vmatpush1.bf16.msra.mxu0 0
        %1438 = vmatprep.mubr.bf16.mxu0 0
        %1439 = vmatmul.mubr.bf16.gmra.mrb[0].mxu0 %v1404
        %v1440 = vpop.f32.mrb[0].mxu0
        %v1441 = vadd.f32 0.0, %v1440
        %v1442 = vpop.f32.mrb[0].mxu0
        %v1443 = vpop.f32.mrb[0].mxu0
        %v1444 = vadd.f32 0.0, %v1443
        %v1445 = vpop.f32.mrb[0].mxu0
        %1446 = vdwg.mxu0
        %v1447 = vpack.c.bf16 %v1444, %v1441
        %s1448 = scalar_lea.vmem %s741, 4
        %v1449 = vld [vmem:[%s1448] sm:$0xf]
        %v1451 = vsel %vm1005, %v1447, 0
        %vm1453 = vcmask 1043456
        %v1455 = vsel %vm1453, %v1449, 0
        %1457 = vmatprep.subr.bf16.mxu0 0
        %1458 = vmatpush1.bf16.msra.mxu0 %v1455
        %1459 = vmatprep.subr.bf16.mxu0 0
        %1460 = vmatpush1.bf16.msra.mxu0 0
        %1461 = vmatprep.subr.bf16.mxu0 0
        %1462 = vmatpush1.bf16.msra.mxu0 0
        %1463 = vmatprep.subr.bf16.mxu0 0
        %1464 = vmatpush1.bf16.msra.mxu0 0
        %1465 = vmatprep.subr.bf16.mxu0 0
        %1466 = vmatpush1.bf16.msra.mxu0 0
        %1467 = vmatprep.subr.bf16.mxu0 0
        %1468 = vmatpush1.bf16.msra.mxu0 0
        %1469 = vmatprep.subr.bf16.mxu0 0
        %1470 = vmatpush1.bf16.msra.mxu0 0
        %1471 = vmatprep.subr.bf16.mxu0 0
        %1472 = vmatpush1.bf16.msra.mxu0 0
        %1473 = vmatprep.subr.bf16.mxu0 0
        %1474 = vmatpush1.bf16.msra.mxu0 0
        %1475 = vmatprep.subr.bf16.mxu0 0
        %1476 = vmatpush1.bf16.msra.mxu0 0
        %1477 = vmatprep.subr.bf16.mxu0 0
        %1478 = vmatpush1.bf16.msra.mxu0 0
        %1479 = vmatprep.subr.bf16.mxu0 0
        %1480 = vmatpush1.bf16.msra.mxu0 0
        %1481 = vmatprep.subr.bf16.mxu0 0
        %1482 = vmatpush1.bf16.msra.mxu0 0
        %1483 = vmatprep.subr.bf16.mxu0 0
        %1484 = vmatpush1.bf16.msra.mxu0 0
        %1485 = vmatprep.subr.bf16.mxu0 0
        %1486 = vmatpush1.bf16.msra.mxu0 0
        %1487 = vmatprep.subr.bf16.mxu0 0
        %1488 = vmatpush1.bf16.msra.mxu0 0
        %1489 = vmatprep.mubr.bf16.mxu0 0
        %1490 = vmatmul.mubr.bf16.gmra.mrb[0].mxu0 %v1451
        %v1491 = vpop.f32.mrb[0].mxu0
        %v1492 = vadd.f32 0.0, %v1491
        %v1493 = vpop.f32.mrb[0].mxu0
        %v1494 = vpop.f32.mrb[0].mxu0
        %v1495 = vadd.f32 0.0, %v1494
        %v1496 = vpop.f32.mrb[0].mxu0
        %1497 = vdwg.mxu0
        %v1499 = vsel %vm1005, %v1126, 0
        %v1502 = vsel %vm1453, %v1127, 0
        %1504 = vmatprep.subr.bf16.mxu0 0
        %1505 = vmatpush1.bf16.msra.mxu0 %v1502
        %1506 = vmatprep.subr.bf16.mxu0 0
        %1507 = vmatpush1.bf16.msra.mxu0 0
        %1508 = vmatprep.subr.bf16.mxu0 0
        %1509 = vmatpush1.bf16.msra.mxu0 0
        %1510 = vmatprep.subr.bf16.mxu0 0
        %1511 = vmatpush1.bf16.msra.mxu0 0
        %1512 = vmatprep.subr.bf16.mxu0 0
        %1513 = vmatpush1.bf16.msra.mxu0 0
        %1514 = vmatprep.subr.bf16.mxu0 0
        %1515 = vmatpush1.bf16.msra.mxu0 0
        %1516 = vmatprep.subr.bf16.mxu0 0
        %1517 = vmatpush1.bf16.msra.mxu0 0
        %1518 = vmatprep.subr.bf16.mxu0 0
        %1519 = vmatpush1.bf16.msra.mxu0 0
        %1520 = vmatprep.subr.bf16.mxu0 0
        %1521 = vmatpush1.bf16.msra.mxu0 0
        %1522 = vmatprep.subr.bf16.mxu0 0
        %1523 = vmatpush1.bf16.msra.mxu0 0
        %1524 = vmatprep.subr.bf16.mxu0 0
        %1525 = vmatpush1.bf16.msra.mxu0 0
        %1526 = vmatprep.subr.bf16.mxu0 0
        %1527 = vmatpush1.bf16.msra.mxu0 0
        %1528 = vmatprep.subr.bf16.mxu0 0
        %1529 = vmatpush1.bf16.msra.mxu0 0
        %1530 = vmatprep.subr.bf16.mxu0 0
        %1531 = vmatpush1.bf16.msra.mxu0 0
        %1532 = vmatprep.subr.bf16.mxu0 0
        %1533 = vmatpush1.bf16.msra.mxu0 0
        %1534 = vmatprep.subr.bf16.mxu0 0
        %1535 = vmatpush1.bf16.msra.mxu0 0
        %1536 = vmatprep.mubr.bf16.mxu0 0
        %1537 = vmatmul.mubr.bf16.gmra.mrb[0].mxu0 %v1499
        %v1538 = vpop.f32.mrb[0].mxu0
        %v1539 = vadd.f32 %v1492, %v1538
        %v1540 = vpop.f32.mrb[0].mxu0
        %v1541 = vpop.f32.mrb[0].mxu0
        %v1542 = vadd.f32 %v1495, %v1541
        %v1543 = vpop.f32.mrb[0].mxu0
        %1544 = vdwg.mxu0
        %s1545 = scalar_lea.vmem %s732, 32
        %v1546 = vld [vmem:[%s1545] sm:$0xf]
        %v1547 = vld [vmem:[%s1545 + $0x4] sm:$0xf]
        %v1548 = vld [vmem:[%s1545 + $0x8] sm:$0xf]
        %v1549 = vld [vmem:[%s1545 + $0xc] sm:$0xf]
        %s1550 = scalar_lea.vmem %s732, 96
        %v1551 = vld [vmem:[%s1550] sm:$0xf]
        %v1552 = vld [vmem:[%s1550 + $0x4] sm:$0xf]
        %v1553 = vld [vmem:[%s1550 + $0x8] sm:$0xf]
        %v1554 = vld [vmem:[%s1550 + $0xc] sm:$0xf]
        %s1555 = scalar_lea.vmem %s732, 160
        %v1556 = vld [vmem:[%s1555] sm:$0xf]
        %v1557 = vld [vmem:[%s1555 + $0x4] sm:$0xf]
        %v1558 = vld [vmem:[%s1555 + $0x8] sm:$0xf]
        %v1559 = vld [vmem:[%s1555 + $0xc] sm:$0xf]
        %s1560 = scalar_lea.vmem %s736, 2
        %v1561 = vld [vmem:[%s1560] sm:$0x1]
        %s1562 = scalar_lea.vmem %s736, 6
        %v1563 = vld [vmem:[%s1562] sm:$0x1]
        %s1564 = scalar_lea.vmem %s736, 10
        %v1565 = vld [vmem:[%s1564] sm:$0x1]
        %v1567 = vlaneseq
        %v1568 = vshrl.u32 %v1567, 7
        %v1569 = vsub.s32 0, %v1568
        %v1570 = vrot.slane %v1561, %v1569
        %v1576 = vunpack.c.l.b16 %v1546
        %v1577 = vunpack.c.l.b16 %v1547
        %v1578 = vunpack.c.l.b16 %v1548
        %v1579 = vunpack.c.l.b16 %v1549
        %v1580 = vpack.c.b16 %v1577, %v1576
        %v1581 = vpack.c.b16 %v1579, %v1578
        %1584 = vmatprep.subr.bf16.mxu0 0
        %1585 = vmatpush1.bf16.msra.mxu0 %v1580
        %1586 = vmatprep.subr.bf16.mxu0 0
        %1587 = vmatpush1.bf16.msra.mxu0 %v1581
        %1588 = vmatprep.subr.bf16.mxu0 0
        %1589 = vmatpush1.bf16.msra.mxu0 0
        %1590 = vmatprep.subr.bf16.mxu0 0
        %1591 = vmatpush1.bf16.msra.mxu0 0
        %1592 = vmatprep.subr.bf16.mxu0 0
        %1593 = vmatpush1.bf16.msra.mxu0 0
        %1594 = vmatprep.subr.bf16.mxu0 0
        %1595 = vmatpush1.bf16.msra.mxu0 0
        %1596 = vmatprep.subr.bf16.mxu0 0
        %1597 = vmatpush1.bf16.msra.mxu0 0
        %1598 = vmatprep.subr.bf16.mxu0 0
        %1599 = vmatpush1.bf16.msra.mxu0 0
        %1600 = vmatprep.subr.bf16.mxu0 0
        %1601 = vmatpush1.bf16.msra.mxu0 0
        %1602 = vmatprep.subr.bf16.mxu0 0
        %1603 = vmatpush1.bf16.msra.mxu0 0
        %1604 = vmatprep.subr.bf16.mxu0 0
        %1605 = vmatpush1.bf16.msra.mxu0 0
        %1606 = vmatprep.subr.bf16.mxu0 0
        %1607 = vmatpush1.bf16.msra.mxu0 0
        %1608 = vmatprep.subr.bf16.mxu0 0
        %1609 = vmatpush1.bf16.msra.mxu0 0
        %1610 = vmatprep.subr.bf16.mxu0 0
        %1611 = vmatpush1.bf16.msra.mxu0 0
        %1612 = vmatprep.subr.bf16.mxu0 0
        %1613 = vmatpush1.bf16.msra.mxu0 0
        %1614 = vmatprep.subr.bf16.mxu0 0
        %1615 = vmatpush1.bf16.msra.mxu0 0
        %1616 = vmatprep.mubr.bf16.mxu0 0
        %1617 = vmatmul.mubr.bf16.gmra.mrb[0].mxu0 %v842
        %v1618 = vpop.f32.mrb[0].mxu0
        %v1619 = vadd.f32 %v1570, %v1618
        %v1620 = vpop.f32.mrb[0].mxu0
        %v1621 = vpop.f32.mrb[0].mxu0
        %v1622 = vadd.f32 %v1570, %v1621
        %v1623 = vpop.f32.mrb[0].mxu0
        %1624 = vdwg.mxu0
        %v1626 = vlaneseq
        %v1627 = vshrl.u32 %v1626, 7
        %v1628 = vsub.s32 0, %v1627
        %v1629 = vrot.slane %v1563, %v1628
        %v1635 = vunpack.c.l.b16 %v1551
        %v1636 = vunpack.c.l.b16 %v1552
        %v1637 = vunpack.c.l.b16 %v1553
        %v1638 = vunpack.c.l.b16 %v1554
        %v1639 = vpack.c.b16 %v1636, %v1635
        %v1640 = vpack.c.b16 %v1638, %v1637
        %1643 = vmatprep.subr.bf16.mxu0 0
        %1644 = vmatpush1.bf16.msra.mxu0 %v1639
        %1645 = vmatprep.subr.bf16.mxu0 0
        %1646 = vmatpush1.bf16.msra.mxu0 %v1640
        %1647 = vmatprep.subr.bf16.mxu0 0
        %1648 = vmatpush1.bf16.msra.mxu0 0
        %1649 = vmatprep.subr.bf16.mxu0 0
        %1650 = vmatpush1.bf16.msra.mxu0 0
        %1651 = vmatprep.subr.bf16.mxu0 0
        %1652 = vmatpush1.bf16.msra.mxu0 0
        %1653 = vmatprep.subr.bf16.mxu0 0
        %1654 = vmatpush1.bf16.msra.mxu0 0
        %1655 = vmatprep.subr.bf16.mxu0 0
        %1656 = vmatpush1.bf16.msra.mxu0 0
        %1657 = vmatprep.subr.bf16.mxu0 0
        %1658 = vmatpush1.bf16.msra.mxu0 0
        %1659 = vmatprep.subr.bf16.mxu0 0
        %1660 = vmatpush1.bf16.msra.mxu0 0
        %1661 = vmatprep.subr.bf16.mxu0 0
        %1662 = vmatpush1.bf16.msra.mxu0 0
        %1663 = vmatprep.subr.bf16.mxu0 0
        %1664 = vmatpush1.bf16.msra.mxu0 0
        %1665 = vmatprep.subr.bf16.mxu0 0
        %1666 = vmatpush1.bf16.msra.mxu0 0
        %1667 = vmatprep.subr.bf16.mxu0 0
        %1668 = vmatpush1.bf16.msra.mxu0 0
        %1669 = vmatprep.subr.bf16.mxu0 0
        %1670 = vmatpush1.bf16.msra.mxu0 0
        %1671 = vmatprep.subr.bf16.mxu0 0
        %1672 = vmatpush1.bf16.msra.mxu0 0
        %1673 = vmatprep.subr.bf16.mxu0 0
        %1674 = vmatpush1.bf16.msra.mxu0 0
        %1675 = vmatprep.mubr.bf16.mxu0 0
        %1676 = vmatmul.mubr.bf16.gmra.mrb[0].mxu0 %v842
        %v1677 = vpop.f32.mrb[0].mxu0
        %v1678 = vadd.f32 %v1629, %v1677
        %v1679 = vpop.f32.mrb[0].mxu0
        %v1680 = vpop.f32.mrb[0].mxu0
        %v1681 = vadd.f32 %v1629, %v1680
        %v1682 = vpop.f32.mrb[0].mxu0
        %1683 = vdwg.mxu0
        %v1685 = vlaneseq
        %v1686 = vshrl.u32 %v1685, 7
        %v1687 = vsub.s32 0, %v1686
        %v1688 = vrot.slane %v1565, %v1687
        %v1694 = vunpack.c.l.b16 %v1556
        %v1695 = vunpack.c.l.b16 %v1557
        %v1696 = vunpack.c.l.b16 %v1558
        %v1697 = vunpack.c.l.b16 %v1559
        %v1698 = vpack.c.b16 %v1695, %v1694
        %v1699 = vpack.c.b16 %v1697, %v1696
        %1702 = vmatprep.subr.bf16.mxu0 0
        %1703 = vmatpush1.bf16.msra.mxu0 %v1698
        %1704 = vmatprep.subr.bf16.mxu0 0
        %1705 = vmatpush1.bf16.msra.mxu0 %v1699
        %1706 = vmatprep.subr.bf16.mxu0 0
        %1707 = vmatpush1.bf16.msra.mxu0 0
        %1708 = vmatprep.subr.bf16.mxu0 0
        %1709 = vmatpush1.bf16.msra.mxu0 0
        %1710 = vmatprep.subr.bf16.mxu0 0
        %1711 = vmatpush1.bf16.msra.mxu0 0
        %1712 = vmatprep.subr.bf16.mxu0 0
        %1713 = vmatpush1.bf16.msra.mxu0 0
        %1714 = vmatprep.subr.bf16.mxu0 0
        %1715 = vmatpush1.bf16.msra.mxu0 0
        %1716 = vmatprep.subr.bf16.mxu0 0
        %1717 = vmatpush1.bf16.msra.mxu0 0
        %1718 = vmatprep.subr.bf16.mxu0 0
        %1719 = vmatpush1.bf16.msra.mxu0 0
        %1720 = vmatprep.subr.bf16.mxu0 0
        %1721 = vmatpush1.bf16.msra.mxu0 0
        %1722 = vmatprep.subr.bf16.mxu0 0
        %1723 = vmatpush1.bf16.msra.mxu0 0
        %1724 = vmatprep.subr.bf16.mxu0 0
        %1725 = vmatpush1.bf16.msra.mxu0 0
        %1726 = vmatprep.subr.bf16.mxu0 0
        %1727 = vmatpush1.bf16.msra.mxu0 0
        %1728 = vmatprep.subr.bf16.mxu0 0
        %1729 = vmatpush1.bf16.msra.mxu0 0
        %1730 = vmatprep.subr.bf16.mxu0 0
        %1731 = vmatpush1.bf16.msra.mxu0 0
        %1732 = vmatprep.subr.bf16.mxu0 0
        %1733 = vmatpush1.bf16.msra.mxu0 0
        %1734 = vmatprep.mubr.bf16.mxu0 0
        %1735 = vmatmul.mubr.bf16.gmra.mrb[0].mxu0 %v842
        %v1736 = vpop.f32.mrb[0].mxu0
        %v1737 = vadd.f32 %v1688, %v1736
        %v1738 = vpop.f32.mrb[0].mxu0
        %v1739 = vpop.f32.mrb[0].mxu0
        %v1740 = vadd.f32 %v1688, %v1739
        %v1741 = vpop.f32.mrb[0].mxu0
        %1742 = vdwg.mxu0
        %v1743 = vpack.c.bf16 %v1622, %v1619
        %v1744 = vpack.c.bf16 %v1681, %v1678
        %v1746 = vsel %vm1005, %v1743, 0
        %v1749 = vsel %vm1005, %v1744, 0
        %1751 = vmatprep.subr.bf16.mxu0 0
        %1752 = vmatpush1.bf16.xpose.msra.mxu0 %v1749
        %1753 = vmatprep.subr.bf16.mxu0 0
        %1754 = vmatpush1.bf16.xpose.msra.mxu0 0
        %1755 = vmatprep.subr.bf16.mxu0 0
        %1756 = vmatpush1.bf16.xpose.msra.mxu0 0
        %1757 = vmatprep.subr.bf16.mxu0 0
        %1758 = vmatpush1.bf16.xpose.msra.mxu0 0
        %1759 = vmatprep.subr.bf16.mxu0 0
        %1760 = vmatpush1.bf16.xpose.msra.mxu0 0
        %1761 = vmatprep.subr.bf16.mxu0 0
        %1762 = vmatpush1.bf16.xpose.msra.mxu0 0
        %1763 = vmatprep.subr.bf16.mxu0 0
        %1764 = vmatpush1.bf16.xpose.msra.mxu0 0
        %1765 = vmatprep.subr.bf16.mxu0 0
        %1766 = vmatpush1.bf16.xpose.msra.mxu0 0
        %1767 = vmatprep.subr.bf16.mxu0 0
        %1768 = vmatpush1.bf16.xpose.msra.mxu0 0
        %1769 = vmatprep.subr.bf16.mxu0 0
        %1770 = vmatpush1.bf16.xpose.msra.mxu0 0
        %1771 = vmatprep.subr.bf16.mxu0 0
        %1772 = vmatpush1.bf16.xpose.msra.mxu0 0
        %1773 = vmatprep.subr.bf16.mxu0 0
        %1774 = vmatpush1.bf16.xpose.msra.mxu0 0
        %1775 = vmatprep.subr.bf16.mxu0 0
        %1776 = vmatpush1.bf16.xpose.msra.mxu0 0
        %1777 = vmatprep.subr.bf16.mxu0 0
        %1778 = vmatpush1.bf16.xpose.msra.mxu0 0
        %1779 = vmatprep.subr.bf16.mxu0 0
        %1780 = vmatpush1.bf16.xpose.msra.mxu0 0
        %1781 = vmatprep.subr.bf16.mxu0 0
        %1782 = vmatpush1.bf16.xpose.msra.mxu0 0
        %1783 = vmatprep.mubr.bf16.mxu0 0
        %1784 = vmatmul.mubr.bf16.gmra.mrb[0].mxu0 %v1746
        %v1785 = vpop.f32.mrb[0].mxu0
        %v1786 = vadd.f32 0.0, %v1785
        %v1787 = vpop.f32.mrb[0].mxu0
        %v1788 = vpop.f32.mrb[0].mxu0
        %v1789 = vadd.f32 0.0, %v1788
        %v1790 = vpop.f32.mrb[0].mxu0
        %1791 = vdwg.mxu0
        %v1792 = vmul.f32 %v1786, 0.35355338
        %v1793 = vmul.f32 %v1789, 0.35355338
        %v1794 = vadd.f32 %v1792, %v801
        %v1795 = vadd.f32 %v1793, %v802
        %v1796 = vsel %vm1057, %v1794, -inf
        %1797 = vmax.xlane.f32.xlu0 %v1796
        %v1798 = vpop.xlane.xlu0 %1797
        %v1799 = vsel %vm1057, %v1795, -inf
        %1800 = vmax.xlane.f32.xlu0 %v1799
        %v1801 = vpop.xlane.xlu0 %1800
        %v1802 = vsub.f32 %v1794, %v1798
        %v1803 = vsub.f32 %v1795, %v1801
        %v1804 = vmul.f32 %v1802, 1.442695
        %v1805 = vpow.pop %v1804
        %v1806 = vmul.f32 %v1803, 1.442695
        %v1807 = vpow.pop %v1806
        %v1808 = vsel %vm1057, %v1805, 0.0
        %1809 = vadd.xlane.f32.xlu0 %v1808
        %v1810 = vpop.xlane.xlu0 %1809
        %v1811 = vsel %vm1057, %v1807, 0.0
        %1812 = vadd.xlane.f32.xlu0 %v1811
        %v1813 = vpop.xlane.xlu0 %1812
        %v1814 = vrcp.pop %v1810
        %v1815 = vrcp.pop %v1813
        %v1816 = vmul.f32 %v1805, %v1814
        %v1817 = vmul.f32 %v1807, %v1815
        %v1818 = vpack.c.bf16 %v1817, %v1816
        %v1819 = vpack.c.bf16 %v1740, %v1737
        %v1821 = vsel %vm1057, %v1818, 0
        %1823 = vmatprep.subr.bf16.mxu0 0
        %1824 = vmatpush1.bf16.msra.mxu0 %v1819
        %1825 = vmatprep.subr.bf16.mxu0 0
        %1826 = vmatpush1.bf16.msra.mxu0 0
        %1827 = vmatprep.subr.bf16.mxu0 0
        %1828 = vmatpush1.bf16.msra.mxu0 0
        %1829 = vmatprep.subr.bf16.mxu0 0
        %1830 = vmatpush1.bf16.msra.mxu0 0
        %1831 = vmatprep.subr.bf16.mxu0 0
        %1832 = vmatpush1.bf16.msra.mxu0 0
        %1833 = vmatprep.subr.bf16.mxu0 0
        %1834 = vmatpush1.bf16.msra.mxu0 0
        %1835 = vmatprep.subr.bf16.mxu0 0
        %1836 = vmatpush1.bf16.msra.mxu0 0
        %1837 = vmatprep.subr.bf16.mxu0 0
        %1838 = vmatpush1.bf16.msra.mxu0 0
        %1839 = vmatprep.subr.bf16.mxu0 0
        %1840 = vmatpush1.bf16.msra.mxu0 0
        %1841 = vmatprep.subr.bf16.mxu0 0
        %1842 = vmatpush1.bf16.msra.mxu0 0
        %1843 = vmatprep.subr.bf16.mxu0 0
        %1844 = vmatpush1.bf16.msra.mxu0 0
        %1845 = vmatprep.subr.bf16.mxu0 0
        %1846 = vmatpush1.bf16.msra.mxu0 0
        %1847 = vmatprep.subr.bf16.mxu0 0
        %1848 = vmatpush1.bf16.msra.mxu0 0
        %1849 = vmatprep.subr.bf16.mxu0 0
        %1850 = vmatpush1.bf16.msra.mxu0 0
        %1851 = vmatprep.subr.bf16.mxu0 0
        %1852 = vmatpush1.bf16.msra.mxu0 0
        %1853 = vmatprep.subr.bf16.mxu0 0
        %1854 = vmatpush1.bf16.msra.mxu0 0
        %1855 = vmatprep.mubr.bf16.mxu0 0
        %1856 = vmatmul.mubr.bf16.gmra.mrb[0].mxu0 %v1821
        %v1857 = vpop.f32.mrb[0].mxu0
        %v1858 = vadd.f32 0.0, %v1857
        %v1859 = vpop.f32.mrb[0].mxu0
        %v1860 = vpop.f32.mrb[0].mxu0
        %v1861 = vadd.f32 0.0, %v1860
        %v1862 = vpop.f32.mrb[0].mxu0
        %1863 = vdwg.mxu0
        %v1864 = vpack.c.bf16 %v1861, %v1858
        %s1865 = scalar_lea.vmem %s741, 8
        %v1866 = vld [vmem:[%s1865] sm:$0xf]
        %v1868 = vsel %vm1005, %v1864, 0
        %v1871 = vsel %vm1453, %v1866, 0
        %1873 = vmatprep.subr.bf16.mxu0 0
        %1874 = vmatpush1.bf16.msra.mxu0 %v1871
        %1875 = vmatprep.subr.bf16.mxu0 0
        %1876 = vmatpush1.bf16.msra.mxu0 0
        %1877 = vmatprep.subr.bf16.mxu0 0
        %1878 = vmatpush1.bf16.msra.mxu0 0
        %1879 = vmatprep.subr.bf16.mxu0 0
        %1880 = vmatpush1.bf16.msra.mxu0 0
        %1881 = vmatprep.subr.bf16.mxu0 0
        %1882 = vmatpush1.bf16.msra.mxu0 0
        %1883 = vmatprep.subr.bf16.mxu0 0
        %1884 = vmatpush1.bf16.msra.mxu0 0
        %1885 = vmatprep.subr.bf16.mxu0 0
        %1886 = vmatpush1.bf16.msra.mxu0 0
        %1887 = vmatprep.subr.bf16.mxu0 0
        %1888 = vmatpush1.bf16.msra.mxu0 0
        %1889 = vmatprep.subr.bf16.mxu0 0
        %1890 = vmatpush1.bf16.msra.mxu0 0
        %1891 = vmatprep.subr.bf16.mxu0 0
        %1892 = vmatpush1.bf16.msra.mxu0 0
        %1893 = vmatprep.subr.bf16.mxu0 0
        %1894 = vmatpush1.bf16.msra.mxu0 0
        %1895 = vmatprep.subr.bf16.mxu0 0
        %1896 = vmatpush1.bf16.msra.mxu0 0
        %1897 = vmatprep.subr.bf16.mxu0 0
        %1898 = vmatpush1.bf16.msra.mxu0 0
        %1899 = vmatprep.subr.bf16.mxu0 0
        %1900 = vmatpush1.bf16.msra.mxu0 0
        %1901 = vmatprep.subr.bf16.mxu0 0
        %1902 = vmatpush1.bf16.msra.mxu0 0
        %1903 = vmatprep.subr.bf16.mxu0 0
        %1904 = vmatpush1.bf16.msra.mxu0 0
        %1905 = vmatprep.mubr.bf16.mxu0 0
        %1906 = vmatmul.mubr.bf16.gmra.mrb[0].mxu0 %v1868
        %v1907 = vpop.f32.mrb[0].mxu0
        %v1908 = vadd.f32 0.0, %v1907
        %v1909 = vpop.f32.mrb[0].mxu0
        %v1910 = vpop.f32.mrb[0].mxu0
        %v1911 = vadd.f32 0.0, %v1910
        %v1912 = vpop.f32.mrb[0].mxu0
        %1913 = vdwg.mxu0
        %v1914 = vadd.f32 %v1539, %v1908
        %v1915 = vadd.f32 %v1542, %v1911
        %s1916 = scalar_lea.vmem %s732, 48
        %v1917 = vld [vmem:[%s1916] sm:$0xf]
        %v1918 = vld [vmem:[%s1916 + $0x4] sm:$0xf]
        %v1919 = vld [vmem:[%s1916 + $0x8] sm:$0xf]
        %v1920 = vld [vmem:[%s1916 + $0xc] sm:$0xf]
        %s1921 = scalar_lea.vmem %s732, 112
        %v1922 = vld [vmem:[%s1921] sm:$0xf]
        %v1923 = vld [vmem:[%s1921 + $0x4] sm:$0xf]
        %v1924 = vld [vmem:[%s1921 + $0x8] sm:$0xf]
        %v1925 = vld [vmem:[%s1921 + $0xc] sm:$0xf]
        %s1926 = scalar_lea.vmem %s732, 176
        %v1927 = vld [vmem:[%s1926] sm:$0xf]
        %v1928 = vld [vmem:[%s1926 + $0x4] sm:$0xf]
        %v1929 = vld [vmem:[%s1926 + $0x8] sm:$0xf]
        %v1930 = vld [vmem:[%s1926 + $0xc] sm:$0xf]
        %s1931 = scalar_lea.vmem %s736, 3
        %v1932 = vld [vmem:[%s1931] sm:$0x1]
        %s1933 = scalar_lea.vmem %s736, 7
        %v1934 = vld [vmem:[%s1933] sm:$0x1]
        %s1935 = scalar_lea.vmem %s736, 11
        %v1936 = vld [vmem:[%s1935] sm:$0x1]
        %v1938 = vlaneseq
        %v1939 = vshrl.u32 %v1938, 7
        %v1940 = vsub.s32 0, %v1939
        %v1941 = vrot.slane %v1932, %v1940
        %v1947 = vunpack.c.l.b16 %v1917
        %v1948 = vunpack.c.l.b16 %v1918
        %v1949 = vunpack.c.l.b16 %v1919
        %v1950 = vunpack.c.l.b16 %v1920
        %v1951 = vpack.c.b16 %v1948, %v1947
        %v1952 = vpack.c.b16 %v1950, %v1949
        %1955 = vmatprep.subr.bf16.mxu0 0
        %1956 = vmatpush1.bf16.msra.mxu0 %v1951
        %1957 = vmatprep.subr.bf16.mxu0 0
        %1958 = vmatpush1.bf16.msra.mxu0 %v1952
        %1959 = vmatprep.subr.bf16.mxu0 0
        %1960 = vmatpush1.bf16.msra.mxu0 0
        %1961 = vmatprep.subr.bf16.mxu0 0
        %1962 = vmatpush1.bf16.msra.mxu0 0
        %1963 = vmatprep.subr.bf16.mxu0 0
        %1964 = vmatpush1.bf16.msra.mxu0 0
        %1965 = vmatprep.subr.bf16.mxu0 0
        %1966 = vmatpush1.bf16.msra.mxu0 0
        %1967 = vmatprep.subr.bf16.mxu0 0
        %1968 = vmatpush1.bf16.msra.mxu0 0
        %1969 = vmatprep.subr.bf16.mxu0 0
        %1970 = vmatpush1.bf16.msra.mxu0 0
        %1971 = vmatprep.subr.bf16.mxu0 0
        %1972 = vmatpush1.bf16.msra.mxu0 0
        %1973 = vmatprep.subr.bf16.mxu0 0
        %1974 = vmatpush1.bf16.msra.mxu0 0
        %1975 = vmatprep.subr.bf16.mxu0 0
        %1976 = vmatpush1.bf16.msra.mxu0 0
        %1977 = vmatprep.subr.bf16.mxu0 0
        %1978 = vmatpush1.bf16.msra.mxu0 0
        %1979 = vmatprep.subr.bf16.mxu0 0
        %1980 = vmatpush1.bf16.msra.mxu0 0
        %1981 = vmatprep.subr.bf16.mxu0 0
        %1982 = vmatpush1.bf16.msra.mxu0 0
        %1983 = vmatprep.subr.bf16.mxu0 0
        %1984 = vmatpush1.bf16.msra.mxu0 0
        %1985 = vmatprep.subr.bf16.mxu0 0
        %1986 = vmatpush1.bf16.msra.mxu0 0
        %1987 = vmatprep.mubr.bf16.mxu0 0
        %1988 = vmatmul.mubr.bf16.gmra.mrb[0].mxu0 %v842
        %v1989 = vpop.f32.mrb[0].mxu0
        %v1990 = vadd.f32 %v1941, %v1989
        %v1991 = vpop.f32.mrb[0].mxu0
        %v1992 = vpop.f32.mrb[0].mxu0
        %v1993 = vadd.f32 %v1941, %v1992
        %v1994 = vpop.f32.mrb[0].mxu0
        %1995 = vdwg.mxu0
        %v1997 = vlaneseq
        %v1998 = vshrl.u32 %v1997, 7
        %v1999 = vsub.s32 0, %v1998
        %v2000 = vrot.slane %v1934, %v1999
        %v2006 = vunpack.c.l.b16 %v1922
        %v2007 = vunpack.c.l.b16 %v1923
        %v2008 = vunpack.c.l.b16 %v1924
        %v2009 = vunpack.c.l.b16 %v1925
        %v2010 = vpack.c.b16 %v2007, %v2006
        %v2011 = vpack.c.b16 %v2009, %v2008
        %2014 = vmatprep.subr.bf16.mxu0 0
        %2015 = vmatpush1.bf16.msra.mxu0 %v2010
        %2016 = vmatprep.subr.bf16.mxu0 0
        %2017 = vmatpush1.bf16.msra.mxu0 %v2011
        %2018 = vmatprep.subr.bf16.mxu0 0
        %2019 = vmatpush1.bf16.msra.mxu0 0
        %2020 = vmatprep.subr.bf16.mxu0 0
        %2021 = vmatpush1.bf16.msra.mxu0 0
        %2022 = vmatprep.subr.bf16.mxu0 0
        %2023 = vmatpush1.bf16.msra.mxu0 0
        %2024 = vmatprep.subr.bf16.mxu0 0
        %2025 = vmatpush1.bf16.msra.mxu0 0
        %2026 = vmatprep.subr.bf16.mxu0 0
        %2027 = vmatpush1.bf16.msra.mxu0 0
        %2028 = vmatprep.subr.bf16.mxu0 0
        %2029 = vmatpush1.bf16.msra.mxu0 0
        %2030 = vmatprep.subr.bf16.mxu0 0
        %2031 = vmatpush1.bf16.msra.mxu0 0
        %2032 = vmatprep.subr.bf16.mxu0 0
        %2033 = vmatpush1.bf16.msra.mxu0 0
        %2034 = vmatprep.subr.bf16.mxu0 0
        %2035 = vmatpush1.bf16.msra.mxu0 0
        %2036 = vmatprep.subr.bf16.mxu0 0
        %2037 = vmatpush1.bf16.msra.mxu0 0
        %2038 = vmatprep.subr.bf16.mxu0 0
        %2039 = vmatpush1.bf16.msra.mxu0 0
        %2040 = vmatprep.subr.bf16.mxu0 0
        %2041 = vmatpush1.bf16.msra.mxu0 0
        %2042 = vmatprep.subr.bf16.mxu0 0
        %2043 = vmatpush1.bf16.msra.mxu0 0
        %2044 = vmatprep.subr.bf16.mxu0 0
        %2045 = vmatpush1.bf16.msra.mxu0 0
        %2046 = vmatprep.mubr.bf16.mxu0 0
        %2047 = vmatmul.mubr.bf16.gmra.mrb[0].mxu0 %v842
        %v2048 = vpop.f32.mrb[0].mxu0
        %v2049 = vadd.f32 %v2000, %v2048
        %v2050 = vpop.f32.mrb[0].mxu0
        %v2051 = vpop.f32.mrb[0].mxu0
        %v2052 = vadd.f32 %v2000, %v2051
        %v2053 = vpop.f32.mrb[0].mxu0
        %2054 = vdwg.mxu0
        %v2056 = vlaneseq
        %v2057 = vshrl.u32 %v2056, 7
        %v2058 = vsub.s32 0, %v2057
        %v2059 = vrot.slane %v1936, %v2058
        %v2065 = vunpack.c.l.b16 %v1927
        %v2066 = vunpack.c.l.b16 %v1928
        %v2067 = vunpack.c.l.b16 %v1929
        %v2068 = vunpack.c.l.b16 %v1930
        %v2069 = vpack.c.b16 %v2066, %v2065
        %v2070 = vpack.c.b16 %v2068, %v2067
        %2073 = vmatprep.subr.bf16.mxu0 0
        %2074 = vmatpush1.bf16.msra.mxu0 %v2069
        %2075 = vmatprep.subr.bf16.mxu0 0
        %2076 = vmatpush1.bf16.msra.mxu0 %v2070
        %2077 = vmatprep.subr.bf16.mxu0 0
        %2078 = vmatpush1.bf16.msra.mxu0 0
        %2079 = vmatprep.subr.bf16.mxu0 0
        %2080 = vmatpush1.bf16.msra.mxu0 0
        %2081 = vmatprep.subr.bf16.mxu0 0
        %2082 = vmatpush1.bf16.msra.mxu0 0
        %2083 = vmatprep.subr.bf16.mxu0 0
        %2084 = vmatpush1.bf16.msra.mxu0 0
        %2085 = vmatprep.subr.bf16.mxu0 0
        %2086 = vmatpush1.bf16.msra.mxu0 0
        %2087 = vmatprep.subr.bf16.mxu0 0
        %2088 = vmatpush1.bf16.msra.mxu0 0
        %2089 = vmatprep.subr.bf16.mxu0 0
        %2090 = vmatpush1.bf16.msra.mxu0 0
        %2091 = vmatprep.subr.bf16.mxu0 0
        %2092 = vmatpush1.bf16.msra.mxu0 0
        %2093 = vmatprep.subr.bf16.mxu0 0
        %2094 = vmatpush1.bf16.msra.mxu0 0
        %2095 = vmatprep.subr.bf16.mxu0 0
        %2096 = vmatpush1.bf16.msra.mxu0 0
        %2097 = vmatprep.subr.bf16.mxu0 0
        %2098 = vmatpush1.bf16.msra.mxu0 0
        %2099 = vmatprep.subr.bf16.mxu0 0
        %2100 = vmatpush1.bf16.msra.mxu0 0
        %2101 = vmatprep.subr.bf16.mxu0 0
        %2102 = vmatpush1.bf16.msra.mxu0 0
        %2103 = vmatprep.subr.bf16.mxu0 0
        %2104 = vmatpush1.bf16.msra.mxu0 0
        %2105 = vmatprep.mubr.bf16.mxu0 0
        %2106 = vmatmul.mubr.bf16.gmra.mrb[0].mxu0 %v842
        %v2107 = vpop.f32.mrb[0].mxu0
        %v2108 = vadd.f32 %v2059, %v2107
        %v2109 = vpop.f32.mrb[0].mxu0
        %v2110 = vpop.f32.mrb[0].mxu0
        %v2111 = vadd.f32 %v2059, %v2110
        %v2112 = vpop.f32.mrb[0].mxu0
        %2113 = vdwg.mxu0
        %v2114 = vpack.c.bf16 %v1993, %v1990
        %v2115 = vpack.c.bf16 %v2052, %v2049
        %v2117 = vsel %vm1005, %v2114, 0
        %v2120 = vsel %vm1005, %v2115, 0
        %2122 = vmatprep.subr.bf16.mxu0 0
        %2123 = vmatpush1.bf16.xpose.msra.mxu0 %v2120
        %2124 = vmatprep.subr.bf16.mxu0 0
        %2125 = vmatpush1.bf16.xpose.msra.mxu0 0
        %2126 = vmatprep.subr.bf16.mxu0 0
        %2127 = vmatpush1.bf16.xpose.msra.mxu0 0
        %2128 = vmatprep.subr.bf16.mxu0 0
        %2129 = vmatpush1.bf16.xpose.msra.mxu0 0
        %2130 = vmatprep.subr.bf16.mxu0 0
        %2131 = vmatpush1.bf16.xpose.msra.mxu0 0
        %2132 = vmatprep.subr.bf16.mxu0 0
        %2133 = vmatpush1.bf16.xpose.msra.mxu0 0
        %2134 = vmatprep.subr.bf16.mxu0 0
        %2135 = vmatpush1.bf16.xpose.msra.mxu0 0
        %2136 = vmatprep.subr.bf16.mxu0 0
        %2137 = vmatpush1.bf16.xpose.msra.mxu0 0
        %2138 = vmatprep.subr.bf16.mxu0 0
        %2139 = vmatpush1.bf16.xpose.msra.mxu0 0
        %2140 = vmatprep.subr.bf16.mxu0 0
        %2141 = vmatpush1.bf16.xpose.msra.mxu0 0
        %2142 = vmatprep.subr.bf16.mxu0 0
        %2143 = vmatpush1.bf16.xpose.msra.mxu0 0
        %2144 = vmatprep.subr.bf16.mxu0 0
        %2145 = vmatpush1.bf16.xpose.msra.mxu0 0
        %2146 = vmatprep.subr.bf16.mxu0 0
        %2147 = vmatpush1.bf16.xpose.msra.mxu0 0
        %2148 = vmatprep.subr.bf16.mxu0 0
        %2149 = vmatpush1.bf16.xpose.msra.mxu0 0
        %2150 = vmatprep.subr.bf16.mxu0 0
        %2151 = vmatpush1.bf16.xpose.msra.mxu0 0
        %2152 = vmatprep.subr.bf16.mxu0 0
        %2153 = vmatpush1.bf16.xpose.msra.mxu0 0
        %2154 = vmatprep.mubr.bf16.mxu0 0
        %2155 = vmatmul.mubr.bf16.gmra.mrb[0].mxu0 %v2117
        %v2156 = vpop.f32.mrb[0].mxu0
        %v2157 = vadd.f32 0.0, %v2156
        %v2158 = vpop.f32.mrb[0].mxu0
        %v2159 = vpop.f32.mrb[0].mxu0
        %v2160 = vadd.f32 0.0, %v2159
        %v2161 = vpop.f32.mrb[0].mxu0
        %2162 = vdwg.mxu0
        %v2163 = vmul.f32 %v2157, 0.35355338
        %v2164 = vmul.f32 %v2160, 0.35355338
        %v2165 = vadd.f32 %v2163, %v801
        %v2166 = vadd.f32 %v2164, %v802
        %v2167 = vsel %vm1057, %v2165, -inf
        %2168 = vmax.xlane.f32.xlu0 %v2167
        %v2169 = vpop.xlane.xlu0 %2168
        %v2170 = vsel %vm1057, %v2166, -inf
        %2171 = vmax.xlane.f32.xlu0 %v2170
        %v2172 = vpop.xlane.xlu0 %2171
        %v2173 = vsub.f32 %v2165, %v2169
        %v2174 = vsub.f32 %v2166, %v2172
        %v2175 = vmul.f32 %v2173, 1.442695
        %v2176 = vpow.pop %v2175
        %v2177 = vmul.f32 %v2174, 1.442695
        %v2178 = vpow.pop %v2177
        %v2179 = vsel %vm1057, %v2176, 0.0
        %2180 = vadd.xlane.f32.xlu0 %v2179
        %v2181 = vpop.xlane.xlu0 %2180
        %v2182 = vsel %vm1057, %v2178, 0.0
        %2183 = vadd.xlane.f32.xlu0 %v2182
        %v2184 = vpop.xlane.xlu0 %2183
        %v2185 = vrcp.pop %v2181
        %v2186 = vrcp.pop %v2184
        %v2187 = vmul.f32 %v2176, %v2185
        %v2188 = vmul.f32 %v2178, %v2186
        %v2189 = vpack.c.bf16 %v2188, %v2187
        %v2190 = vpack.c.bf16 %v2111, %v2108
        %v2192 = vsel %vm1057, %v2189, 0
        %2194 = vmatprep.subr.bf16.mxu0 0
        %2195 = vmatpush1.bf16.msra.mxu0 %v2190
        %2196 = vmatprep.subr.bf16.mxu0 0
        %2197 = vmatpush1.bf16.msra.mxu0 0
        %2198 = vmatprep.subr.bf16.mxu0 0
        %2199 = vmatpush1.bf16.msra.mxu0 0
        %2200 = vmatprep.subr.bf16.mxu0 0
        %2201 = vmatpush1.bf16.msra.mxu0 0
        %2202 = vmatprep.subr.bf16.mxu0 0
        %2203 = vmatpush1.bf16.msra.mxu0 0
        %2204 = vmatprep.subr.bf16.mxu0 0
        %2205 = vmatpush1.bf16.msra.mxu0 0
        %2206 = vmatprep.subr.bf16.mxu0 0
        %2207 = vmatpush1.bf16.msra.mxu0 0
        %2208 = vmatprep.subr.bf16.mxu0 0
        %2209 = vmatpush1.bf16.msra.mxu0 0
        %2210 = vmatprep.subr.bf16.mxu0 0
        %2211 = vmatpush1.bf16.msra.mxu0 0
        %2212 = vmatprep.subr.bf16.mxu0 0
        %2213 = vmatpush1.bf16.msra.mxu0 0
        %2214 = vmatprep.subr.bf16.mxu0 0
        %2215 = vmatpush1.bf16.msra.mxu0 0
        %2216 = vmatprep.subr.bf16.mxu0 0
        %2217 = vmatpush1.bf16.msra.mxu0 0
        %2218 = vmatprep.subr.bf16.mxu0 0
        %2219 = vmatpush1.bf16.msra.mxu0 0
        %2220 = vmatprep.subr.bf16.mxu0 0
        %2221 = vmatpush1.bf16.msra.mxu0 0
        %2222 = vmatprep.subr.bf16.mxu0 0
        %2223 = vmatpush1.bf16.msra.mxu0 0
        %2224 = vmatprep.subr.bf16.mxu0 0
        %2225 = vmatpush1.bf16.msra.mxu0 0
        %2226 = vmatprep.mubr.bf16.mxu0 0
        %2227 = vmatmul.mubr.bf16.gmra.mrb[0].mxu0 %v2192
        %v2228 = vpop.f32.mrb[0].mxu0
        %v2229 = vadd.f32 0.0, %v2228
        %v2230 = vpop.f32.mrb[0].mxu0
        %v2231 = vpop.f32.mrb[0].mxu0
        %v2232 = vadd.f32 0.0, %v2231
        %v2233 = vpop.f32.mrb[0].mxu0
        %2234 = vdwg.mxu0
        %v2235 = vpack.c.bf16 %v2232, %v2229
        %s2236 = scalar_lea.vmem %s741, 12
        %v2237 = vld [vmem:[%s2236] sm:$0xf]
        %v2239 = vsel %vm1005, %v2235, 0
        %v2242 = vsel %vm1453, %v2237, 0
        %2244 = vmatprep.subr.bf16.mxu0 0
        %2245 = vmatpush1.bf16.msra.mxu0 %v2242
        %2246 = vmatprep.subr.bf16.mxu0 0
        %2247 = vmatpush1.bf16.msra.mxu0 0
        %2248 = vmatprep.subr.bf16.mxu0 0
        %2249 = vmatpush1.bf16.msra.mxu0 0
        %2250 = vmatprep.subr.bf16.mxu0 0
        %2251 = vmatpush1.bf16.msra.mxu0 0
        %2252 = vmatprep.subr.bf16.mxu0 0
        %2253 = vmatpush1.bf16.msra.mxu0 0
        %2254 = vmatprep.subr.bf16.mxu0 0
        %2255 = vmatpush1.bf16.msra.mxu0 0
        %2256 = vmatprep.subr.bf16.mxu0 0
        %2257 = vmatpush1.bf16.msra.mxu0 0
        %2258 = vmatprep.subr.bf16.mxu0 0
        %2259 = vmatpush1.bf16.msra.mxu0 0
        %2260 = vmatprep.subr.bf16.mxu0 0
        %2261 = vmatpush1.bf16.msra.mxu0 0
        %2262 = vmatprep.subr.bf16.mxu0 0
        %2263 = vmatpush1.bf16.msra.mxu0 0
        %2264 = vmatprep.subr.bf16.mxu0 0
        %2265 = vmatpush1.bf16.msra.mxu0 0
        %2266 = vmatprep.subr.bf16.mxu0 0
        %2267 = vmatpush1.bf16.msra.mxu0 0
        %2268 = vmatprep.subr.bf16.mxu0 0
        %2269 = vmatpush1.bf16.msra.mxu0 0
        %2270 = vmatprep.subr.bf16.mxu0 0
        %2271 = vmatpush1.bf16.msra.mxu0 0
        %2272 = vmatprep.subr.bf16.mxu0 0
        %2273 = vmatpush1.bf16.msra.mxu0 0
        %2274 = vmatprep.subr.bf16.mxu0 0
        %2275 = vmatpush1.bf16.msra.mxu0 0
        %2276 = vmatprep.mubr.bf16.mxu0 0
        %2277 = vmatmul.mubr.bf16.gmra.mrb[0].mxu0 %v2239
        %v2278 = vpop.f32.mrb[0].mxu0
        %v2279 = vadd.f32 0.0, %v2278
        %v2280 = vpop.f32.mrb[0].mxu0
        %v2281 = vpop.f32.mrb[0].mxu0
        %v2282 = vadd.f32 0.0, %v2281
        %v2283 = vpop.f32.mrb[0].mxu0
        %2284 = vdwg.mxu0
        %v2285 = vadd.f32 %v1914, %v2279
        %v2286 = vadd.f32 %v1915, %v2282
        %v2287 = vld [vmem:[%s744] sm:$0x1]
        %v2289 = vlaneseq
        %v2290 = vshrl.u32 %v2289, 7
        %v2291 = vsub.s32 0, %v2290
        %v2292 = vrot.slane %v2287, %v2291
        %v2294 = vadd.f32 %v2285, %v2292
        %v2295 = vadd.f32 %v2286, %v2292
        %v2296 = vadd.f32 %v2294, %v796
        %v2297 = vadd.f32 %v2295, %v797
        %v2298 = vld [vmem:[%s781] sm:$0x1]
        %v2299 = vld [vmem:[%s785] sm:$0x1]
        %v2300 = vsel %vm840, %v2296, 0.0
        %2301 = vadd.xlane.f32.xlu0 %v2300
        %v2302 = vpop.xlane.xlu0 %2301
        %v2303 = vsel %vm840, %v2297, 0.0
        %2304 = vadd.xlane.f32.xlu0 %v2303
        %v2305 = vpop.xlane.xlu0 %2304
        %v2306 = vrcp.pop 32.0
        %v2307 = vmul.f32 %v2302, %v2306
        %v2308 = vmul.f32 %v2305, %v2306
        %v2309 = vsub.f32 %v2296, %v2307
        %v2310 = vsub.f32 %v2297, %v2308
        %v2311 = vmul.f32 %v2309, %v2309
        %v2312 = vmul.f32 %v2310, %v2310
        %v2313 = vsel %vm840, %v2311, 0.0
        %2314 = vadd.xlane.f32.xlu0 %v2313
        %v2315 = vpop.xlane.xlu0 %2314
        %v2316 = vsel %vm840, %v2312, 0.0
        %2317 = vadd.xlane.f32.xlu0 %v2316
        %v2318 = vpop.xlane.xlu0 %2317
        %v2319 = vmul.f32 %v2315, %v2306
        %v2320 = vmul.f32 %v2318, %v2306
        %v2321 = vadd.f32 %v2319, 1e-05
        %v2322 = vadd.f32 %v2320, 1e-05
        %v2323 = vrsqrt.pop %v2321
        %v2324 = vrsqrt.pop %v2322
        %v2325 = vmul.f32 %v2309, %v2323
        %v2326 = vmul.f32 %v2310, %v2324
        %v2328 = vlaneseq
        %v2329 = vshrl.u32 %v2328, 7
        %v2330 = vsub.s32 0, %v2329
        %v2331 = vrot.slane %v2298, %v2330
        %v2333 = vmul.f32 %v2325, %v2331
        %v2334 = vmul.f32 %v2326, %v2331
        %v2336 = vlaneseq
        %v2337 = vshrl.u32 %v2336, 7
        %v2338 = vsub.s32 0, %v2337
        %v2339 = vrot.slane %v2299, %v2338
        %v2341 = vadd.f32 %v2333, %v2339
        %v2342 = vadd.f32 %v2334, %v2339
        %v2343 = vld [vmem:[%s3] sm:$0xff]
        %v2344 = vld [vmem:[%s3 + $0x8] sm:$0xff]
        %v2345 = vpack.c.bf16 %v2342, %v2341
        %v2346 = vld [vmem:[%s749] sm:$0xf]
        %v2347 = vld [vmem:[%s749 + $0x4] sm:$0xf]
        %v2348 = vld [vmem:[%s749 + $0x8] sm:$0xf]
        %v2349 = vld [vmem:[%s749 + $0xc] sm:$0xf]
        %s2350 = scalar_lea.vmem %s749, 64
        %v2351 = vld [vmem:[%s2350] sm:$0xf]
        %v2352 = vld [vmem:[%s2350 + $0x4] sm:$0xf]
        %v2353 = vld [vmem:[%s2350 + $0x8] sm:$0xf]
        %v2354 = vld [vmem:[%s2350 + $0xc] sm:$0xf]
        %s2355 = scalar_lea.vmem %s749, 128
        %v2356 = vld [vmem:[%s2355] sm:$0xf]
        %v2357 = vld [vmem:[%s2355 + $0x4] sm:$0xf]
        %v2358 = vld [vmem:[%s2355 + $0x8] sm:$0xf]
        %v2359 = vld [vmem:[%s2355 + $0xc] sm:$0xf]
        %v2360 = vld [vmem:[%s753] sm:$0x1]
        %s2361 = scalar_lea.vmem %s753, 4
        %v2362 = vld [vmem:[%s2361] sm:$0x1]
        %s2363 = scalar_lea.vmem %s753, 8
        %v2364 = vld [vmem:[%s2363] sm:$0x1]
        %v2366 = vlaneseq
        %v2367 = vshrl.u32 %v2366, 7
        %v2368 = vsub.s32 0, %v2367
        %v2369 = vrot.slane %v2360, %v2368
        %v2375 = vunpack.c.l.b16 %v2346
        %v2376 = vunpack.c.l.b16 %v2347
        %v2377 = vunpack.c.l.b16 %v2348
        %v2378 = vunpack.c.l.b16 %v2349
        %v2379 = vpack.c.b16 %v2376, %v2375
        %v2380 = vpack.c.b16 %v2378, %v2377
        %v2384 = vsel %vm840, %v2345, 0
        %2386 = vmatprep.subr.bf16.mxu0 0
        %2387 = vmatpush1.bf16.msra.mxu0 %v2379
        %2388 = vmatprep.subr.bf16.mxu0 0
        %2389 = vmatpush1.bf16.msra.mxu0 %v2380
        %2390 = vmatprep.subr.bf16.mxu0 0
        %2391 = vmatpush1.bf16.msra.mxu0 0
        %2392 = vmatprep.subr.bf16.mxu0 0
        %2393 = vmatpush1.bf16.msra.mxu0 0
        %2394 = vmatprep.subr.bf16.mxu0 0
        %2395 = vmatpush1.bf16.msra.mxu0 0
        %2396 = vmatprep.subr.bf16.mxu0 0
        %2397 = vmatpush1.bf16.msra.mxu0 0
        %2398 = vmatprep.subr.bf16.mxu0 0
        %2399 = vmatpush1.bf16.msra.mxu0 0
        %2400 = vmatprep.subr.bf16.mxu0 0
        %2401 = vmatpush1.bf16.msra.mxu0 0
        %2402 = vmatprep.subr.bf16.mxu0 0
        %2403 = vmatpush1.bf16.msra.mxu0 0
        %2404 = vmatprep.subr.bf16.mxu0 0
        %2405 = vmatpush1.bf16.msra.mxu0 0
        %2406 = vmatprep.subr.bf16.mxu0 0
        %2407 = vmatpush1.bf16.msra.mxu0 0
        %2408 = vmatprep.subr.bf16.mxu0 0
        %2409 = vmatpush1.bf16.msra.mxu0 0
        %2410 = vmatprep.subr.bf16.mxu0 0
        %2411 = vmatpush1.bf16.msra.mxu0 0
        %2412 = vmatprep.subr.bf16.mxu0 0
        %2413 = vmatpush1.bf16.msra.mxu0 0
        %2414 = vmatprep.subr.bf16.mxu0 0
        %2415 = vmatpush1.bf16.msra.mxu0 0
        %2416 = vmatprep.subr.bf16.mxu0 0
        %2417 = vmatpush1.bf16.msra.mxu0 0
        %2418 = vmatprep.mubr.bf16.mxu0 0
        %2419 = vmatmul.mubr.bf16.gmra.mrb[0].mxu0 %v2384
        %v2420 = vpop.f32.mrb[0].mxu0
        %v2421 = vadd.f32 %v2369, %v2420
        %v2422 = vpop.f32.mrb[0].mxu0
        %v2423 = vpop.f32.mrb[0].mxu0
        %v2424 = vadd.f32 %v2369, %v2423
        %v2425 = vpop.f32.mrb[0].mxu0
        %2426 = vdwg.mxu0
        %v2428 = vlaneseq
        %v2429 = vshrl.u32 %v2428, 7
        %v2430 = vsub.s32 0, %v2429
        %v2431 = vrot.slane %v2362, %v2430
        %v2435 = vunpack.c.l.b16 %v798
        %v2436 = vunpack.c.l.b16 %v799
        %v2437 = vpack.c.b16 %v2436, %v2435
        %v2442 = vunpack.c.l.b16 %v2351
        %v2443 = vunpack.c.l.b16 %v2352
        %v2444 = vunpack.c.l.b16 %v2353
        %v2445 = vunpack.c.l.b16 %v2354
        %v2446 = vpack.c.b16 %v2443, %v2442
        %v2447 = vpack.c.b16 %v2445, %v2444
        %v2451 = vsel %vm840, %v2437, 0
        %2453 = vmatprep.subr.bf16.mxu0 0
        %2454 = vmatpush1.bf16.msra.mxu0 %v2446
        %2455 = vmatprep.subr.bf16.mxu0 0
        %2456 = vmatpush1.bf16.msra.mxu0 %v2447
        %2457 = vmatprep.subr.bf16.mxu0 0
        %2458 = vmatpush1.bf16.msra.mxu0 0
        %2459 = vmatprep.subr.bf16.mxu0 0
        %2460 = vmatpush1.bf16.msra.mxu0 0
        %2461 = vmatprep.subr.bf16.mxu0 0
        %2462 = vmatpush1.bf16.msra.mxu0 0
        %2463 = vmatprep.subr.bf16.mxu0 0
        %2464 = vmatpush1.bf16.msra.mxu0 0
        %2465 = vmatprep.subr.bf16.mxu0 0
        %2466 = vmatpush1.bf16.msra.mxu0 0
        %2467 = vmatprep.subr.bf16.mxu0 0
        %2468 = vmatpush1.bf16.msra.mxu0 0
        %2469 = vmatprep.subr.bf16.mxu0 0
        %2470 = vmatpush1.bf16.msra.mxu0 0
        %2471 = vmatprep.subr.bf16.mxu0 0
        %2472 = vmatpush1.bf16.msra.mxu0 0
        %2473 = vmatprep.subr.bf16.mxu0 0
        %2474 = vmatpush1.bf16.msra.mxu0 0
        %2475 = vmatprep.subr.bf16.mxu0 0
        %2476 = vmatpush1.bf16.msra.mxu0 0
        %2477 = vmatprep.subr.bf16.mxu0 0
        %2478 = vmatpush1.bf16.msra.mxu0 0
        %2479 = vmatprep.subr.bf16.mxu0 0
        %2480 = vmatpush1.bf16.msra.mxu0 0
        %2481 = vmatprep.subr.bf16.mxu0 0
        %2482 = vmatpush1.bf16.msra.mxu0 0
        %2483 = vmatprep.subr.bf16.mxu0 0
        %2484 = vmatpush1.bf16.msra.mxu0 0
        %2485 = vmatprep.mubr.bf16.mxu0 0
        %2486 = vmatmul.mubr.bf16.gmra.mrb[0].mxu0 %v2451
        %v2487 = vpop.f32.mrb[0].mxu0
        %v2488 = vadd.f32 %v2431, %v2487
        %v2489 = vpop.f32.mrb[0].mxu0
        %v2490 = vpop.f32.mrb[0].mxu0
        %v2491 = vadd.f32 %v2431, %v2490
        %v2492 = vpop.f32.mrb[0].mxu0
        %2493 = vdwg.mxu0
        %v2495 = vlaneseq
        %v2496 = vshrl.u32 %v2495, 7
        %v2497 = vsub.s32 0, %v2496
        %v2498 = vrot.slane %v2364, %v2497
        %v2504 = vunpack.c.l.b16 %v2356
        %v2505 = vunpack.c.l.b16 %v2357
        %v2506 = vunpack.c.l.b16 %v2358
        %v2507 = vunpack.c.l.b16 %v2359
        %v2508 = vpack.c.b16 %v2505, %v2504
        %v2509 = vpack.c.b16 %v2507, %v2506
        %2512 = vmatprep.subr.bf16.mxu0 0
        %2513 = vmatpush1.bf16.msra.mxu0 %v2508
        %2514 = vmatprep.subr.bf16.mxu0 0
        %2515 = vmatpush1.bf16.msra.mxu0 %v2509
        %2516 = vmatprep.subr.bf16.mxu0 0
        %2517 = vmatpush1.bf16.msra.mxu0 0
        %2518 = vmatprep.subr.bf16.mxu0 0
        %2519 = vmatpush1.bf16.msra.mxu0 0
        %2520 = vmatprep.subr.bf16.mxu0 0
        %2521 = vmatpush1.bf16.msra.mxu0 0
        %2522 = vmatprep.subr.bf16.mxu0 0
        %2523 = vmatpush1.bf16.msra.mxu0 0
        %2524 = vmatprep.subr.bf16.mxu0 0
        %2525 = vmatpush1.bf16.msra.mxu0 0
        %2526 = vmatprep.subr.bf16.mxu0 0
        %2527 = vmatpush1.bf16.msra.mxu0 0
        %2528 = vmatprep.subr.bf16.mxu0 0
        %2529 = vmatpush1.bf16.msra.mxu0 0
        %2530 = vmatprep.subr.bf16.mxu0 0
        %2531 = vmatpush1.bf16.msra.mxu0 0
        %2532 = vmatprep.subr.bf16.mxu0 0
        %2533 = vmatpush1.bf16.msra.mxu0 0
        %2534 = vmatprep.subr.bf16.mxu0 0
        %2535 = vmatpush1.bf16.msra.mxu0 0
        %2536 = vmatprep.subr.bf16.mxu0 0
        %2537 = vmatpush1.bf16.msra.mxu0 0
        %2538 = vmatprep.subr.bf16.mxu0 0
        %2539 = vmatpush1.bf16.msra.mxu0 0
        %2540 = vmatprep.subr.bf16.mxu0 0
        %2541 = vmatpush1.bf16.msra.mxu0 0
        %2542 = vmatprep.subr.bf16.mxu0 0
        %2543 = vmatpush1.bf16.msra.mxu0 0
        %2544 = vmatprep.mubr.bf16.mxu0 0
        %2545 = vmatmul.mubr.bf16.gmra.mrb[0].mxu0 %v2451
        %v2546 = vpop.f32.mrb[0].mxu0
        %v2547 = vadd.f32 %v2498, %v2546
        %v2548 = vpop.f32.mrb[0].mxu0
        %v2549 = vpop.f32.mrb[0].mxu0
        %v2550 = vadd.f32 %v2498, %v2549
        %v2551 = vpop.f32.mrb[0].mxu0
        %2552 = vdwg.mxu0
        %v2553 = vpack.c.bf16 %v2424, %v2421
        %v2554 = vpack.c.bf16 %v2491, %v2488
        %v2556 = vsel %vm1005, %v2553, 0
        %v2559 = vsel %vm1005, %v2554, 0
        %2561 = vmatprep.subr.bf16.mxu0 0
        %2562 = vmatpush1.bf16.xpose.msra.mxu0 %v2559
        %2563 = vmatprep.subr.bf16.mxu0 0
        %2564 = vmatpush1.bf16.xpose.msra.mxu0 0
        %2565 = vmatprep.subr.bf16.mxu0 0
        %2566 = vmatpush1.bf16.xpose.msra.mxu0 0
        %2567 = vmatprep.subr.bf16.mxu0 0
        %2568 = vmatpush1.bf16.xpose.msra.mxu0 0
        %2569 = vmatprep.subr.bf16.mxu0 0
        %2570 = vmatpush1.bf16.xpose.msra.mxu0 0
        %2571 = vmatprep.subr.bf16.mxu0 0
        %2572 = vmatpush1.bf16.xpose.msra.mxu0 0
        %2573 = vmatprep.subr.bf16.mxu0 0
        %2574 = vmatpush1.bf16.xpose.msra.mxu0 0
        %2575 = vmatprep.subr.bf16.mxu0 0
        %2576 = vmatpush1.bf16.xpose.msra.mxu0 0
        %2577 = vmatprep.subr.bf16.mxu0 0
        %2578 = vmatpush1.bf16.xpose.msra.mxu0 0
        %2579 = vmatprep.subr.bf16.mxu0 0
        %2580 = vmatpush1.bf16.xpose.msra.mxu0 0
        %2581 = vmatprep.subr.bf16.mxu0 0
        %2582 = vmatpush1.bf16.xpose.msra.mxu0 0
        %2583 = vmatprep.subr.bf16.mxu0 0
        %2584 = vmatpush1.bf16.xpose.msra.mxu0 0
        %2585 = vmatprep.subr.bf16.mxu0 0
        %2586 = vmatpush1.bf16.xpose.msra.mxu0 0
        %2587 = vmatprep.subr.bf16.mxu0 0
        %2588 = vmatpush1.bf16.xpose.msra.mxu0 0
        %2589 = vmatprep.subr.bf16.mxu0 0
        %2590 = vmatpush1.bf16.xpose.msra.mxu0 0
        %2591 = vmatprep.subr.bf16.mxu0 0
        %2592 = vmatpush1.bf16.xpose.msra.mxu0 0
        %2593 = vmatprep.mubr.bf16.mxu0 0
        %2594 = vmatmul.mubr.bf16.gmra.mrb[0].mxu0 %v2556
        %v2595 = vpop.f32.mrb[0].mxu0
        %v2596 = vadd.f32 0.0, %v2595
        %v2597 = vpop.f32.mrb[0].mxu0
        %v2598 = vpop.f32.mrb[0].mxu0
        %v2599 = vadd.f32 0.0, %v2598
        %v2600 = vpop.f32.mrb[0].mxu0
        %2601 = vdwg.mxu0
        %v2602 = vmul.f32 %v2596, 0.35355338
        %v2603 = vmul.f32 %v2599, 0.35355338
        %v2604 = vadd.f32 %v2602, %v2343
        %v2605 = vadd.f32 %v2603, %v2344
        %v2606 = vsel %vm1057, %v2604, -inf
        %2607 = vmax.xlane.f32.xlu0 %v2606
        %v2608 = vpop.xlane.xlu0 %2607
        %v2609 = vsel %vm1057, %v2605, -inf
        %2610 = vmax.xlane.f32.xlu0 %v2609
        %v2611 = vpop.xlane.xlu0 %2610
        %v2612 = vsub.f32 %v2604, %v2608
        %v2613 = vsub.f32 %v2605, %v2611
        %v2614 = vmul.f32 %v2612, 1.442695
        %v2615 = vpow.pop %v2614
        %v2616 = vmul.f32 %v2613, 1.442695
        %v2617 = vpow.pop %v2616
        %v2618 = vsel %vm1057, %v2615, 0.0
        %2619 = vadd.xlane.f32.xlu0 %v2618
        %v2620 = vpop.xlane.xlu0 %2619
        %v2621 = vsel %vm1057, %v2617, 0.0
        %2622 = vadd.xlane.f32.xlu0 %v2621
        %v2623 = vpop.xlane.xlu0 %2622
        %v2624 = vrcp.pop %v2620
        %v2625 = vrcp.pop %v2623
        %v2626 = vmul.f32 %v2615, %v2624
        %v2627 = vmul.f32 %v2617, %v2625
        %v2628 = vpack.c.bf16 %v2627, %v2626
        %v2629 = vpack.c.bf16 %v2550, %v2547
        %v2631 = vsel %vm1057, %v2628, 0
        %2633 = vmatprep.subr.bf16.mxu0 0
        %2634 = vmatpush1.bf16.msra.mxu0 %v2629
        %2635 = vmatprep.subr.bf16.mxu0 0
        %2636 = vmatpush1.bf16.msra.mxu0 0
        %2637 = vmatprep.subr.bf16.mxu0 0
        %2638 = vmatpush1.bf16.msra.mxu0 0
        %2639 = vmatprep.subr.bf16.mxu0 0
        %2640 = vmatpush1.bf16.msra.mxu0 0
        %2641 = vmatprep.subr.bf16.mxu0 0
        %2642 = vmatpush1.bf16.msra.mxu0 0
        %2643 = vmatprep.subr.bf16.mxu0 0
        %2644 = vmatpush1.bf16.msra.mxu0 0
        %2645 = vmatprep.subr.bf16.mxu0 0
        %2646 = vmatpush1.bf16.msra.mxu0 0
        %2647 = vmatprep.subr.bf16.mxu0 0
        %2648 = vmatpush1.bf16.msra.mxu0 0
        %2649 = vmatprep.subr.bf16.mxu0 0
        %2650 = vmatpush1.bf16.msra.mxu0 0
        %2651 = vmatprep.subr.bf16.mxu0 0
        %2652 = vmatpush1.bf16.msra.mxu0 0
        %2653 = vmatprep.subr.bf16.mxu0 0
        %2654 = vmatpush1.bf16.msra.mxu0 0
        %2655 = vmatprep.subr.bf16.mxu0 0
        %2656 = vmatpush1.bf16.msra.mxu0 0
        %2657 = vmatprep.subr.bf16.mxu0 0
        %2658 = vmatpush1.bf16.msra.mxu0 0
        %2659 = vmatprep.subr.bf16.mxu0 0
        %2660 = vmatpush1.bf16.msra.mxu0 0
        %2661 = vmatprep.subr.bf16.mxu0 0
        %2662 = vmatpush1.bf16.msra.mxu0 0
        %2663 = vmatprep.subr.bf16.mxu0 0
        %2664 = vmatpush1.bf16.msra.mxu0 0
        %2665 = vmatprep.mubr.bf16.mxu0 0
        %2666 = vmatmul.mubr.bf16.gmra.mrb[0].mxu0 %v2631
        %v2667 = vpop.f32.mrb[0].mxu0
        %v2668 = vadd.f32 0.0, %v2667
        %v2669 = vpop.f32.mrb[0].mxu0
        %v2670 = vpop.f32.mrb[0].mxu0
        %v2671 = vadd.f32 0.0, %v2670
        %v2672 = vpop.f32.mrb[0].mxu0
        %2673 = vdwg.mxu0
        %v2674 = vpack.c.bf16 %v2671, %v2668
        %v2675 = vld [vmem:[%s758] sm:$0xf]
        %s2676 = scalar_lea.vmem %s749, 16
        %v2677 = vld [vmem:[%s2676] sm:$0xf]
        %v2678 = vld [vmem:[%s2676 + $0x4] sm:$0xf]
        %v2679 = vld [vmem:[%s2676 + $0x8] sm:$0xf]
        %v2680 = vld [vmem:[%s2676 + $0xc] sm:$0xf]
        %s2681 = scalar_lea.vmem %s749, 80
        %v2682 = vld [vmem:[%s2681] sm:$0xf]
        %v2683 = vld [vmem:[%s2681 + $0x4] sm:$0xf]
        %v2684 = vld [vmem:[%s2681 + $0x8] sm:$0xf]
        %v2685 = vld [vmem:[%s2681 + $0xc] sm:$0xf]
        %s2686 = scalar_lea.vmem %s749, 144
        %v2687 = vld [vmem:[%s2686] sm:$0xf]
        %v2688 = vld [vmem:[%s2686 + $0x4] sm:$0xf]
        %v2689 = vld [vmem:[%s2686 + $0x8] sm:$0xf]
        %v2690 = vld [vmem:[%s2686 + $0xc] sm:$0xf]
        %s2691 = scalar_lea.vmem %s753, 1
        %v2692 = vld [vmem:[%s2691] sm:$0x1]
        %s2693 = scalar_lea.vmem %s753, 5
        %v2694 = vld [vmem:[%s2693] sm:$0x1]
        %s2695 = scalar_lea.vmem %s753, 9
        %v2696 = vld [vmem:[%s2695] sm:$0x1]
        %v2698 = vlaneseq
        %v2699 = vshrl.u32 %v2698, 7
        %v2700 = vsub.s32 0, %v2699
        %v2701 = vrot.slane %v2692, %v2700
        %v2707 = vunpack.c.l.b16 %v2677
        %v2708 = vunpack.c.l.b16 %v2678
        %v2709 = vunpack.c.l.b16 %v2679
        %v2710 = vunpack.c.l.b16 %v2680
        %v2711 = vpack.c.b16 %v2708, %v2707
        %v2712 = vpack.c.b16 %v2710, %v2709
        %2715 = vmatprep.subr.bf16.mxu0 0
        %2716 = vmatpush1.bf16.msra.mxu0 %v2711
        %2717 = vmatprep.subr.bf16.mxu0 0
        %2718 = vmatpush1.bf16.msra.mxu0 %v2712
        %2719 = vmatprep.subr.bf16.mxu0 0
        %2720 = vmatpush1.bf16.msra.mxu0 0
        %2721 = vmatprep.subr.bf16.mxu0 0
        %2722 = vmatpush1.bf16.msra.mxu0 0
        %2723 = vmatprep.subr.bf16.mxu0 0
        %2724 = vmatpush1.bf16.msra.mxu0 0
        %2725 = vmatprep.subr.bf16.mxu0 0
        %2726 = vmatpush1.bf16.msra.mxu0 0
        %2727 = vmatprep.subr.bf16.mxu0 0
        %2728 = vmatpush1.bf16.msra.mxu0 0
        %2729 = vmatprep.subr.bf16.mxu0 0
        %2730 = vmatpush1.bf16.msra.mxu0 0
        %2731 = vmatprep.subr.bf16.mxu0 0
        %2732 = vmatpush1.bf16.msra.mxu0 0
        %2733 = vmatprep.subr.bf16.mxu0 0
        %2734 = vmatpush1.bf16.msra.mxu0 0
        %2735 = vmatprep.subr.bf16.mxu0 0
        %2736 = vmatpush1.bf16.msra.mxu0 0
        %2737 = vmatprep.subr.bf16.mxu0 0
        %2738 = vmatpush1.bf16.msra.mxu0 0
        %2739 = vmatprep.subr.bf16.mxu0 0
        %2740 = vmatpush1.bf16.msra.mxu0 0
        %2741 = vmatprep.subr.bf16.mxu0 0
        %2742 = vmatpush1.bf16.msra.mxu0 0
        %2743 = vmatprep.subr.bf16.mxu0 0
        %2744 = vmatpush1.bf16.msra.mxu0 0
        %2745 = vmatprep.subr.bf16.mxu0 0
        %2746 = vmatpush1.bf16.msra.mxu0 0
        %2747 = vmatprep.mubr.bf16.mxu0 0
        %2748 = vmatmul.mubr.bf16.gmra.mrb[0].mxu0 %v2384
        %v2749 = vpop.f32.mrb[0].mxu0
        %v2750 = vadd.f32 %v2701, %v2749
        %v2751 = vpop.f32.mrb[0].mxu0
        %v2752 = vpop.f32.mrb[0].mxu0
        %v2753 = vadd.f32 %v2701, %v2752
        %v2754 = vpop.f32.mrb[0].mxu0
        %2755 = vdwg.mxu0
        %v2757 = vlaneseq
        %v2758 = vshrl.u32 %v2757, 7
        %v2759 = vsub.s32 0, %v2758
        %v2760 = vrot.slane %v2694, %v2759
        %v2766 = vunpack.c.l.b16 %v2682
        %v2767 = vunpack.c.l.b16 %v2683
        %v2768 = vunpack.c.l.b16 %v2684
        %v2769 = vunpack.c.l.b16 %v2685
        %v2770 = vpack.c.b16 %v2767, %v2766
        %v2771 = vpack.c.b16 %v2769, %v2768
        %2774 = vmatprep.subr.bf16.mxu0 0
        %2775 = vmatpush1.bf16.msra.mxu0 %v2770
        %2776 = vmatprep.subr.bf16.mxu0 0
        %2777 = vmatpush1.bf16.msra.mxu0 %v2771
        %2778 = vmatprep.subr.bf16.mxu0 0
        %2779 = vmatpush1.bf16.msra.mxu0 0
        %2780 = vmatprep.subr.bf16.mxu0 0
        %2781 = vmatpush1.bf16.msra.mxu0 0
        %2782 = vmatprep.subr.bf16.mxu0 0
        %2783 = vmatpush1.bf16.msra.mxu0 0
        %2784 = vmatprep.subr.bf16.mxu0 0
        %2785 = vmatpush1.bf16.msra.mxu0 0
        %2786 = vmatprep.subr.bf16.mxu0 0
        %2787 = vmatpush1.bf16.msra.mxu0 0
        %2788 = vmatprep.subr.bf16.mxu0 0
        %2789 = vmatpush1.bf16.msra.mxu0 0
        %2790 = vmatprep.subr.bf16.mxu0 0
        %2791 = vmatpush1.bf16.msra.mxu0 0
        %2792 = vmatprep.subr.bf16.mxu0 0
        %2793 = vmatpush1.bf16.msra.mxu0 0
        %2794 = vmatprep.subr.bf16.mxu0 0
        %2795 = vmatpush1.bf16.msra.mxu0 0
        %2796 = vmatprep.subr.bf16.mxu0 0
        %2797 = vmatpush1.bf16.msra.mxu0 0
        %2798 = vmatprep.subr.bf16.mxu0 0
        %2799 = vmatpush1.bf16.msra.mxu0 0
        %2800 = vmatprep.subr.bf16.mxu0 0
        %2801 = vmatpush1.bf16.msra.mxu0 0
        %2802 = vmatprep.subr.bf16.mxu0 0
        %2803 = vmatpush1.bf16.msra.mxu0 0
        %2804 = vmatprep.subr.bf16.mxu0 0
        %2805 = vmatpush1.bf16.msra.mxu0 0
        %2806 = vmatprep.mubr.bf16.mxu0 0
        %2807 = vmatmul.mubr.bf16.gmra.mrb[0].mxu0 %v2451
        %v2808 = vpop.f32.mrb[0].mxu0
        %v2809 = vadd.f32 %v2760, %v2808
        %v2810 = vpop.f32.mrb[0].mxu0
        %v2811 = vpop.f32.mrb[0].mxu0
        %v2812 = vadd.f32 %v2760, %v2811
        %v2813 = vpop.f32.mrb[0].mxu0
        %2814 = vdwg.mxu0
        %v2816 = vlaneseq
        %v2817 = vshrl.u32 %v2816, 7
        %v2818 = vsub.s32 0, %v2817
        %v2819 = vrot.slane %v2696, %v2818
        %v2825 = vunpack.c.l.b16 %v2687
        %v2826 = vunpack.c.l.b16 %v2688
        %v2827 = vunpack.c.l.b16 %v2689
        %v2828 = vunpack.c.l.b16 %v2690
        %v2829 = vpack.c.b16 %v2826, %v2825
        %v2830 = vpack.c.b16 %v2828, %v2827
        %2833 = vmatprep.subr.bf16.mxu0 0
        %2834 = vmatpush1.bf16.msra.mxu0 %v2829
        %2835 = vmatprep.subr.bf16.mxu0 0
        %2836 = vmatpush1.bf16.msra.mxu0 %v2830
        %2837 = vmatprep.subr.bf16.mxu0 0
        %2838 = vmatpush1.bf16.msra.mxu0 0
        %2839 = vmatprep.subr.bf16.mxu0 0
        %2840 = vmatpush1.bf16.msra.mxu0 0
        %2841 = vmatprep.subr.bf16.mxu0 0
        %2842 = vmatpush1.bf16.msra.mxu0 0
        %2843 = vmatprep.subr.bf16.mxu0 0
        %2844 = vmatpush1.bf16.msra.mxu0 0
        %2845 = vmatprep.subr.bf16.mxu0 0
        %2846 = vmatpush1.bf16.msra.mxu0 0
        %2847 = vmatprep.subr.bf16.mxu0 0
        %2848 = vmatpush1.bf16.msra.mxu0 0
        %2849 = vmatprep.subr.bf16.mxu0 0
        %2850 = vmatpush1.bf16.msra.mxu0 0
        %2851 = vmatprep.subr.bf16.mxu0 0
        %2852 = vmatpush1.bf16.msra.mxu0 0
        %2853 = vmatprep.subr.bf16.mxu0 0
        %2854 = vmatpush1.bf16.msra.mxu0 0
        %2855 = vmatprep.subr.bf16.mxu0 0
        %2856 = vmatpush1.bf16.msra.mxu0 0
        %2857 = vmatprep.subr.bf16.mxu0 0
        %2858 = vmatpush1.bf16.msra.mxu0 0
        %2859 = vmatprep.subr.bf16.mxu0 0
        %2860 = vmatpush1.bf16.msra.mxu0 0
        %2861 = vmatprep.subr.bf16.mxu0 0
        %2862 = vmatpush1.bf16.msra.mxu0 0
        %2863 = vmatprep.subr.bf16.mxu0 0
        %2864 = vmatpush1.bf16.msra.mxu0 0
        %2865 = vmatprep.mubr.bf16.mxu0 0
        %2866 = vmatmul.mubr.bf16.gmra.mrb[0].mxu0 %v2451
        %v2867 = vpop.f32.mrb[0].mxu0
        %v2868 = vadd.f32 %v2819, %v2867
        %v2869 = vpop.f32.mrb[0].mxu0
        %v2870 = vpop.f32.mrb[0].mxu0
        %v2871 = vadd.f32 %v2819, %v2870
        %v2872 = vpop.f32.mrb[0].mxu0
        %2873 = vdwg.mxu0
        %v2874 = vpack.c.bf16 %v2753, %v2750
        %v2875 = vpack.c.bf16 %v2812, %v2809
        %v2877 = vsel %vm1005, %v2874, 0
        %v2880 = vsel %vm1005, %v2875, 0
        %2882 = vmatprep.subr.bf16.mxu0 0
        %2883 = vmatpush1.bf16.xpose.msra.mxu0 %v2880
        %2884 = vmatprep.subr.bf16.mxu0 0
        %2885 = vmatpush1.bf16.xpose.msra.mxu0 0
        %2886 = vmatprep.subr.bf16.mxu0 0
        %2887 = vmatpush1.bf16.xpose.msra.mxu0 0
        %2888 = vmatprep.subr.bf16.mxu0 0
        %2889 = vmatpush1.bf16.xpose.msra.mxu0 0
        %2890 = vmatprep.subr.bf16.mxu0 0
        %2891 = vmatpush1.bf16.xpose.msra.mxu0 0
        %2892 = vmatprep.subr.bf16.mxu0 0
        %2893 = vmatpush1.bf16.xpose.msra.mxu0 0
        %2894 = vmatprep.subr.bf16.mxu0 0
        %2895 = vmatpush1.bf16.xpose.msra.mxu0 0
        %2896 = vmatprep.subr.bf16.mxu0 0
        %2897 = vmatpush1.bf16.xpose.msra.mxu0 0
        %2898 = vmatprep.subr.bf16.mxu0 0
        %2899 = vmatpush1.bf16.xpose.msra.mxu0 0
        %2900 = vmatprep.subr.bf16.mxu0 0
        %2901 = vmatpush1.bf16.xpose.msra.mxu0 0
        %2902 = vmatprep.subr.bf16.mxu0 0
        %2903 = vmatpush1.bf16.xpose.msra.mxu0 0
        %2904 = vmatprep.subr.bf16.mxu0 0
        %2905 = vmatpush1.bf16.xpose.msra.mxu0 0
        %2906 = vmatprep.subr.bf16.mxu0 0
        %2907 = vmatpush1.bf16.xpose.msra.mxu0 0
        %2908 = vmatprep.subr.bf16.mxu0 0
        %2909 = vmatpush1.bf16.xpose.msra.mxu0 0
        %2910 = vmatprep.subr.bf16.mxu0 0
        %2911 = vmatpush1.bf16.xpose.msra.mxu0 0
        %2912 = vmatprep.subr.bf16.mxu0 0
        %2913 = vmatpush1.bf16.xpose.msra.mxu0 0
        %2914 = vmatprep.mubr.bf16.mxu0 0
        %2915 = vmatmul.mubr.bf16.gmra.mrb[0].mxu0 %v2877
        %v2916 = vpop.f32.mrb[0].mxu0
        %v2917 = vadd.f32 0.0, %v2916
        %v2918 = vpop.f32.mrb[0].mxu0
        %v2919 = vpop.f32.mrb[0].mxu0
        %v2920 = vadd.f32 0.0, %v2919
        %v2921 = vpop.f32.mrb[0].mxu0
        %2922 = vdwg.mxu0
        %v2923 = vmul.f32 %v2917, 0.35355338
        %v2924 = vmul.f32 %v2920, 0.35355338
        %v2925 = vadd.f32 %v2923, %v2343
        %v2926 = vadd.f32 %v2924, %v2344
        %v2927 = vsel %vm1057, %v2925, -inf
        %2928 = vmax.xlane.f32.xlu0 %v2927
        %v2929 = vpop.xlane.xlu0 %2928
        %v2930 = vsel %vm1057, %v2926, -inf
        %2931 = vmax.xlane.f32.xlu0 %v2930
        %v2932 = vpop.xlane.xlu0 %2931
        %v2933 = vsub.f32 %v2925, %v2929
        %v2934 = vsub.f32 %v2926, %v2932
        %v2935 = vmul.f32 %v2933, 1.442695
        %v2936 = vpow.pop %v2935
        %v2937 = vmul.f32 %v2934, 1.442695
        %v2938 = vpow.pop %v2937
        %v2939 = vsel %vm1057, %v2936, 0.0
        %2940 = vadd.xlane.f32.xlu0 %v2939
        %v2941 = vpop.xlane.xlu0 %2940
        %v2942 = vsel %vm1057, %v2938, 0.0
        %2943 = vadd.xlane.f32.xlu0 %v2942
        %v2944 = vpop.xlane.xlu0 %2943
        %v2945 = vrcp.pop %v2941
        %v2946 = vrcp.pop %v2944
        %v2947 = vmul.f32 %v2936, %v2945
        %v2948 = vmul.f32 %v2938, %v2946
        %v2949 = vpack.c.bf16 %v2948, %v2947
        %v2950 = vpack.c.bf16 %v2871, %v2868
        %v2952 = vsel %vm1057, %v2949, 0
        %2954 = vmatprep.subr.bf16.mxu0 0
        %2955 = vmatpush1.bf16.msra.mxu0 %v2950
        %2956 = vmatprep.subr.bf16.mxu0 0
        %2957 = vmatpush1.bf16.msra.mxu0 0
        %2958 = vmatprep.subr.bf16.mxu0 0
        %2959 = vmatpush1.bf16.msra.mxu0 0
        %2960 = vmatprep.subr.bf16.mxu0 0
        %2961 = vmatpush1.bf16.msra.mxu0 0
        %2962 = vmatprep.subr.bf16.mxu0 0
        %2963 = vmatpush1.bf16.msra.mxu0 0
        %2964 = vmatprep.subr.bf16.mxu0 0
        %2965 = vmatpush1.bf16.msra.mxu0 0
        %2966 = vmatprep.subr.bf16.mxu0 0
        %2967 = vmatpush1.bf16.msra.mxu0 0
        %2968 = vmatprep.subr.bf16.mxu0 0
        %2969 = vmatpush1.bf16.msra.mxu0 0
        %2970 = vmatprep.subr.bf16.mxu0 0
        %2971 = vmatpush1.bf16.msra.mxu0 0
        %2972 = vmatprep.subr.bf16.mxu0 0
        %2973 = vmatpush1.bf16.msra.mxu0 0
        %2974 = vmatprep.subr.bf16.mxu0 0
        %2975 = vmatpush1.bf16.msra.mxu0 0
        %2976 = vmatprep.subr.bf16.mxu0 0
        %2977 = vmatpush1.bf16.msra.mxu0 0
        %2978 = vmatprep.subr.bf16.mxu0 0
        %2979 = vmatpush1.bf16.msra.mxu0 0
        %2980 = vmatprep.subr.bf16.mxu0 0
        %2981 = vmatpush1.bf16.msra.mxu0 0
        %2982 = vmatprep.subr.bf16.mxu0 0
        %2983 = vmatpush1.bf16.msra.mxu0 0
        %2984 = vmatprep.subr.bf16.mxu0 0
        %2985 = vmatpush1.bf16.msra.mxu0 0
        %2986 = vmatprep.mubr.bf16.mxu0 0
        %2987 = vmatmul.mubr.bf16.gmra.mrb[0].mxu0 %v2952
        %v2988 = vpop.f32.mrb[0].mxu0
        %v2989 = vadd.f32 0.0, %v2988
        %v2990 = vpop.f32.mrb[0].mxu0
        %v2991 = vpop.f32.mrb[0].mxu0
        %v2992 = vadd.f32 0.0, %v2991
        %v2993 = vpop.f32.mrb[0].mxu0
        %2994 = vdwg.mxu0
        %v2995 = vpack.c.bf16 %v2992, %v2989
        %s2996 = scalar_lea.vmem %s758, 4
        %v2997 = vld [vmem:[%s2996] sm:$0xf]
        %v2999 = vsel %vm1005, %v2995, 0
        %v3002 = vsel %vm1453, %v2997, 0
        %3004 = vmatprep.subr.bf16.mxu0 0
        %3005 = vmatpush1.bf16.msra.mxu0 %v3002
        %3006 = vmatprep.subr.bf16.mxu0 0
        %3007 = vmatpush1.bf16.msra.mxu0 0
        %3008 = vmatprep.subr.bf16.mxu0 0
        %3009 = vmatpush1.bf16.msra.mxu0 0
        %3010 = vmatprep.subr.bf16.mxu0 0
        %3011 = vmatpush1.bf16.msra.mxu0 0
        %3012 = vmatprep.subr.bf16.mxu0 0
        %3013 = vmatpush1.bf16.msra.mxu0 0
        %3014 = vmatprep.subr.bf16.mxu0 0
        %3015 = vmatpush1.bf16.msra.mxu0 0
        %3016 = vmatprep.subr.bf16.mxu0 0
        %3017 = vmatpush1.bf16.msra.mxu0 0
        %3018 = vmatprep.subr.bf16.mxu0 0
        %3019 = vmatpush1.bf16.msra.mxu0 0
        %3020 = vmatprep.subr.bf16.mxu0 0
        %3021 = vmatpush1.bf16.msra.mxu0 0
        %3022 = vmatprep.subr.bf16.mxu0 0
        %3023 = vmatpush1.bf16.msra.mxu0 0
        %3024 = vmatprep.subr.bf16.mxu0 0
        %3025 = vmatpush1.bf16.msra.mxu0 0
        %3026 = vmatprep.subr.bf16.mxu0 0
        %3027 = vmatpush1.bf16.msra.mxu0 0
        %3028 = vmatprep.subr.bf16.mxu0 0
        %3029 = vmatpush1.bf16.msra.mxu0 0
        %3030 = vmatprep.subr.bf16.mxu0 0
        %3031 = vmatpush1.bf16.msra.mxu0 0
        %3032 = vmatprep.subr.bf16.mxu0 0
        %3033 = vmatpush1.bf16.msra.mxu0 0
        %3034 = vmatprep.subr.bf16.mxu0 0
        %3035 = vmatpush1.bf16.msra.mxu0 0
        %3036 = vmatprep.mubr.bf16.mxu0 0
        %3037 = vmatmul.mubr.bf16.gmra.mrb[0].mxu0 %v2999
        %v3038 = vpop.f32.mrb[0].mxu0
        %v3039 = vadd.f32 0.0, %v3038
        %v3040 = vpop.f32.mrb[0].mxu0
        %v3041 = vpop.f32.mrb[0].mxu0
        %v3042 = vadd.f32 0.0, %v3041
        %v3043 = vpop.f32.mrb[0].mxu0
        %3044 = vdwg.mxu0
        %v3046 = vsel %vm1005, %v2674, 0
        %v3049 = vsel %vm1453, %v2675, 0
        %3051 = vmatprep.subr.bf16.mxu0 0
        %3052 = vmatpush1.bf16.msra.mxu0 %v3049
        %3053 = vmatprep.subr.bf16.mxu0 0
        %3054 = vmatpush1.bf16.msra.mxu0 0
        %3055 = vmatprep.subr.bf16.mxu0 0
        %3056 = vmatpush1.bf16.msra.mxu0 0
        %3057 = vmatprep.subr.bf16.mxu0 0
        %3058 = vmatpush1.bf16.msra.mxu0 0
        %3059 = vmatprep.subr.bf16.mxu0 0
        %3060 = vmatpush1.bf16.msra.mxu0 0
        %3061 = vmatprep.subr.bf16.mxu0 0
        %3062 = vmatpush1.bf16.msra.mxu0 0
        %3063 = vmatprep.subr.bf16.mxu0 0
        %3064 = vmatpush1.bf16.msra.mxu0 0
        %3065 = vmatprep.subr.bf16.mxu0 0
        %3066 = vmatpush1.bf16.msra.mxu0 0
        %3067 = vmatprep.subr.bf16.mxu0 0
        %3068 = vmatpush1.bf16.msra.mxu0 0
        %3069 = vmatprep.subr.bf16.mxu0 0
        %3070 = vmatpush1.bf16.msra.mxu0 0
        %3071 = vmatprep.subr.bf16.mxu0 0
        %3072 = vmatpush1.bf16.msra.mxu0 0
        %3073 = vmatprep.subr.bf16.mxu0 0
        %3074 = vmatpush1.bf16.msra.mxu0 0
        %3075 = vmatprep.subr.bf16.mxu0 0
        %3076 = vmatpush1.bf16.msra.mxu0 0
        %3077 = vmatprep.subr.bf16.mxu0 0
        %3078 = vmatpush1.bf16.msra.mxu0 0
        %3079 = vmatprep.subr.bf16.mxu0 0
        %3080 = vmatpush1.bf16.msra.mxu0 0
        %3081 = vmatprep.subr.bf16.mxu0 0
        %3082 = vmatpush1.bf16.msra.mxu0 0
        %3083 = vmatprep.mubr.bf16.mxu0 0
        %3084 = vmatmul.mubr.bf16.gmra.mrb[0].mxu0 %v3046
        %v3085 = vpop.f32.mrb[0].mxu0
        %v3086 = vadd.f32 %v3039, %v3085
        %v3087 = vpop.f32.mrb[0].mxu0
        %v3088 = vpop.f32.mrb[0].mxu0
        %v3089 = vadd.f32 %v3042, %v3088
        %v3090 = vpop.f32.mrb[0].mxu0
        %3091 = vdwg.mxu0
        %s3092 = scalar_lea.vmem %s749, 32
        %v3093 = vld [vmem:[%s3092] sm:$0xf]
        %v3094 = vld [vmem:[%s3092 + $0x4] sm:$0xf]
        %v3095 = vld [vmem:[%s3092 + $0x8] sm:$0xf]
        %v3096 = vld [vmem:[%s3092 + $0xc] sm:$0xf]
        %s3097 = scalar_lea.vmem %s749, 96
        %v3098 = vld [vmem:[%s3097] sm:$0xf]
        %v3099 = vld [vmem:[%s3097 + $0x4] sm:$0xf]
        %v3100 = vld [vmem:[%s3097 + $0x8] sm:$0xf]
        %v3101 = vld [vmem:[%s3097 + $0xc] sm:$0xf]
        %s3102 = scalar_lea.vmem %s749, 160
        %v3103 = vld [vmem:[%s3102] sm:$0xf]
        %v3104 = vld [vmem:[%s3102 + $0x4] sm:$0xf]
        %v3105 = vld [vmem:[%s3102 + $0x8] sm:$0xf]
        %v3106 = vld [vmem:[%s3102 + $0xc] sm:$0xf]
        %s3107 = scalar_lea.vmem %s753, 2
        %v3108 = vld [vmem:[%s3107] sm:$0x1]
        %s3109 = scalar_lea.vmem %s753, 6
        %v3110 = vld [vmem:[%s3109] sm:$0x1]
        %s3111 = scalar_lea.vmem %s753, 10
        %v3112 = vld [vmem:[%s3111] sm:$0x1]
        %v3114 = vlaneseq
        %v3115 = vshrl.u32 %v3114, 7
        %v3116 = vsub.s32 0, %v3115
        %v3117 = vrot.slane %v3108, %v3116
        %v3123 = vunpack.c.l.b16 %v3093
        %v3124 = vunpack.c.l.b16 %v3094
        %v3125 = vunpack.c.l.b16 %v3095
        %v3126 = vunpack.c.l.b16 %v3096
        %v3127 = vpack.c.b16 %v3124, %v3123
        %v3128 = vpack.c.b16 %v3126, %v3125
        %3131 = vmatprep.subr.bf16.mxu0 0
        %3132 = vmatpush1.bf16.msra.mxu0 %v3127
        %3133 = vmatprep.subr.bf16.mxu0 0
        %3134 = vmatpush1.bf16.msra.mxu0 %v3128
        %3135 = vmatprep.subr.bf16.mxu0 0
        %3136 = vmatpush1.bf16.msra.mxu0 0
        %3137 = vmatprep.subr.bf16.mxu0 0
        %3138 = vmatpush1.bf16.msra.mxu0 0
        %3139 = vmatprep.subr.bf16.mxu0 0
        %3140 = vmatpush1.bf16.msra.mxu0 0
        %3141 = vmatprep.subr.bf16.mxu0 0
        %3142 = vmatpush1.bf16.msra.mxu0 0
        %3143 = vmatprep.subr.bf16.mxu0 0
        %3144 = vmatpush1.bf16.msra.mxu0 0
        %3145 = vmatprep.subr.bf16.mxu0 0
        %3146 = vmatpush1.bf16.msra.mxu0 0
        %3147 = vmatprep.subr.bf16.mxu0 0
        %3148 = vmatpush1.bf16.msra.mxu0 0
        %3149 = vmatprep.subr.bf16.mxu0 0
        %3150 = vmatpush1.bf16.msra.mxu0 0
        %3151 = vmatprep.subr.bf16.mxu0 0
        %3152 = vmatpush1.bf16.msra.mxu0 0
        %3153 = vmatprep.subr.bf16.mxu0 0
        %3154 = vmatpush1.bf16.msra.mxu0 0
        %3155 = vmatprep.subr.bf16.mxu0 0
        %3156 = vmatpush1.bf16.msra.mxu0 0
        %3157 = vmatprep.subr.bf16.mxu0 0
        %3158 = vmatpush1.bf16.msra.mxu0 0
        %3159 = vmatprep.subr.bf16.mxu0 0
        %3160 = vmatpush1.bf16.msra.mxu0 0
        %3161 = vmatprep.subr.bf16.mxu0 0
        %3162 = vmatpush1.bf16.msra.mxu0 0
        %3163 = vmatprep.mubr.bf16.mxu0 0
        %3164 = vmatmul.mubr.bf16.gmra.mrb[0].mxu0 %v2384
        %v3165 = vpop.f32.mrb[0].mxu0
        %v3166 = vadd.f32 %v3117, %v3165
        %v3167 = vpop.f32.mrb[0].mxu0
        %v3168 = vpop.f32.mrb[0].mxu0
        %v3169 = vadd.f32 %v3117, %v3168
        %v3170 = vpop.f32.mrb[0].mxu0
        %3171 = vdwg.mxu0
        %v3173 = vlaneseq
        %v3174 = vshrl.u32 %v3173, 7
        %v3175 = vsub.s32 0, %v3174
        %v3176 = vrot.slane %v3110, %v3175
        %v3182 = vunpack.c.l.b16 %v3098
        %v3183 = vunpack.c.l.b16 %v3099
        %v3184 = vunpack.c.l.b16 %v3100
        %v3185 = vunpack.c.l.b16 %v3101
        %v3186 = vpack.c.b16 %v3183, %v3182
        %v3187 = vpack.c.b16 %v3185, %v3184
        %3190 = vmatprep.subr.bf16.mxu0 0
        %3191 = vmatpush1.bf16.msra.mxu0 %v3186
        %3192 = vmatprep.subr.bf16.mxu0 0
        %3193 = vmatpush1.bf16.msra.mxu0 %v3187
        %3194 = vmatprep.subr.bf16.mxu0 0
        %3195 = vmatpush1.bf16.msra.mxu0 0
        %3196 = vmatprep.subr.bf16.mxu0 0
        %3197 = vmatpush1.bf16.msra.mxu0 0
        %3198 = vmatprep.subr.bf16.mxu0 0
        %3199 = vmatpush1.bf16.msra.mxu0 0
        %3200 = vmatprep.subr.bf16.mxu0 0
        %3201 = vmatpush1.bf16.msra.mxu0 0
        %3202 = vmatprep.subr.bf16.mxu0 0
        %3203 = vmatpush1.bf16.msra.mxu0 0
        %3204 = vmatprep.subr.bf16.mxu0 0
        %3205 = vmatpush1.bf16.msra.mxu0 0
        %3206 = vmatprep.subr.bf16.mxu0 0
        %3207 = vmatpush1.bf16.msra.mxu0 0
        %3208 = vmatprep.subr.bf16.mxu0 0
        %3209 = vmatpush1.bf16.msra.mxu0 0
        %3210 = vmatprep.subr.bf16.mxu0 0
        %3211 = vmatpush1.bf16.msra.mxu0 0
        %3212 = vmatprep.subr.bf16.mxu0 0
        %3213 = vmatpush1.bf16.msra.mxu0 0
        %3214 = vmatprep.subr.bf16.mxu0 0
        %3215 = vmatpush1.bf16.msra.mxu0 0
        %3216 = vmatprep.subr.bf16.mxu0 0
        %3217 = vmatpush1.bf16.msra.mxu0 0
        %3218 = vmatprep.subr.bf16.mxu0 0
        %3219 = vmatpush1.bf16.msra.mxu0 0
        %3220 = vmatprep.subr.bf16.mxu0 0
        %3221 = vmatpush1.bf16.msra.mxu0 0
        %3222 = vmatprep.mubr.bf16.mxu0 0
        %3223 = vmatmul.mubr.bf16.gmra.mrb[0].mxu0 %v2451
        %v3224 = vpop.f32.mrb[0].mxu0
        %v3225 = vadd.f32 %v3176, %v3224
        %v3226 = vpop.f32.mrb[0].mxu0
        %v3227 = vpop.f32.mrb[0].mxu0
        %v3228 = vadd.f32 %v3176, %v3227
        %v3229 = vpop.f32.mrb[0].mxu0
        %3230 = vdwg.mxu0
        %v3232 = vlaneseq
        %v3233 = vshrl.u32 %v3232, 7
        %v3234 = vsub.s32 0, %v3233
        %v3235 = vrot.slane %v3112, %v3234
        %v3241 = vunpack.c.l.b16 %v3103
        %v3242 = vunpack.c.l.b16 %v3104
        %v3243 = vunpack.c.l.b16 %v3105
        %v3244 = vunpack.c.l.b16 %v3106
        %v3245 = vpack.c.b16 %v3242, %v3241
        %v3246 = vpack.c.b16 %v3244, %v3243
        %3249 = vmatprep.subr.bf16.mxu0 0
        %3250 = vmatpush1.bf16.msra.mxu0 %v3245
        %3251 = vmatprep.subr.bf16.mxu0 0
        %3252 = vmatpush1.bf16.msra.mxu0 %v3246
        %3253 = vmatprep.subr.bf16.mxu0 0
        %3254 = vmatpush1.bf16.msra.mxu0 0
        %3255 = vmatprep.subr.bf16.mxu0 0
        %3256 = vmatpush1.bf16.msra.mxu0 0
        %3257 = vmatprep.subr.bf16.mxu0 0
        %3258 = vmatpush1.bf16.msra.mxu0 0
        %3259 = vmatprep.subr.bf16.mxu0 0
        %3260 = vmatpush1.bf16.msra.mxu0 0
        %3261 = vmatprep.subr.bf16.mxu0 0
        %3262 = vmatpush1.bf16.msra.mxu0 0
        %3263 = vmatprep.subr.bf16.mxu0 0
        %3264 = vmatpush1.bf16.msra.mxu0 0
        %3265 = vmatprep.subr.bf16.mxu0 0
        %3266 = vmatpush1.bf16.msra.mxu0 0
        %3267 = vmatprep.subr.bf16.mxu0 0
        %3268 = vmatpush1.bf16.msra.mxu0 0
        %3269 = vmatprep.subr.bf16.mxu0 0
        %3270 = vmatpush1.bf16.msra.mxu0 0
        %3271 = vmatprep.subr.bf16.mxu0 0
        %3272 = vmatpush1.bf16.msra.mxu0 0
        %3273 = vmatprep.subr.bf16.mxu0 0
        %3274 = vmatpush1.bf16.msra.mxu0 0
        %3275 = vmatprep.subr.bf16.mxu0 0
        %3276 = vmatpush1.bf16.msra.mxu0 0
        %3277 = vmatprep.subr.bf16.mxu0 0
        %3278 = vmatpush1.bf16.msra.mxu0 0
        %3279 = vmatprep.subr.bf16.mxu0 0
        %3280 = vmatpush1.bf16.msra.mxu0 0
        %3281 = vmatprep.mubr.bf16.mxu0 0
        %3282 = vmatmul.mubr.bf16.gmra.mrb[0].mxu0 %v2451
        %v3283 = vpop.f32.mrb[0].mxu0
        %v3284 = vadd.f32 %v3235, %v3283
        %v3285 = vpop.f32.mrb[0].mxu0
        %v3286 = vpop.f32.mrb[0].mxu0
        %v3287 = vadd.f32 %v3235, %v3286
        %v3288 = vpop.f32.mrb[0].mxu0
        %3289 = vdwg.mxu0
        %v3290 = vpack.c.bf16 %v3169, %v3166
        %v3291 = vpack.c.bf16 %v3228, %v3225
        %v3293 = vsel %vm1005, %v3290, 0
        %v3296 = vsel %vm1005, %v3291, 0
        %3298 = vmatprep.subr.bf16.mxu0 0
        %3299 = vmatpush1.bf16.xpose.msra.mxu0 %v3296
        %3300 = vmatprep.subr.bf16.mxu0 0
        %3301 = vmatpush1.bf16.xpose.msra.mxu0 0
        %3302 = vmatprep.subr.bf16.mxu0 0
        %3303 = vmatpush1.bf16.xpose.msra.mxu0 0
        %3304 = vmatprep.subr.bf16.mxu0 0
        %3305 = vmatpush1.bf16.xpose.msra.mxu0 0
        %3306 = vmatprep.subr.bf16.mxu0 0
        %3307 = vmatpush1.bf16.xpose.msra.mxu0 0
        %3308 = vmatprep.subr.bf16.mxu0 0
        %3309 = vmatpush1.bf16.xpose.msra.mxu0 0
        %3310 = vmatprep.subr.bf16.mxu0 0
        %3311 = vmatpush1.bf16.xpose.msra.mxu0 0
        %3312 = vmatprep.subr.bf16.mxu0 0
        %3313 = vmatpush1.bf16.xpose.msra.mxu0 0
        %3314 = vmatprep.subr.bf16.mxu0 0
        %3315 = vmatpush1.bf16.xpose.msra.mxu0 0
        %3316 = vmatprep.subr.bf16.mxu0 0
        %3317 = vmatpush1.bf16.xpose.msra.mxu0 0
        %3318 = vmatprep.subr.bf16.mxu0 0
        %3319 = vmatpush1.bf16.xpose.msra.mxu0 0
        %3320 = vmatprep.subr.bf16.mxu0 0
        %3321 = vmatpush1.bf16.xpose.msra.mxu0 0
        %3322 = vmatprep.subr.bf16.mxu0 0
        %3323 = vmatpush1.bf16.xpose.msra.mxu0 0
        %3324 = vmatprep.subr.bf16.mxu0 0
        %3325 = vmatpush1.bf16.xpose.msra.mxu0 0
        %3326 = vmatprep.subr.bf16.mxu0 0
        %3327 = vmatpush1.bf16.xpose.msra.mxu0 0
        %3328 = vmatprep.subr.bf16.mxu0 0
        %3329 = vmatpush1.bf16.xpose.msra.mxu0 0
        %3330 = vmatprep.mubr.bf16.mxu0 0
        %3331 = vmatmul.mubr.bf16.gmra.mrb[0].mxu0 %v3293
        %v3332 = vpop.f32.mrb[0].mxu0
        %v3333 = vadd.f32 0.0, %v3332
        %v3334 = vpop.f32.mrb[0].mxu0
        %v3335 = vpop.f32.mrb[0].mxu0
        %v3336 = vadd.f32 0.0, %v3335
        %v3337 = vpop.f32.mrb[0].mxu0
        %3338 = vdwg.mxu0
        %v3339 = vmul.f32 %v3333, 0.35355338
        %v3340 = vmul.f32 %v3336, 0.35355338
        %v3341 = vadd.f32 %v3339, %v2343
        %v3342 = vadd.f32 %v3340, %v2344
        %v3343 = vsel %vm1057, %v3341, -inf
        %3344 = vmax.xlane.f32.xlu0 %v3343
        %v3345 = vpop.xlane.xlu0 %3344
        %v3346 = vsel %vm1057, %v3342, -inf
        %3347 = vmax.xlane.f32.xlu0 %v3346
        %v3348 = vpop.xlane.xlu0 %3347
        %v3349 = vsub.f32 %v3341, %v3345
        %v3350 = vsub.f32 %v3342, %v3348
        %v3351 = vmul.f32 %v3349, 1.442695
        %v3352 = vpow.pop %v3351
        %v3353 = vmul.f32 %v3350, 1.442695
        %v3354 = vpow.pop %v3353
        %v3355 = vsel %vm1057, %v3352, 0.0
        %3356 = vadd.xlane.f32.xlu0 %v3355
        %v3357 = vpop.xlane.xlu0 %3356
        %v3358 = vsel %vm1057, %v3354, 0.0
        %3359 = vadd.xlane.f32.xlu0 %v3358
        %v3360 = vpop.xlane.xlu0 %3359
        %v3361 = vrcp.pop %v3357
        %v3362 = vrcp.pop %v3360
        %v3363 = vmul.f32 %v3352, %v3361
        %v3364 = vmul.f32 %v3354, %v3362
        %v3365 = vpack.c.bf16 %v3364, %v3363
        %v3366 = vpack.c.bf16 %v3287, %v3284
        %v3368 = vsel %vm1057, %v3365, 0
        %3370 = vmatprep.subr.bf16.mxu0 0
        %3371 = vmatpush1.bf16.msra.mxu0 %v3366
        %3372 = vmatprep.subr.bf16.mxu0 0
        %3373 = vmatpush1.bf16.msra.mxu0 0
        %3374 = vmatprep.subr.bf16.mxu0 0
        %3375 = vmatpush1.bf16.msra.mxu0 0
        %3376 = vmatprep.subr.bf16.mxu0 0
        %3377 = vmatpush1.bf16.msra.mxu0 0
        %3378 = vmatprep.subr.bf16.mxu0 0
        %3379 = vmatpush1.bf16.msra.mxu0 0
        %3380 = vmatprep.subr.bf16.mxu0 0
        %3381 = vmatpush1.bf16.msra.mxu0 0
        %3382 = vmatprep.subr.bf16.mxu0 0
        %3383 = vmatpush1.bf16.msra.mxu0 0
        %3384 = vmatprep.subr.bf16.mxu0 0
        %3385 = vmatpush1.bf16.msra.mxu0 0
        %3386 = vmatprep.subr.bf16.mxu0 0
        %3387 = vmatpush1.bf16.msra.mxu0 0
        %3388 = vmatprep.subr.bf16.mxu0 0
        %3389 = vmatpush1.bf16.msra.mxu0 0
        %3390 = vmatprep.subr.bf16.mxu0 0
        %3391 = vmatpush1.bf16.msra.mxu0 0
        %3392 = vmatprep.subr.bf16.mxu0 0
        %3393 = vmatpush1.bf16.msra.mxu0 0
        %3394 = vmatprep.subr.bf16.mxu0 0
        %3395 = vmatpush1.bf16.msra.mxu0 0
        %3396 = vmatprep.subr.bf16.mxu0 0
        %3397 = vmatpush1.bf16.msra.mxu0 0
        %3398 = vmatprep.subr.bf16.mxu0 0
        %3399 = vmatpush1.bf16.msra.mxu0 0
        %3400 = vmatprep.subr.bf16.mxu0 0
        %3401 = vmatpush1.bf16.msra.mxu0 0
        %3402 = vmatprep.mubr.bf16.mxu0 0
        %3403 = vmatmul.mubr.bf16.gmra.mrb[0].mxu0 %v3368
        %v3404 = vpop.f32.mrb[0].mxu0
        %v3405 = vadd.f32 0.0, %v3404
        %v3406 = vpop.f32.mrb[0].mxu0
        %v3407 = vpop.f32.mrb[0].mxu0
        %v3408 = vadd.f32 0.0, %v3407
        %v3409 = vpop.f32.mrb[0].mxu0
        %3410 = vdwg.mxu0
        %v3411 = vpack.c.bf16 %v3408, %v3405
        %s3412 = scalar_lea.vmem %s758, 8
        %v3413 = vld [vmem:[%s3412] sm:$0xf]
        %v3415 = vsel %vm1005, %v3411, 0
        %v3418 = vsel %vm1453, %v3413, 0
        %3420 = vmatprep.subr.bf16.mxu0 0
        %3421 = vmatpush1.bf16.msra.mxu0 %v3418
        %3422 = vmatprep.subr.bf16.mxu0 0
        %3423 = vmatpush1.bf16.msra.mxu0 0
        %3424 = vmatprep.subr.bf16.mxu0 0
        %3425 = vmatpush1.bf16.msra.mxu0 0
        %3426 = vmatprep.subr.bf16.mxu0 0
        %3427 = vmatpush1.bf16.msra.mxu0 0
        %3428 = vmatprep.subr.bf16.mxu0 0
        %3429 = vmatpush1.bf16.msra.mxu0 0
        %3430 = vmatprep.subr.bf16.mxu0 0
        %3431 = vmatpush1.bf16.msra.mxu0 0
        %3432 = vmatprep.subr.bf16.mxu0 0
        %3433 = vmatpush1.bf16.msra.mxu0 0
        %3434 = vmatprep.subr.bf16.mxu0 0
        %3435 = vmatpush1.bf16.msra.mxu0 0
        %3436 = vmatprep.subr.bf16.mxu0 0
        %3437 = vmatpush1.bf16.msra.mxu0 0
        %3438 = vmatprep.subr.bf16.mxu0 0
        %3439 = vmatpush1.bf16.msra.mxu0 0
        %3440 = vmatprep.subr.bf16.mxu0 0
        %3441 = vmatpush1.bf16.msra.mxu0 0
        %3442 = vmatprep.subr.bf16.mxu0 0
        %3443 = vmatpush1.bf16.msra.mxu0 0
        %3444 = vmatprep.subr.bf16.mxu0 0
        %3445 = vmatpush1.bf16.msra.mxu0 0
        %3446 = vmatprep.subr.bf16.mxu0 0
        %3447 = vmatpush1.bf16.msra.mxu0 0
        %3448 = vmatprep.subr.bf16.mxu0 0
        %3449 = vmatpush1.bf16.msra.mxu0 0
        %3450 = vmatprep.subr.bf16.mxu0 0
        %3451 = vmatpush1.bf16.msra.mxu0 0
        %3452 = vmatprep.mubr.bf16.mxu0 0
        %3453 = vmatmul.mubr.bf16.gmra.mrb[0].mxu0 %v3415
        %v3454 = vpop.f32.mrb[0].mxu0
        %v3455 = vadd.f32 0.0, %v3454
        %v3456 = vpop.f32.mrb[0].mxu0
        %v3457 = vpop.f32.mrb[0].mxu0
        %v3458 = vadd.f32 0.0, %v3457
        %v3459 = vpop.f32.mrb[0].mxu0
        %3460 = vdwg.mxu0
        %v3461 = vadd.f32 %v3086, %v3455
        %v3462 = vadd.f32 %v3089, %v3458
        %s3463 = scalar_lea.vmem %s749, 48
        %v3464 = vld [vmem:[%s3463] sm:$0xf]
        %v3465 = vld [vmem:[%s3463 + $0x4] sm:$0xf]
        %v3466 = vld [vmem:[%s3463 + $0x8] sm:$0xf]
        %v3467 = vld [vmem:[%s3463 + $0xc] sm:$0xf]
        %s3468 = scalar_lea.vmem %s749, 112
        %v3469 = vld [vmem:[%s3468] sm:$0xf]
        %v3470 = vld [vmem:[%s3468 + $0x4] sm:$0xf]
        %v3471 = vld [vmem:[%s3468 + $0x8] sm:$0xf]
        %v3472 = vld [vmem:[%s3468 + $0xc] sm:$0xf]
        %s3473 = scalar_lea.vmem %s749, 176
        %v3474 = vld [vmem:[%s3473] sm:$0xf]
        %v3475 = vld [vmem:[%s3473 + $0x4] sm:$0xf]
        %v3476 = vld [vmem:[%s3473 + $0x8] sm:$0xf]
        %v3477 = vld [vmem:[%s3473 + $0xc] sm:$0xf]
        %s3478 = scalar_lea.vmem %s753, 3
        %v3479 = vld [vmem:[%s3478] sm:$0x1]
        %s3480 = scalar_lea.vmem %s753, 7
        %v3481 = vld [vmem:[%s3480] sm:$0x1]
        %s3482 = scalar_lea.vmem %s753, 11
        %v3483 = vld [vmem:[%s3482] sm:$0x1]
        %v3485 = vlaneseq
        %v3486 = vshrl.u32 %v3485, 7
        %v3487 = vsub.s32 0, %v3486
        %v3488 = vrot.slane %v3479, %v3487
        %v3494 = vunpack.c.l.b16 %v3464
        %v3495 = vunpack.c.l.b16 %v3465
        %v3496 = vunpack.c.l.b16 %v3466
        %v3497 = vunpack.c.l.b16 %v3467
        %v3498 = vpack.c.b16 %v3495, %v3494
        %v3499 = vpack.c.b16 %v3497, %v3496
        %3502 = vmatprep.subr.bf16.mxu0 0
        %3503 = vmatpush1.bf16.msra.mxu0 %v3498
        %3504 = vmatprep.subr.bf16.mxu0 0
        %3505 = vmatpush1.bf16.msra.mxu0 %v3499
        %3506 = vmatprep.subr.bf16.mxu0 0
        %3507 = vmatpush1.bf16.msra.mxu0 0
        %3508 = vmatprep.subr.bf16.mxu0 0
        %3509 = vmatpush1.bf16.msra.mxu0 0
        %3510 = vmatprep.subr.bf16.mxu0 0
        %3511 = vmatpush1.bf16.msra.mxu0 0
        %3512 = vmatprep.subr.bf16.mxu0 0
        %3513 = vmatpush1.bf16.msra.mxu0 0
        %3514 = vmatprep.subr.bf16.mxu0 0
        %3515 = vmatpush1.bf16.msra.mxu0 0
        %3516 = vmatprep.subr.bf16.mxu0 0
        %3517 = vmatpush1.bf16.msra.mxu0 0
        %3518 = vmatprep.subr.bf16.mxu0 0
        %3519 = vmatpush1.bf16.msra.mxu0 0
        %3520 = vmatprep.subr.bf16.mxu0 0
        %3521 = vmatpush1.bf16.msra.mxu0 0
        %3522 = vmatprep.subr.bf16.mxu0 0
        %3523 = vmatpush1.bf16.msra.mxu0 0
        %3524 = vmatprep.subr.bf16.mxu0 0
        %3525 = vmatpush1.bf16.msra.mxu0 0
        %3526 = vmatprep.subr.bf16.mxu0 0
        %3527 = vmatpush1.bf16.msra.mxu0 0
        %3528 = vmatprep.subr.bf16.mxu0 0
        %3529 = vmatpush1.bf16.msra.mxu0 0
        %3530 = vmatprep.subr.bf16.mxu0 0
        %3531 = vmatpush1.bf16.msra.mxu0 0
        %3532 = vmatprep.subr.bf16.mxu0 0
        %3533 = vmatpush1.bf16.msra.mxu0 0
        %3534 = vmatprep.mubr.bf16.mxu0 0
        %3535 = vmatmul.mubr.bf16.gmra.mrb[0].mxu0 %v2384
        %v3536 = vpop.f32.mrb[0].mxu0
        %v3537 = vadd.f32 %v3488, %v3536
        %v3538 = vpop.f32.mrb[0].mxu0
        %v3539 = vpop.f32.mrb[0].mxu0
        %v3540 = vadd.f32 %v3488, %v3539
        %v3541 = vpop.f32.mrb[0].mxu0
        %3542 = vdwg.mxu0
        %v3544 = vlaneseq
        %v3545 = vshrl.u32 %v3544, 7
        %v3546 = vsub.s32 0, %v3545
        %v3547 = vrot.slane %v3481, %v3546
        %v3553 = vunpack.c.l.b16 %v3469
        %v3554 = vunpack.c.l.b16 %v3470
        %v3555 = vunpack.c.l.b16 %v3471
        %v3556 = vunpack.c.l.b16 %v3472
        %v3557 = vpack.c.b16 %v3554, %v3553
        %v3558 = vpack.c.b16 %v3556, %v3555
        %3561 = vmatprep.subr.bf16.mxu0 0
        %3562 = vmatpush1.bf16.msra.mxu0 %v3557
        %3563 = vmatprep.subr.bf16.mxu0 0
        %3564 = vmatpush1.bf16.msra.mxu0 %v3558
        %3565 = vmatprep.subr.bf16.mxu0 0
        %3566 = vmatpush1.bf16.msra.mxu0 0
        %3567 = vmatprep.subr.bf16.mxu0 0
        %3568 = vmatpush1.bf16.msra.mxu0 0
        %3569 = vmatprep.subr.bf16.mxu0 0
        %3570 = vmatpush1.bf16.msra.mxu0 0
        %3571 = vmatprep.subr.bf16.mxu0 0
        %3572 = vmatpush1.bf16.msra.mxu0 0
        %3573 = vmatprep.subr.bf16.mxu0 0
        %3574 = vmatpush1.bf16.msra.mxu0 0
        %3575 = vmatprep.subr.bf16.mxu0 0
        %3576 = vmatpush1.bf16.msra.mxu0 0
        %3577 = vmatprep.subr.bf16.mxu0 0
        %3578 = vmatpush1.bf16.msra.mxu0 0
        %3579 = vmatprep.subr.bf16.mxu0 0
        %3580 = vmatpush1.bf16.msra.mxu0 0
        %3581 = vmatprep.subr.bf16.mxu0 0
        %3582 = vmatpush1.bf16.msra.mxu0 0
        %3583 = vmatprep.subr.bf16.mxu0 0
        %3584 = vmatpush1.bf16.msra.mxu0 0
        %3585 = vmatprep.subr.bf16.mxu0 0
        %3586 = vmatpush1.bf16.msra.mxu0 0
        %3587 = vmatprep.subr.bf16.mxu0 0
        %3588 = vmatpush1.bf16.msra.mxu0 0
        %3589 = vmatprep.subr.bf16.mxu0 0
        %3590 = vmatpush1.bf16.msra.mxu0 0
        %3591 = vmatprep.subr.bf16.mxu0 0
        %3592 = vmatpush1.bf16.msra.mxu0 0
        %3593 = vmatprep.mubr.bf16.mxu0 0
        %3594 = vmatmul.mubr.bf16.gmra.mrb[0].mxu0 %v2451
        %v3595 = vpop.f32.mrb[0].mxu0
        %v3596 = vadd.f32 %v3547, %v3595
        %v3597 = vpop.f32.mrb[0].mxu0
        %v3598 = vpop.f32.mrb[0].mxu0
        %v3599 = vadd.f32 %v3547, %v3598
        %v3600 = vpop.f32.mrb[0].mxu0
        %3601 = vdwg.mxu0
        %v3603 = vlaneseq
        %v3604 = vshrl.u32 %v3603, 7
        %v3605 = vsub.s32 0, %v3604
        %v3606 = vrot.slane %v3483, %v3605
        %v3612 = vunpack.c.l.b16 %v3474
        %v3613 = vunpack.c.l.b16 %v3475
        %v3614 = vunpack.c.l.b16 %v3476
        %v3615 = vunpack.c.l.b16 %v3477
        %v3616 = vpack.c.b16 %v3613, %v3612
        %v3617 = vpack.c.b16 %v3615, %v3614
        %3620 = vmatprep.subr.bf16.mxu0 0
        %3621 = vmatpush1.bf16.msra.mxu0 %v3616
        %3622 = vmatprep.subr.bf16.mxu0 0
        %3623 = vmatpush1.bf16.msra.mxu0 %v3617
        %3624 = vmatprep.subr.bf16.mxu0 0
        %3625 = vmatpush1.bf16.msra.mxu0 0
        %3626 = vmatprep.subr.bf16.mxu0 0
        %3627 = vmatpush1.bf16.msra.mxu0 0
        %3628 = vmatprep.subr.bf16.mxu0 0
        %3629 = vmatpush1.bf16.msra.mxu0 0
        %3630 = vmatprep.subr.bf16.mxu0 0
        %3631 = vmatpush1.bf16.msra.mxu0 0
        %3632 = vmatprep.subr.bf16.mxu0 0
        %3633 = vmatpush1.bf16.msra.mxu0 0
        %3634 = vmatprep.subr.bf16.mxu0 0
        %3635 = vmatpush1.bf16.msra.mxu0 0
        %3636 = vmatprep.subr.bf16.mxu0 0
        %3637 = vmatpush1.bf16.msra.mxu0 0
        %3638 = vmatprep.subr.bf16.mxu0 0
        %3639 = vmatpush1.bf16.msra.mxu0 0
        %3640 = vmatprep.subr.bf16.mxu0 0
        %3641 = vmatpush1.bf16.msra.mxu0 0
        %3642 = vmatprep.subr.bf16.mxu0 0
        %3643 = vmatpush1.bf16.msra.mxu0 0
        %3644 = vmatprep.subr.bf16.mxu0 0
        %3645 = vmatpush1.bf16.msra.mxu0 0
        %3646 = vmatprep.subr.bf16.mxu0 0
        %3647 = vmatpush1.bf16.msra.mxu0 0
        %3648 = vmatprep.subr.bf16.mxu0 0
        %3649 = vmatpush1.bf16.msra.mxu0 0
        %3650 = vmatprep.subr.bf16.mxu0 0
        %3651 = vmatpush1.bf16.msra.mxu0 0
        %3652 = vmatprep.mubr.bf16.mxu0 0
        %3653 = vmatmul.mubr.bf16.gmra.mrb[0].mxu0 %v2451
        %v3654 = vpop.f32.mrb[0].mxu0
        %v3655 = vadd.f32 %v3606, %v3654
        %v3656 = vpop.f32.mrb[0].mxu0
        %v3657 = vpop.f32.mrb[0].mxu0
        %v3658 = vadd.f32 %v3606, %v3657
        %v3659 = vpop.f32.mrb[0].mxu0
        %3660 = vdwg.mxu0
        %v3661 = vpack.c.bf16 %v3540, %v3537
        %v3662 = vpack.c.bf16 %v3599, %v3596
        %v3664 = vsel %vm1005, %v3661, 0
        %v3667 = vsel %vm1005, %v3662, 0
        %3669 = vmatprep.subr.bf16.mxu0 0
        %3670 = vmatpush1.bf16.xpose.msra.mxu0 %v3667
        %3671 = vmatprep.subr.bf16.mxu0 0
        %3672 = vmatpush1.bf16.xpose.msra.mxu0 0
        %3673 = vmatprep.subr.bf16.mxu0 0
        %3674 = vmatpush1.bf16.xpose.msra.mxu0 0
        %3675 = vmatprep.subr.bf16.mxu0 0
        %3676 = vmatpush1.bf16.xpose.msra.mxu0 0
        %3677 = vmatprep.subr.bf16.mxu0 0
        %3678 = vmatpush1.bf16.xpose.msra.mxu0 0
        %3679 = vmatprep.subr.bf16.mxu0 0
        %3680 = vmatpush1.bf16.xpose.msra.mxu0 0
        %3681 = vmatprep.subr.bf16.mxu0 0
        %3682 = vmatpush1.bf16.xpose.msra.mxu0 0
        %3683 = vmatprep.subr.bf16.mxu0 0
        %3684 = vmatpush1.bf16.xpose.msra.mxu0 0
        %3685 = vmatprep.subr.bf16.mxu0 0
        %3686 = vmatpush1.bf16.xpose.msra.mxu0 0
        %3687 = vmatprep.subr.bf16.mxu0 0
        %3688 = vmatpush1.bf16.xpose.msra.mxu0 0
        %3689 = vmatprep.subr.bf16.mxu0 0
        %3690 = vmatpush1.bf16.xpose.msra.mxu0 0
        %3691 = vmatprep.subr.bf16.mxu0 0
        %3692 = vmatpush1.bf16.xpose.msra.mxu0 0
        %3693 = vmatprep.subr.bf16.mxu0 0
        %3694 = vmatpush1.bf16.xpose.msra.mxu0 0
        %3695 = vmatprep.subr.bf16.mxu0 0
        %3696 = vmatpush1.bf16.xpose.msra.mxu0 0
        %3697 = vmatprep.subr.bf16.mxu0 0
        %3698 = vmatpush1.bf16.xpose.msra.mxu0 0
        %3699 = vmatprep.subr.bf16.mxu0 0
        %3700 = vmatpush1.bf16.xpose.msra.mxu0 0
        %3701 = vmatprep.mubr.bf16.mxu0 0
        %3702 = vmatmul.mubr.bf16.gmra.mrb[0].mxu0 %v3664
        %v3703 = vpop.f32.mrb[0].mxu0
        %v3704 = vadd.f32 0.0, %v3703
        %v3705 = vpop.f32.mrb[0].mxu0
        %v3706 = vpop.f32.mrb[0].mxu0
        %v3707 = vadd.f32 0.0, %v3706
        %v3708 = vpop.f32.mrb[0].mxu0
        %3709 = vdwg.mxu0
        %v3710 = vmul.f32 %v3704, 0.35355338
        %v3711 = vmul.f32 %v3707, 0.35355338
        %v3712 = vadd.f32 %v3710, %v2343
        %v3713 = vadd.f32 %v3711, %v2344
        %v3714 = vsel %vm1057, %v3712, -inf
        %3715 = vmax.xlane.f32.xlu0 %v3714
        %v3716 = vpop.xlane.xlu0 %3715
        %v3717 = vsel %vm1057, %v3713, -inf
        %3718 = vmax.xlane.f32.xlu0 %v3717
        %v3719 = vpop.xlane.xlu0 %3718
        %v3720 = vsub.f32 %v3712, %v3716
        %v3721 = vsub.f32 %v3713, %v3719
        %v3722 = vmul.f32 %v3720, 1.442695
        %v3723 = vpow.pop %v3722
        %v3724 = vmul.f32 %v3721, 1.442695
        %v3725 = vpow.pop %v3724
        %v3726 = vsel %vm1057, %v3723, 0.0
        %3727 = vadd.xlane.f32.xlu0 %v3726
        %v3728 = vpop.xlane.xlu0 %3727
        %v3729 = vsel %vm1057, %v3725, 0.0
        %3730 = vadd.xlane.f32.xlu0 %v3729
        %v3731 = vpop.xlane.xlu0 %3730
        %v3732 = vrcp.pop %v3728
        %v3733 = vrcp.pop %v3731
        %v3734 = vmul.f32 %v3723, %v3732
        %v3735 = vmul.f32 %v3725, %v3733
        %v3736 = vpack.c.bf16 %v3735, %v3734
        %v3737 = vpack.c.bf16 %v3658, %v3655
        %v3739 = vsel %vm1057, %v3736, 0
        %3741 = vmatprep.subr.bf16.mxu0 0
        %3742 = vmatpush1.bf16.msra.mxu0 %v3737
        %3743 = vmatprep.subr.bf16.mxu0 0
        %3744 = vmatpush1.bf16.msra.mxu0 0
        %3745 = vmatprep.subr.bf16.mxu0 0
        %3746 = vmatpush1.bf16.msra.mxu0 0
        %3747 = vmatprep.subr.bf16.mxu0 0
        %3748 = vmatpush1.bf16.msra.mxu0 0
        %3749 = vmatprep.subr.bf16.mxu0 0
        %3750 = vmatpush1.bf16.msra.mxu0 0
        %3751 = vmatprep.subr.bf16.mxu0 0
        %3752 = vmatpush1.bf16.msra.mxu0 0
        %3753 = vmatprep.subr.bf16.mxu0 0
        %3754 = vmatpush1.bf16.msra.mxu0 0
        %3755 = vmatprep.subr.bf16.mxu0 0
        %3756 = vmatpush1.bf16.msra.mxu0 0
        %3757 = vmatprep.subr.bf16.mxu0 0
        %3758 = vmatpush1.bf16.msra.mxu0 0
        %3759 = vmatprep.subr.bf16.mxu0 0
        %3760 = vmatpush1.bf16.msra.mxu0 0
        %3761 = vmatprep.subr.bf16.mxu0 0
        %3762 = vmatpush1.bf16.msra.mxu0 0
        %3763 = vmatprep.subr.bf16.mxu0 0
        %3764 = vmatpush1.bf16.msra.mxu0 0
        %3765 = vmatprep.subr.bf16.mxu0 0
        %3766 = vmatpush1.bf16.msra.mxu0 0
        %3767 = vmatprep.subr.bf16.mxu0 0
        %3768 = vmatpush1.bf16.msra.mxu0 0
        %3769 = vmatprep.subr.bf16.mxu0 0
        %3770 = vmatpush1.bf16.msra.mxu0 0
        %3771 = vmatprep.subr.bf16.mxu0 0
        %3772 = vmatpush1.bf16.msra.mxu0 0
        %3773 = vmatprep.mubr.bf16.mxu0 0
        %3774 = vmatmul.mubr.bf16.gmra.mrb[0].mxu0 %v3739
        %v3775 = vpop.f32.mrb[0].mxu0
        %v3776 = vadd.f32 0.0, %v3775
        %v3777 = vpop.f32.mrb[0].mxu0
        %v3778 = vpop.f32.mrb[0].mxu0
        %v3779 = vadd.f32 0.0, %v3778
        %v3780 = vpop.f32.mrb[0].mxu0
        %3781 = vdwg.mxu0
        %v3782 = vpack.c.bf16 %v3779, %v3776
        %s3783 = scalar_lea.vmem %s758, 12
        %v3784 = vld [vmem:[%s3783] sm:$0xf]
        %v3786 = vsel %vm1005, %v3782, 0
        %v3789 = vsel %vm1453, %v3784, 0
        %3791 = vmatprep.subr.bf16.mxu0 0
        %3792 = vmatpush1.bf16.msra.mxu0 %v3789
        %3793 = vmatprep.subr.bf16.mxu0 0
        %3794 = vmatpush1.bf16.msra.mxu0 0
        %3795 = vmatprep.subr.bf16.mxu0 0
        %3796 = vmatpush1.bf16.msra.mxu0 0
        %3797 = vmatprep.subr.bf16.mxu0 0
        %3798 = vmatpush1.bf16.msra.mxu0 0
        %3799 = vmatprep.subr.bf16.mxu0 0
        %3800 = vmatpush1.bf16.msra.mxu0 0
        %3801 = vmatprep.subr.bf16.mxu0 0
        %3802 = vmatpush1.bf16.msra.mxu0 0
        %3803 = vmatprep.subr.bf16.mxu0 0
        %3804 = vmatpush1.bf16.msra.mxu0 0
        %3805 = vmatprep.subr.bf16.mxu0 0
        %3806 = vmatpush1.bf16.msra.mxu0 0
        %3807 = vmatprep.subr.bf16.mxu0 0
        %3808 = vmatpush1.bf16.msra.mxu0 0
        %3809 = vmatprep.subr.bf16.mxu0 0
        %3810 = vmatpush1.bf16.msra.mxu0 0
        %3811 = vmatprep.subr.bf16.mxu0 0
        %3812 = vmatpush1.bf16.msra.mxu0 0
        %3813 = vmatprep.subr.bf16.mxu0 0
        %3814 = vmatpush1.bf16.msra.mxu0 0
        %3815 = vmatprep.subr.bf16.mxu0 0
        %3816 = vmatpush1.bf16.msra.mxu0 0
        %3817 = vmatprep.subr.bf16.mxu0 0
        %3818 = vmatpush1.bf16.msra.mxu0 0
        %3819 = vmatprep.subr.bf16.mxu0 0
        %3820 = vmatpush1.bf16.msra.mxu0 0
        %3821 = vmatprep.subr.bf16.mxu0 0
        %3822 = vmatpush1.bf16.msra.mxu0 0
        %3823 = vmatprep.mubr.bf16.mxu0 0
        %3824 = vmatmul.mubr.bf16.gmra.mrb[0].mxu0 %v3786
        %v3825 = vpop.f32.mrb[0].mxu0
        %v3826 = vadd.f32 0.0, %v3825
        %v3827 = vpop.f32.mrb[0].mxu0
        %v3828 = vpop.f32.mrb[0].mxu0
        %v3829 = vadd.f32 0.0, %v3828
        %v3830 = vpop.f32.mrb[0].mxu0
        %3831 = vdwg.mxu0
        %v3832 = vadd.f32 %v3461, %v3826
        %v3833 = vadd.f32 %v3462, %v3829
        %v3834 = vld [vmem:[%s761] sm:$0x1]
        %v3836 = vlaneseq
        %v3837 = vshrl.u32 %v3836, 7
        %v3838 = vsub.s32 0, %v3837
        %v3839 = vrot.slane %v3834, %v3838
        %v3841 = vadd.f32 %v3832, %v3839
        %v3842 = vadd.f32 %v3833, %v3839
        %v3843 = vadd.f32 %v3841, %v2341
        %v3844 = vadd.f32 %v3842, %v2342
        %s3845 = scalar_lea.vmem %s781, 1
        %v3846 = vld [vmem:[%s3845] sm:$0x1]
        %s3847 = scalar_lea.vmem %s785, 1
        %v3848 = vld [vmem:[%s3847] sm:$0x1]
        %v3849 = vsel %vm840, %v3843, 0.0
        %3850 = vadd.xlane.f32.xlu0 %v3849
        %v3851 = vpop.xlane.xlu0 %3850
        %v3852 = vsel %vm840, %v3844, 0.0
        %3853 = vadd.xlane.f32.xlu0 %v3852
        %v3854 = vpop.xlane.xlu0 %3853
        %v3855 = vmul.f32 %v3851, %v2306
        %v3856 = vmul.f32 %v3854, %v2306
        %v3857 = vsub.f32 %v3843, %v3855
        %v3858 = vsub.f32 %v3844, %v3856
        %v3859 = vmul.f32 %v3857, %v3857
        %v3860 = vmul.f32 %v3858, %v3858
        %v3861 = vsel %vm840, %v3859, 0.0
        %3862 = vadd.xlane.f32.xlu0 %v3861
        %v3863 = vpop.xlane.xlu0 %3862
        %v3864 = vsel %vm840, %v3860, 0.0
        %3865 = vadd.xlane.f32.xlu0 %v3864
        %v3866 = vpop.xlane.xlu0 %3865
        %v3867 = vmul.f32 %v3863, %v2306
        %v3868 = vmul.f32 %v3866, %v2306
        %v3869 = vadd.f32 %v3867, 1e-05
        %v3870 = vadd.f32 %v3868, 1e-05
        %v3871 = vrsqrt.pop %v3869
        %v3872 = vrsqrt.pop %v3870
        %v3873 = vmul.f32 %v3857, %v3871
        %v3874 = vmul.f32 %v3858, %v3872
        %v3876 = vlaneseq
        %v3877 = vshrl.u32 %v3876, 7
        %v3878 = vsub.s32 0, %v3877
        %v3879 = vrot.slane %v3846, %v3878
        %v3881 = vmul.f32 %v3873, %v3879
        %v3882 = vmul.f32 %v3874, %v3879
        %v3884 = vlaneseq
        %v3885 = vshrl.u32 %v3884, 7
        %v3886 = vsub.s32 0, %v3885
        %v3887 = vrot.slane %v3848, %v3886
        %v3889 = vadd.f32 %v3881, %v3887
        %v3890 = vadd.f32 %v3882, %v3887
        %v3891 = vpack.c.bf16 %v3890, %v3889
        %v3892 = vld [vmem:[%s766] sm:$0xf]
        %v3893 = vld [vmem:[%s766 + $0x4] sm:$0xf]
        %v3894 = vld [vmem:[%s766 + $0x8] sm:$0xf]
        %v3895 = vld [vmem:[%s766 + $0xc] sm:$0xf]
        %v3896 = vld [vmem:[%s769] sm:$0x1]
        %v3898 = vlaneseq
        %v3899 = vshrl.u32 %v3898, 7
        %v3900 = vsub.s32 0, %v3899
        %v3901 = vrot.slane %v3896, %v3900
        %v3907 = vunpack.c.l.b16 %v3892
        %v3908 = vunpack.c.l.b16 %v3893
        %v3909 = vunpack.c.l.b16 %v3894
        %v3910 = vunpack.c.l.b16 %v3895
        %v3911 = vpack.c.b16 %v3908, %v3907
        %v3912 = vpack.c.b16 %v3910, %v3909
        %v3916 = vsel %vm840, %v3891, 0
        %3918 = vmatprep.subr.bf16.mxu0 0
        %3919 = vmatpush1.bf16.msra.mxu0 %v3911
        %3920 = vmatprep.subr.bf16.mxu0 0
        %3921 = vmatpush1.bf16.msra.mxu0 %v3912
        %3922 = vmatprep.subr.bf16.mxu0 0
        %3923 = vmatpush1.bf16.msra.mxu0 0
        %3924 = vmatprep.subr.bf16.mxu0 0
        %3925 = vmatpush1.bf16.msra.mxu0 0
        %3926 = vmatprep.subr.bf16.mxu0 0
        %3927 = vmatpush1.bf16.msra.mxu0 0
        %3928 = vmatprep.subr.bf16.mxu0 0
        %3929 = vmatpush1.bf16.msra.mxu0 0
        %3930 = vmatprep.subr.bf16.mxu0 0
        %3931 = vmatpush1.bf16.msra.mxu0 0
        %3932 = vmatprep.subr.bf16.mxu0 0
        %3933 = vmatpush1.bf16.msra.mxu0 0
        %3934 = vmatprep.subr.bf16.mxu0 0
        %3935 = vmatpush1.bf16.msra.mxu0 0
        %3936 = vmatprep.subr.bf16.mxu0 0
        %3937 = vmatpush1.bf16.msra.mxu0 0
        %3938 = vmatprep.subr.bf16.mxu0 0
        %3939 = vmatpush1.bf16.msra.mxu0 0
        %3940 = vmatprep.subr.bf16.mxu0 0
        %3941 = vmatpush1.bf16.msra.mxu0 0
        %3942 = vmatprep.subr.bf16.mxu0 0
        %3943 = vmatpush1.bf16.msra.mxu0 0
        %3944 = vmatprep.subr.bf16.mxu0 0
        %3945 = vmatpush1.bf16.msra.mxu0 0
        %3946 = vmatprep.subr.bf16.mxu0 0
        %3947 = vmatpush1.bf16.msra.mxu0 0
        %3948 = vmatprep.subr.bf16.mxu0 0
        %3949 = vmatpush1.bf16.msra.mxu0 0
        %3950 = vmatprep.mubr.bf16.mxu0 0
        %3951 = vmatmul.mubr.bf16.gmra.mrb[0].mxu0 %v3916
        %v3952 = vpop.f32.mrb[0].mxu0
        %v3953 = vadd.f32 %v3901, %v3952
        %v3954 = vpop.f32.mrb[0].mxu0
        %v3955 = vpop.f32.mrb[0].mxu0
        %v3956 = vadd.f32 %v3901, %v3955
        %v3957 = vpop.f32.mrb[0].mxu0
        %3958 = vdwg.mxu0
        %v3959 = vmax.f32 %v3953, 0.0
        %v3960 = vmax.f32 %v3956, 0.0
        %v3961 = vpack.c.bf16 %v3960, %v3959
        %v3962 = vld [vmem:[%s774] sm:$0xf]
        %v3963 = vld [vmem:[%s774 + $0x4] sm:$0xf]
        %v3964 = vld [vmem:[%s774 + $0x8] sm:$0xf]
        %v3965 = vld [vmem:[%s774 + $0xc] sm:$0xf]
        %v3966 = vld [vmem:[%s774 + $0x10] sm:$0xf]
        %v3967 = vld [vmem:[%s774 + $0x14] sm:$0xf]
        %v3968 = vld [vmem:[%s774 + $0x18] sm:$0xf]
        %v3969 = vld [vmem:[%s774 + $0x1c] sm:$0xf]
        %v3970 = vld [vmem:[%s777] sm:$0x1]
        %v3972 = vlaneseq
        %v3973 = vshrl.u32 %v3972, 7
        %v3974 = vsub.s32 0, %v3973
        %v3975 = vrot.slane %v3970, %v3974
        %v3985 = vunpack.c.l.b16 %v3962
        %v3986 = vunpack.c.l.b16 %v3963
        %v3987 = vunpack.c.l.b16 %v3964
        %v3988 = vunpack.c.l.b16 %v3965
        %v3989 = vunpack.c.l.b16 %v3966
        %v3990 = vunpack.c.l.b16 %v3967
        %v3991 = vunpack.c.l.b16 %v3968
        %v3992 = vunpack.c.l.b16 %v3969
        %v3993 = vpack.c.b16 %v3986, %v3985
        %v3994 = vpack.c.b16 %v3988, %v3987
        %v3995 = vpack.c.b16 %v3990, %v3989
        %v3996 = vpack.c.b16 %v3992, %v3991
        %vm4001 = vcmask 523264
        %v4003 = vsel %vm4001, %v3961, 0
        %4005 = vmatprep.subr.bf16.mxu0 0
        %4006 = vmatpush1.bf16.msra.mxu0 %v3993
        %4007 = vmatprep.subr.bf16.mxu0 0
        %4008 = vmatpush1.bf16.msra.mxu0 %v3994
        %4009 = vmatprep.subr.bf16.mxu0 0
        %4010 = vmatpush1.bf16.msra.mxu0 %v3995
        %4011 = vmatprep.subr.bf16.mxu0 0
        %4012 = vmatpush1.bf16.msra.mxu0 %v3996
        %4013 = vmatprep.subr.bf16.mxu0 0
        %4014 = vmatpush1.bf16.msra.mxu0 0
        %4015 = vmatprep.subr.bf16.mxu0 0
        %4016 = vmatpush1.bf16.msra.mxu0 0
        %4017 = vmatprep.subr.bf16.mxu0 0
        %4018 = vmatpush1.bf16.msra.mxu0 0
        %4019 = vmatprep.subr.bf16.mxu0 0
        %4020 = vmatpush1.bf16.msra.mxu0 0
        %4021 = vmatprep.subr.bf16.mxu0 0
        %4022 = vmatpush1.bf16.msra.mxu0 0
        %4023 = vmatprep.subr.bf16.mxu0 0
        %4024 = vmatpush1.bf16.msra.mxu0 0
        %4025 = vmatprep.subr.bf16.mxu0 0
        %4026 = vmatpush1.bf16.msra.mxu0 0
        %4027 = vmatprep.subr.bf16.mxu0 0
        %4028 = vmatpush1.bf16.msra.mxu0 0
        %4029 = vmatprep.subr.bf16.mxu0 0
        %4030 = vmatpush1.bf16.msra.mxu0 0
        %4031 = vmatprep.subr.bf16.mxu0 0
        %4032 = vmatpush1.bf16.msra.mxu0 0
        %4033 = vmatprep.subr.bf16.mxu0 0
        %4034 = vmatpush1.bf16.msra.mxu0 0
        %4035 = vmatprep.subr.bf16.mxu0 0
        %4036 = vmatpush1.bf16.msra.mxu0 0
        %4037 = vmatprep.mubr.bf16.mxu0 0
        %4038 = vmatmul.mubr.bf16.gmra.mrb[0].mxu0 %v4003
        %v4039 = vpop.f32.mrb[0].mxu0
        %v4040 = vadd.f32 %v3975, %v4039
        %v4041 = vpop.f32.mrb[0].mxu0
        %v4042 = vpop.f32.mrb[0].mxu0
        %v4043 = vadd.f32 %v3975, %v4042
        %v4044 = vpop.f32.mrb[0].mxu0
        %4045 = vdwg.mxu0
        %v4046 = vadd.f32 %v4040, %v3889
        %v4047 = vadd.f32 %v4043, %v3890
        %s4048 = scalar_lea.vmem %s781, 2
        %v4049 = vld [vmem:[%s4048] sm:$0x1]
        %s4050 = scalar_lea.vmem %s785, 2
        %v4051 = vld [vmem:[%s4050] sm:$0x1]
        %v4052 = vsel %vm840, %v4046, 0.0
        %4053 = vadd.xlane.f32.xlu0 %v4052
        %v4054 = vpop.xlane.xlu0 %4053
        %v4055 = vsel %vm840, %v4047, 0.0
        %4056 = vadd.xlane.f32.xlu0 %v4055
        %v4057 = vpop.xlane.xlu0 %4056
        %v4058 = vmul.f32 %v4054, %v2306
        %v4059 = vmul.f32 %v4057, %v2306
        %v4060 = vsub.f32 %v4046, %v4058
        %v4061 = vsub.f32 %v4047, %v4059
        %v4062 = vmul.f32 %v4060, %v4060
        %v4063 = vmul.f32 %v4061, %v4061
        %v4064 = vsel %vm840, %v4062, 0.0
        %4065 = vadd.xlane.f32.xlu0 %v4064
        %v4066 = vpop.xlane.xlu0 %4065
        %v4067 = vsel %vm840, %v4063, 0.0
        %4068 = vadd.xlane.f32.xlu0 %v4067
        %v4069 = vpop.xlane.xlu0 %4068
        %v4070 = vmul.f32 %v4066, %v2306
        %v4071 = vmul.f32 %v4069, %v2306
        %v4072 = vadd.f32 %v4070, 1e-05
        %v4073 = vadd.f32 %v4071, 1e-05
        %v4074 = vrsqrt.pop %v4072
        %v4075 = vrsqrt.pop %v4073
        %v4076 = vmul.f32 %v4060, %v4074
        %v4077 = vmul.f32 %v4061, %v4075
        %v4079 = vlaneseq
        %v4080 = vshrl.u32 %v4079, 7
        %v4081 = vsub.s32 0, %v4080
        %v4082 = vrot.slane %v4049, %v4081
        %v4084 = vmul.f32 %v4076, %v4082
        %v4085 = vmul.f32 %v4077, %v4082
        %v4087 = vlaneseq
        %v4088 = vshrl.u32 %v4087, 7
        %v4089 = vsub.s32 0, %v4088
        %v4090 = vrot.slane %v4051, %v4089
        %v4092 = vadd.f32 %v4084, %v4090
        %v4093 = vadd.f32 %v4085, %v4090
        %4094 = vst.msk [vmem:[#allocation2] sm:$0xff] %vm840, %v4092
        %4095 = vst.msk [vmem:[#allocation2 + $0x8] sm:$0xff] %vm840, %v4093
        %4096 = vst.msk [vmem:[#allocation3] sm:$0xff] %vm840, %v4092
        %4097 = vst.msk [vmem:[#allocation3 + $0x8] sm:$0xff] %vm840, %v4093
        // Predicated region
        $region97: #{tpu_custom_call.1} parent=91 // pred_check
          %p4098 = pneg %p491
        $region98: #{tpu_custom_call.1} parent=91 // pred_check_branch
          %4100 = sbr.rel (%p4098) target = $region100
        $region99: #{tpu_custom_call.1} parent=91 // pred_region
          %s4102 = ssub.s32 256, 256
          %4103 = vsyncadd [#allocation4], %s4102
          %s4104 = sshll.u32 [#allocation3], 4
          %s4105 = int_to_ptr.vmem [resolvable:$true] %s4104
          %4110 = dma.vmem_to_hbm [thread:$0]  %s4105, 256, %s18, [#allocation4], 128, 128, 8
        $region100: #{tpu_custom_call.1} parent=91 // pred_fallthru
          _
        // Predicated region
        $region101: #{tpu_custom_call.1} parent=91 // pred_check
          %p4111 = pneg %p491
        $region102: #{tpu_custom_call.1} parent=91 // pred_check_branch
          %4113 = sbr.rel (%p4111) target = $region104
        $region103: #{tpu_custom_call.1} parent=91 // pred_region
          %4114 = dma.done [#allocation4], 256
        $region104: #{tpu_custom_call.1} parent=91 // pred_fallthru
          _
      $region92: #{tpu_custom_call.1} parent=5 // pred_fallthru
        _
      %p4115 = scmp.le.s32.totalorder 2, %s25
      // Predicated region
      $region105: #{tpu_custom_call.1} parent=5 // pred_check
        %p4116 = pneg %p4115
      $region106: #{tpu_custom_call.1} parent=5 // pred_check_branch
        %4118 = sbr.rel (%p4116) target = $region108
      $region107: #{tpu_custom_call.1} parent=5 // pred_region
        %s4119 = ssub.s32 %s25, 2
      $region108: #{tpu_custom_call.1} parent=5 // pred_fallthru
        _
    $region6: #{tpu_custom_call.1} parent=1 // loop_footer
      %s29 = sadd.s32 1, %s25
    $region7: #{tpu_custom_call.1} parent=1 // loop_footer_branch
      %24 = sbr.rel target = $region3
    $region8: #{tpu_custom_call.1} parent=1 // loop_exit
      _
    %4120 = vsyncpa [#allocation4], 1
    %s4121 = scalar_lea.sflag [#allocation4], 1
    %4122 = vsyncpa %s4121, 1

</llo_original>
